<compile_context>
chip_gen: v5e
topology: v5e:2x2
jax: 0.10.0
libtpu: 0.0.40
codegen_flags: <defaults>
</compile_context>

<pallas_src>
import math
import functools

import jax
import jax.numpy as jnp
from jax.experimental import pallas as pl
from jax.experimental.pallas import tpu as pltpu


MASK_NEG = -1e30  # finite stand-in for -inf in masked attention logits (f32 softmax)


# ---------------------------------------------------------------------------
# small math helpers (pure jnp; usable inside Pallas kernels and in reference)
# ---------------------------------------------------------------------------
def _layernorm(x, w, b, eps=1e-5):
    mu = jnp.mean(x, axis=-1, keepdims=True)
    var = jnp.mean((x - mu) ** 2, axis=-1, keepdims=True)
    return (x - mu) * jax.lax.rsqrt(var + eps) * w + b


def _gelu_exact(x):
    # nn.GELU() default (approximate='none'): 0.5*x*(1+erf(x/sqrt(2)))
    return 0.5 * x * (1.0 + jax.lax.erf(x * (1.0 / math.sqrt(2.0))))


def _bf16(x):
    return x.astype(jnp.bfloat16)


# ---------------------------------------------------------------------------
# Shared transformer Block body (pre-LN attention + pre-LN MLP)
# ---------------------------------------------------------------------------
def _block_compute(x, m,
                   ln1w_ref, ln1b_ref, wq_ref, wk_ref, wv_ref,
                   bq_ref, bk_ref, bv_ref, wpr_ref, bpr_ref,
                   ln2w_ref, ln2b_ref, wfc_ref, bfc_ref, wpj_ref, bpj_ref,
                   n_head, hidden_tile):
    """x: (T, C) f32; m: (1, T) f32 attention mask over keys. Returns (T, C) f32."""
    T, C = x.shape
    hd = wq_ref.shape[-1]
    scale = 1.0 / math.sqrt(hd)
    keep = m > 0.5  # (1, T) bool, broadcasts over query rows

    # ---------------- self attention (pre-LN) ----------------
    h1 = _layernorm(x, ln1w_ref[...], ln1b_ref[...])  # f32
    h1b = _bf16(h1)

    y = jnp.zeros((T, C), jnp.float32)
    for hi in range(n_head):  # hd=128-aligned heads; per-head proj accumulation, no concat
        q = jnp.dot(h1b, wq_ref[hi], preferred_element_type=jnp.float32) + bq_ref[hi]  # (T, hd)
        k = jnp.dot(h1b, wk_ref[hi], preferred_element_type=jnp.float32) + bk_ref[hi]
        v = jnp.dot(h1b, wv_ref[hi], preferred_element_type=jnp.float32) + bv_ref[hi]
        # Q @ K^T via dot_general contracting last dims (no materialized transpose)
        s = jax.lax.dot_general(_bf16(q), _bf16(k), (((1,), (1,)), ((), ())),
                                preferred_element_type=jnp.float32) * scale  # (T, T) f32
        s = jnp.where(keep, s, MASK_NEG)
        p = jax.nn.softmax(s, axis=-1)  # f32
        ho = jnp.dot(_bf16(p), _bf16(v), preferred_element_type=jnp.float32)  # (T, hd)
        # accumulate output projection per head: y += ho @ Wproj[h*hd:(h+1)*hd, :]
        y = y + jnp.dot(_bf16(ho), wpr_ref[hi], preferred_element_type=jnp.float32)
    x = x + y + bpr_ref[...]  # residual 1 (f32)

    # ---------------- MLP (pre-LN), tiled over hidden dim ----------------
    h2 = _layernorm(x, ln2w_ref[...], ln2b_ref[...])
    h2b = _bf16(h2)
    H = wfc_ref.shape[1]
    acc = jnp.zeros((T, C), jnp.float32)
    for t0 in range(0, H, hidden_tile):  # static slices -> zero-cost ref views
        f = jnp.dot(h2b, wfc_ref[:, t0:t0 + hidden_tile],
                    preferred_element_type=jnp.float32) + bfc_ref[:, t0:t0 + hidden_tile]
        f = _gelu_exact(f)  # f32
        acc = acc + jnp.dot(_bf16(f), wpj_ref[t0:t0 + hidden_tile, :],
                            preferred_element_type=jnp.float32)
    return x + acc + bpj_ref[...]  # residual 2 (f32)


def block_kernel(x_ref, mask_ref,
                 ln1w, ln1b, wq, wk, wv, bq, bk, bv, wpr, bpr,
                 ln2w, ln2b, wfc, bfc, wpj, bpj,
                 o_ref, *, n_head, hidden_tile):
    o_ref[0] = _block_compute(x_ref[0], mask_ref[0],
                              ln1w, ln1b, wq, wk, wv, bq, bk, bv, wpr, bpr,
                              ln2w, ln2b, wfc, bfc, wpj, bpj,
                              n_head=n_head, hidden_tile=hidden_tile)


def block_pool_kernel(x_ref, mask_ref, pool_ref,
                      ln1w, ln1b, wq, wk, wv, bq, bk, bv, wpr, bpr,
                      ln2w, ln2b, wfc, bfc, wpj, bpj,
                      o_ref, *, n_head, hidden_tile):
    # Last layer: fuse masked-mean pooling into the block epilogue.
    xout = _block_compute(x_ref[0], mask_ref[0],
                          ln1w, ln1b, wq, wk, wv, bq, bk, bv, wpr, bpr,
                          ln2w, ln2b, wfc, bfc, wpj, bpj,
                          n_head=n_head, hidden_tile=hidden_tile)
    pm = pool_ref[0]                                                  # (1, T) f32
    num = jnp.dot(pm, xout, preferred_element_type=jnp.float32)       # (1, C)
    den = jnp.maximum(jnp.sum(pm), 1.0)                               # guard all-pad rows
    o_ref[0] = num / den


# ---------------------------------------------------------------------------
# Wrapper around pallas_call for one block
# ---------------------------------------------------------------------------
def _vmem_limit_bytes(params, T, C, hidden_tile):
    weight_bytes = sum(int(p.size) * p.dtype.itemsize for p in params)
    # rough per-step activation footprint (f32): x in/out double-buffered, scores,
    # q/k/v, MLP hidden tile, residual/LN temporaries
    act_bytes = 4 * (6 * T * C + T * T + 3 * T * C + T * hidden_tile)
    est = weight_bytes + act_bytes
    # TODO(synk): derive the cap per chip via pltpu.get_tpu_info() (v7x physical
    # VMEM is 64 MiB; v5e/v6e allow ~100 MiB scoped).
    return int(min(64 * 1024 * 1024, max(32 * 1024 * 1024, 2 * est)))


def transformer_block(x, attn_mask3, params, n_head, pool_mask3=None):
    """x: (B, T, C) f32; attn_mask3/pool_mask3: (B, 1, T) f32; params: 16-tuple."""
    B, T, C = x.shape
    hidden = params[12].shape[1]  # wfc: (C, H)
    hidden_tile = 512 if (hidden > 512 and hidden % 512 == 0) else hidden

    data_inputs = [x, attn_mask3]
    data_specs = [
        pl.BlockSpec((1, T, C), lambda b: (b, 0, 0)),
        pl.BlockSpec((1, 1, T), lambda b: (b, 0, 0)),
    ]
    if pool_mask3 is None:
        kernel = functools.partial(block_kernel, n_head=n_head, hidden_tile=hidden_tile)
        out_shape = jax.ShapeDtypeStruct((B, T, C), jnp.float32)
        out_spec = pl.BlockSpec((1, T, C), lambda b: (b, 0, 0))
    else:
        data_inputs.append(pool_mask3)
        data_specs.append(pl.BlockSpec((1, 1, T), lambda b: (b, 0, 0)))
        kernel = functools.partial(block_pool_kernel, n_head=n_head, hidden_tile=hidden_tile)
        out_shape = jax.ShapeDtypeStruct((B, 1, C), jnp.float32)
        out_spec = pl.BlockSpec((1, 1, C), lambda b: (b, 0, 0))

    # Weights/biases are constant across the grid: whole-array, single-buffered VMEM
    # residents (no per-step DMA, no double-buffer waste).
    weight_specs = [pl.BlockSpec(memory_space=pltpu.MemorySpace.VMEM) for _ in params]

    return pl.pallas_call(
        kernel,
        out_shape=out_shape,
        grid=(B,),
        in_specs=data_specs + weight_specs,
        out_specs=out_spec,
        compiler_params=pltpu.CompilerParams(
            dimension_semantics=("parallel",),
            vmem_limit_bytes=_vmem_limit_bytes(params, T, C, hidden_tile)),
    )(*data_inputs, *params)


# ---------------------------------------------------------------------------
# Host-side weight preparation: split per head, pre-cast matmul weights to bf16
# ---------------------------------------------------------------------------
def prepare_block_params(raw, n_head):
    (ln1w, ln1b, wqkv, bqkv, wpr, bpr, ln2w, ln2b, wfc, bfc, wpj, bpj) = raw
    C = wqkv.shape[0]
    hd = C // n_head

    def split_w(w):   # (C, C) -> (n_head, C, hd), bf16
        return jnp.transpose(w.reshape(C, n_head, hd), (1, 0, 2)).astype(jnp.bfloat16)

    def split_b(b):   # (1, C) -> (n_head, 1, hd), f32
        return jnp.transpose(b.reshape(1, n_head, hd), (1, 0, 2))

    wq, wk, wv = wqkv[:, :C], wqkv[:, C:2 * C], wqkv[:, 2 * C:]
    bq, bk, bv = bqkv[:, :C], bqkv[:, C:2 * C], bqkv[:, 2 * C:]
    return (
        ln1w, ln1b,
        split_w(wq), split_w(wk), split_w(wv),
        split_b(bq), split_b(bk), split_b(bv),
        wpr.reshape(n_head, hd, C).astype(jnp.bfloat16), bpr,
        ln2w, ln2b,
        wfc.astype(jnp.bfloat16), bfc,
        wpj.astype(jnp.bfloat16), bpj,
    )


# ---------------------------------------------------------------------------
# Full encoder forward (embedding gathers are plain-JAX glue)
# ---------------------------------------------------------------------------
def scratch_text_encoder(input_ids, attention_mask, wte, wpe, block_params,
                         pad_token_id, n_head):
    B, T = input_ids.shape
    tok_emb = wte[input_ids]                 # (B, T, C) gather
    pos_emb = wpe[:T][None, :, :]            # (1, T, C)
    x = (tok_emb + pos_emb).astype(jnp.float32)   # drop -> identity at eval

    attn_mask3 = attention_mask.astype(jnp.float32)[:, None, :]              # (B,1,T)
    pool_mask3 = (input_ids != pad_token_id).astype(jnp.float32)[:, None, :]  # (B,1,T)

    n = len(block_params)
    for li, params in enumerate(block_params):
        if li == n - 1:
            x = transformer_block(x, attn_mask3, params, n_head, pool_mask3=pool_mask3)
        else:
            x = transformer_block(x, attn_mask3, params, n_head)
    return x[:, 0, :]                         # (B, C) pooled embedding


# ---------------------------------------------------------------------------
# Pure-JAX reference (same bf16-operand / f32-accumulate math, no Pallas)
# ---------------------------------------------------------------------------
def reference_forward(input_ids, attention_mask, wte, wpe, raw_block_params,
                      pad_token_id, n_head):
    B, T = input_ids.shape
    x = (wte[input_ids] + wpe[:T][None]).astype(jnp.float32)
    mask4 = attention_mask.astype(jnp.float32)[:, None, None, :]   # (B,1,1,T)
    for (ln1w, ln1b, wqkv, bqkv, wpr, bpr,
         ln2w, ln2b, wfc, bfc, wpj, bpj) in raw_block_params:
        C = x.shape[-1]
        hd = C // n_head
        h = _layernorm(x, ln1w, ln1b)
        qkv = jnp.dot(_bf16(h), _bf16(wqkv), preferred_element_type=jnp.float32) + bqkv
        q, k, v = jnp.split(qkv, 3, axis=-1)

        def split_heads(t):
            return t.reshape(B, T, n_head, hd).transpose(0, 2, 1, 3)

        q, k, v = map(split_heads, (q, k, v))
        s = jnp.einsum('bhqd,bhkd->bhqk', _bf16(q), _bf16(k),
                       preferred_element_type=jnp.float32) * (1.0 / math.sqrt(hd))
        s = jnp.where(mask4 > 0.5, s, MASK_NEG)
        p = jax.nn.softmax(s, axis=-1)
        y = jnp.einsum('bhqk,bhkd->bhqd', _bf16(p), _bf16(v),
                       preferred_element_type=jnp.float32)
        y = y.transpose(0, 2, 1, 3).reshape(B, T, C)
        x = x + jnp.dot(_bf16(y), _bf16(wpr), preferred_element_type=jnp.float32) + bpr
        h2 = _layernorm(x, ln2w, ln2b)
        f = _gelu_exact(jnp.dot(_bf16(h2), _bf16(wfc),
                                preferred_element_type=jnp.float32) + bfc)
        x = x + jnp.dot(_bf16(f), _bf16(wpj), preferred_element_type=jnp.float32) + bpj
    om = (input_ids != pad_token_id).astype(jnp.float32)[:, :, None]
    return (x * om).sum(1) / jnp.maximum(om.sum(1), 1.0)


# ---------------------------------------------------------------------------
# Deterministic synthetic parameter init (shapes from TextConfig)
# ---------------------------------------------------------------------------
def init_params(key, vocab_size, max_seq_len, n_embd, n_layer, mlp_factor):
    hidden = int(mlp_factor * n_embd)
    keys = jax.random.split(key, 2 + 6 * n_layer)
    wte = 0.02 * jax.random.normal(keys[0], (vocab_size, n_embd), jnp.float32)
    wpe = 0.02 * jax.random.normal(keys[1], (max_seq_len, n_embd), jnp.float32)
    blocks = []
    ki = 2
    for _ in range(n_layer):
        ln1w = jnp.ones((1, n_embd), jnp.float32)
        ln1b = jnp.zeros((1, n_embd), jnp.float32)
        wqkv = 0.02 * jax.random.normal(keys[ki + 0], (n_embd, 3 * n_embd), jnp.float32)
        bqkv = 0.01 * jax.random.normal(keys[ki + 1], (1, 3 * n_embd), jnp.float32)
        wpr = 0.02 * jax.random.normal(keys[ki + 2], (n_embd, n_embd), jnp.float32)
        bpr = 0.01 * jax.random.normal(keys[ki + 3], (1, n_embd), jnp.float32)
        ln2w = jnp.ones((1, n_embd), jnp.float32)
        ln2b = jnp.zeros((1, n_embd), jnp.float32)
        wfc = 0.02 * jax.random.normal(keys[ki + 4], (n_embd, hidden), jnp.float32)
        bfc = jnp.zeros((1, hidden), jnp.float32)
        wpj = 0.02 * jax.random.normal(keys[ki + 5], (hidden, n_embd), jnp.float32)
        bpj = jnp.zeros((1, n_embd), jnp.float32)
        blocks.append([ln1w, ln1b, wqkv, bqkv, wpr, bpr,
                       ln2w, ln2b, wfc, bfc, wpj, bpj])
        ki += 6
    return wte, wpe, blocks


if __name__ == "__main__":
    # small, (8,128)-aligned config consistent with TextConfig (n_embd % n_head == 0)
    B, T = 2, 8
    n_embd, n_head, n_layer = 256, 2, 2     # head_dim = 128 -> lane-aligned heads
    vocab_size, max_seq_len = 97, 16
    mlp_factor = 4                          # hidden = 1024 -> exercises 2 MLP tiles
    pad_token_id = 0                        # stands in for tokenizer.eos_token_id

    key = jax.random.PRNGKey(0)
    k_param, k_ids = jax.random.split(key)
    wte, wpe, raw_blocks = init_params(k_param, vocab_size, max_seq_len,
                                       n_embd, n_layer, mlp_factor)
    kernel_blocks = [prepare_block_params(b, n_head) for b in raw_blocks]

    # deterministic "tokenized" batch: second sample is padded
    lengths = jnp.array([8, 5], dtype=jnp.int32)
    ids = jax.random.randint(k_ids, (B, T), 1, vocab_size, dtype=jnp.int32)
    pos = jnp.arange(T, dtype=jnp.int32)[None, :]
    attention_mask = (pos < lengths[:, None]).astype(jnp.int32)
    input_ids = jnp.where(attention_mask > 0, ids, pad_token_id)

    emb = scratch_text_encoder(input_ids, attention_mask, wte, wpe, kernel_blocks,
                               pad_token_id, n_head)
    emb = jax.block_until_ready(emb)

    ref = reference_forward(input_ids, attention_mask, wte, wpe, raw_blocks,
                            pad_token_id, n_head)
    assert emb.shape == (B, n_embd)
    assert jnp.allclose(emb, ref, atol=2e-3, rtol=2e-3), (
        float(jnp.max(jnp.abs(emb - ref))))

    # TODO(synk): HF tokenizer (string -> input_ids) is host-side and has no
    # Pallas equivalent; the kernel consumes token ids + attention mask directly.
    print("KERNEL_OK")
</pallas_src>

<mosaic_0001>
module attributes {stable_mosaic.version = 11 : i64} {
  func.func @block_kernel(%arg0: i32, %arg1: memref<1x8x256xf32, #tpu.memory_space<vmem>>, %arg2: memref<1x1x8xf32, #tpu.memory_space<vmem>>, %arg3: memref<1x256xf32, #tpu.memory_space<vmem>>, %arg4: memref<1x256xf32, #tpu.memory_space<vmem>>, %arg5: memref<2x256x128xbf16, #tpu.memory_space<vmem>>, %arg6: memref<2x256x128xbf16, #tpu.memory_space<vmem>>, %arg7: memref<2x256x128xbf16, #tpu.memory_space<vmem>>, %arg8: memref<2x1x128xf32, #tpu.memory_space<vmem>>, %arg9: memref<2x1x128xf32, #tpu.memory_space<vmem>>, %arg10: memref<2x1x128xf32, #tpu.memory_space<vmem>>, %arg11: memref<2x128x256xbf16, #tpu.memory_space<vmem>>, %arg12: memref<1x256xf32, #tpu.memory_space<vmem>>, %arg13: memref<1x256xf32, #tpu.memory_space<vmem>>, %arg14: memref<1x256xf32, #tpu.memory_space<vmem>>, %arg15: memref<256x1024xbf16, #tpu.memory_space<vmem>>, %arg16: memref<1x1024xf32, #tpu.memory_space<vmem>>, %arg17: memref<1024x256xbf16, #tpu.memory_space<vmem>>, %arg18: memref<1x256xf32, #tpu.memory_space<vmem>>, %arg19: memref<1x8x256xf32, #tpu.memory_space<vmem>>) attributes {dimension_semantics = [#tpu.dimension_semantics<parallel>], iteration_bounds = array<i64: 2>, scalar_prefetch = 0 : i64, scratch_operands = 0 : i64, tpu.core_type = #tpu.core_type<tc>, window_params = [{transform_indices = @transform_0, window_bounds = array<i64: 1, 8, 256>}, {transform_indices = @transform_1, window_bounds = array<i64: 1, 1, 8>}, {pipeline_mode = #tpu.pipeline_mode<synchronous>, transform_indices = @transform_2, window_bounds = array<i64: 1, 256>}, {pipeline_mode = #tpu.pipeline_mode<synchronous>, transform_indices = @transform_3, window_bounds = array<i64: 1, 256>}, {pipeline_mode = #tpu.pipeline_mode<synchronous>, transform_indices = @transform_4, window_bounds = array<i64: 2, 256, 128>}, {pipeline_mode = #tpu.pipeline_mode<synchronous>, transform_indices = @transform_5, window_bounds = array<i64: 2, 256, 128>}, {pipeline_mode = #tpu.pipeline_mode<synchronous>, transform_indices = @transform_6, window_bounds = array<i64: 2, 256, 128>}, {pipeline_mode = #tpu.pipeline_mode<synchronous>, transform_indices = @transform_7, window_bounds = array<i64: 2, 1, 128>}, {pipeline_mode = #tpu.pipeline_mode<synchronous>, transform_indices = @transform_8, window_bounds = array<i64: 2, 1, 128>}, {pipeline_mode = #tpu.pipeline_mode<synchronous>, transform_indices = @transform_9, window_bounds = array<i64: 2, 1, 128>}, {pipeline_mode = #tpu.pipeline_mode<synchronous>, transform_indices = @transform_10, window_bounds = array<i64: 2, 128, 256>}, {pipeline_mode = #tpu.pipeline_mode<synchronous>, transform_indices = @transform_11, window_bounds = array<i64: 1, 256>}, {pipeline_mode = #tpu.pipeline_mode<synchronous>, transform_indices = @transform_12, window_bounds = array<i64: 1, 256>}, {pipeline_mode = #tpu.pipeline_mode<synchronous>, transform_indices = @transform_13, window_bounds = array<i64: 1, 256>}, {pipeline_mode = #tpu.pipeline_mode<synchronous>, transform_indices = @transform_14, window_bounds = array<i64: 256, 1024>}, {pipeline_mode = #tpu.pipeline_mode<synchronous>, transform_indices = @transform_15, window_bounds = array<i64: 1, 1024>}, {pipeline_mode = #tpu.pipeline_mode<synchronous>, transform_indices = @transform_16, window_bounds = array<i64: 1024, 256>}, {pipeline_mode = #tpu.pipeline_mode<synchronous>, transform_indices = @transform_17, window_bounds = array<i64: 1, 256>}, {transform_indices = @transform_18, window_bounds = array<i64: 1, 8, 256>}]} {
    %c0 = arith.constant 0 : index
    %c0_0 = arith.constant 0 : index
    %c0_1 = arith.constant 0 : index
    %0 = vector.load %arg1[%c0, %c0_0, %c0_1] : memref<1x8x256xf32, #tpu.memory_space<vmem>>, vector<1x8x256xf32>
    %1 = vector.shape_cast %0 : vector<1x8x256xf32> to vector<8x256xf32>
    %c0_2 = arith.constant 0 : index
    %c0_3 = arith.constant 0 : index
    %c0_4 = arith.constant 0 : index
    %2 = vector.load %arg2[%c0_2, %c0_3, %c0_4] : memref<1x1x8xf32, #tpu.memory_space<vmem>>, vector<1x1x8xf32>
    %3 = vector.shape_cast %2 : vector<1x1x8xf32> to vector<1x8xf32>
    %cst = arith.constant 5.000000e-01 : f32
    %4 = vector.broadcast %cst : f32 to vector<1x8xf32>
    %5 = arith.cmpf ogt, %3, %4 : vector<1x8xf32>
    %c0_5 = arith.constant 0 : index
    %c0_6 = arith.constant 0 : index
    %6 = vector.load %arg3[%c0_5, %c0_6] : memref<1x256xf32, #tpu.memory_space<vmem>>, vector<1x256xf32>
    %c0_7 = arith.constant 0 : index
    %c0_8 = arith.constant 0 : index
    %7 = vector.load %arg4[%c0_7, %c0_8] : memref<1x256xf32, #tpu.memory_space<vmem>>, vector<1x256xf32>
    %cst_9 = arith.constant dense<0.000000e+00> : vector<8xf32>
    %8 = vector.multi_reduction <add>, %1, %cst_9 [1] : vector<8x256xf32> to vector<8xf32>
    %9 = vector.shape_cast %8 : vector<8xf32> to vector<8x1xf32>
    %cst_10 = arith.constant 2.560000e+02 : f32
    %10 = vector.broadcast %cst_10 : f32 to vector<8x1xf32>
    %11 = arith.divf %9, %10 : vector<8x1xf32>
    %12 = vector.broadcast %11 : vector<8x1xf32> to vector<8x256xf32>
    %13 = arith.subf %1, %12 : vector<8x256xf32>
    %14 = arith.mulf %13, %13 : vector<8x256xf32>
    %cst_11 = arith.constant dense<0.000000e+00> : vector<8xf32>
    %15 = vector.multi_reduction <add>, %14, %cst_11 [1] : vector<8x256xf32> to vector<8xf32>
    %16 = vector.shape_cast %15 : vector<8xf32> to vector<8x1xf32>
    %cst_12 = arith.constant 2.560000e+02 : f32
    %17 = vector.broadcast %cst_12 : f32 to vector<8x1xf32>
    %18 = arith.divf %16, %17 : vector<8x1xf32>
    %19 = vector.broadcast %11 : vector<8x1xf32> to vector<8x256xf32>
    %20 = arith.subf %1, %19 : vector<8x256xf32>
    %cst_13 = arith.constant 9.99999974E-6 : f32
    %21 = vector.broadcast %cst_13 : f32 to vector<8x1xf32>
    %22 = arith.addf %18, %21 : vector<8x1xf32>
    %23 = math.rsqrt %22 : vector<8x1xf32>
    %24 = vector.broadcast %23 : vector<8x1xf32> to vector<8x256xf32>
    %25 = arith.mulf %20, %24 : vector<8x256xf32>
    %26 = vector.broadcast %6 : vector<1x256xf32> to vector<8x256xf32>
    %27 = arith.mulf %25, %26 : vector<8x256xf32>
    %28 = vector.broadcast %7 : vector<1x256xf32> to vector<8x256xf32>
    %29 = arith.addf %27, %28 : vector<8x256xf32>
    %30 = arith.truncf %29 : vector<8x256xf32> to vector<8x256xbf16>
    %cst_14 = arith.constant 0.000000e+00 : f32
    %31 = vector.broadcast %cst_14 : f32 to vector<8x256xf32>
    %c0_15 = arith.constant 0 : index
    %c0_16 = arith.constant 0 : index
    %c0_17 = arith.constant 0 : index
    %32 = vector.load %arg5[%c0_15, %c0_16, %c0_17] : memref<2x256x128xbf16, #tpu.memory_space<vmem>>, vector<1x256x128xbf16>
    %33 = vector.shape_cast %32 : vector<1x256x128xbf16> to vector<256x128xbf16>
    %cst_18 = arith.constant dense<0.000000e+00> : vector<8x128xf32>
    %34 = tpu.matmul %30, %33, %cst_18 {dimension_numbers = #tpu.dot_dimension_numbers<[1], [0], [0], [1], [0, 0, 1, 1], [], []>} : vector<8x256xbf16>, vector<256x128xbf16>, vector<8x128xf32> -> vector<8x128xf32>
    %c0_19 = arith.constant 0 : index
    %c0_20 = arith.constant 0 : index
    %c0_21 = arith.constant 0 : index
    %35 = vector.load %arg8[%c0_19, %c0_20, %c0_21] : memref<2x1x128xf32, #tpu.memory_space<vmem>>, vector<1x1x128xf32>
    %36 = vector.shape_cast %35 : vector<1x1x128xf32> to vector<1x128xf32>
    %37 = vector.broadcast %36 : vector<1x128xf32> to vector<8x128xf32>
    %38 = arith.addf %34, %37 : vector<8x128xf32>
    %c0_22 = arith.constant 0 : index
    %c0_23 = arith.constant 0 : index
    %c0_24 = arith.constant 0 : index
    %39 = vector.load %arg6[%c0_22, %c0_23, %c0_24] : memref<2x256x128xbf16, #tpu.memory_space<vmem>>, vector<1x256x128xbf16>
    %40 = vector.shape_cast %39 : vector<1x256x128xbf16> to vector<256x128xbf16>
    %cst_25 = arith.constant dense<0.000000e+00> : vector<8x128xf32>
    %41 = tpu.matmul %30, %40, %cst_25 {dimension_numbers = #tpu.dot_dimension_numbers<[1], [0], [0], [1], [0, 0, 1, 1], [], []>} : vector<8x256xbf16>, vector<256x128xbf16>, vector<8x128xf32> -> vector<8x128xf32>
    %c0_26 = arith.constant 0 : index
    %c0_27 = arith.constant 0 : index
    %c0_28 = arith.constant 0 : index
    %42 = vector.load %arg9[%c0_26, %c0_27, %c0_28] : memref<2x1x128xf32, #tpu.memory_space<vmem>>, vector<1x1x128xf32>
    %43 = vector.shape_cast %42 : vector<1x1x128xf32> to vector<1x128xf32>
    %44 = vector.broadcast %43 : vector<1x128xf32> to vector<8x128xf32>
    %45 = arith.addf %41, %44 : vector<8x128xf32>
    %c0_29 = arith.constant 0 : index
    %c0_30 = arith.constant 0 : index
    %c0_31 = arith.constant 0 : index
    %46 = vector.load %arg7[%c0_29, %c0_30, %c0_31] : memref<2x256x128xbf16, #tpu.memory_space<vmem>>, vector<1x256x128xbf16>
    %47 = vector.shape_cast %46 : vector<1x256x128xbf16> to vector<256x128xbf16>
    %cst_32 = arith.constant dense<0.000000e+00> : vector<8x128xf32>
    %48 = tpu.matmul %30, %47, %cst_32 {dimension_numbers = #tpu.dot_dimension_numbers<[1], [0], [0], [1], [0, 0, 1, 1], [], []>} : vector<8x256xbf16>, vector<256x128xbf16>, vector<8x128xf32> -> vector<8x128xf32>
    %c0_33 = arith.constant 0 : index
    %c0_34 = arith.constant 0 : index
    %c0_35 = arith.constant 0 : index
    %49 = vector.load %arg10[%c0_33, %c0_34, %c0_35] : memref<2x1x128xf32, #tpu.memory_space<vmem>>, vector<1x1x128xf32>
    %50 = vector.shape_cast %49 : vector<1x1x128xf32> to vector<1x128xf32>
    %51 = vector.broadcast %50 : vector<1x128xf32> to vector<8x128xf32>
    %52 = arith.addf %48, %51 : vector<8x128xf32>
    %53 = arith.truncf %38 : vector<8x128xf32> to vector<8x128xbf16>
    %54 = arith.truncf %45 : vector<8x128xf32> to vector<8x128xbf16>
    %cst_36 = arith.constant dense<0.000000e+00> : vector<8x8xf32>
    %55 = tpu.matmul %53, %54, %cst_36 {dimension_numbers = #tpu.dot_dimension_numbers<[1], [1], [0], [0], [0, 0, 1, 0], [], []>} : vector<8x128xbf16>, vector<8x128xbf16>, vector<8x8xf32> -> vector<8x8xf32>
    %cst_37 = arith.constant 0.0883883461 : f32
    %56 = vector.broadcast %cst_37 : f32 to vector<8x8xf32>
    %57 = arith.mulf %55, %56 : vector<8x8xf32>
    %cst_38 = arith.constant -1.000000e+30 : f32
    %58 = vector.shape_cast %5 : vector<1x8xi1> to vector<1x8xi1>
    %59 = vector.broadcast %58 : vector<1x8xi1> to vector<8x8xi1>
    %60 = vector.broadcast %cst_38 : f32 to vector<8x8xf32>
    %61 = arith.select %59, %57, %60 : vector<8x8xi1>, vector<8x8xf32>
    %cst_39 = arith.constant dense<0xFF800000> : vector<8xf32>
    %62 = vector.multi_reduction <maximumf>, %61, %cst_39 [1] : vector<8x8xf32> to vector<8xf32>
    %cst_40 = arith.constant 0xFF800000 : f32
    %63 = vector.broadcast %cst_40 : f32 to vector<8xf32>
    %64 = arith.maximumf %63, %62 : vector<8xf32>
    %65 = vector.shape_cast %64 : vector<8xf32> to vector<8x1xf32>
    %66 = vector.broadcast %65 : vector<8x1xf32> to vector<8x8xf32>
    %67 = arith.subf %61, %66 : vector<8x8xf32>
    %68 = math.exp %67 : vector<8x8xf32>
    %cst_41 = arith.constant dense<0.000000e+00> : vector<8xf32>
    %69 = vector.multi_reduction <add>, %68, %cst_41 [1] : vector<8x8xf32> to vector<8xf32>
    %70 = vector.shape_cast %69 : vector<8xf32> to vector<8x1xf32>
    %71 = vector.broadcast %70 : vector<8x1xf32> to vector<8x8xf32>
    %72 = arith.divf %68, %71 : vector<8x8xf32>
    %73 = arith.truncf %72 : vector<8x8xf32> to vector<8x8xbf16>
    %74 = arith.truncf %52 : vector<8x128xf32> to vector<8x128xbf16>
    %cst_42 = arith.constant dense<0.000000e+00> : vector<8x128xf32>
    %75 = tpu.matmul %73, %74, %cst_42 {dimension_numbers = #tpu.dot_dimension_numbers<[1], [0], [0], [1], [0, 0, 1, 1], [], []>} : vector<8x8xbf16>, vector<8x128xbf16>, vector<8x128xf32> -> vector<8x128xf32>
    %76 = arith.truncf %75 : vector<8x128xf32> to vector<8x128xbf16>
    %c0_43 = arith.constant 0 : index
    %c0_44 = arith.constant 0 : index
    %c0_45 = arith.constant 0 : index
    %77 = vector.load %arg11[%c0_43, %c0_44, %c0_45] : memref<2x128x256xbf16, #tpu.memory_space<vmem>>, vector<1x128x256xbf16>
    %78 = vector.shape_cast %77 : vector<1x128x256xbf16> to vector<128x256xbf16>
    %cst_46 = arith.constant dense<0.000000e+00> : vector<8x256xf32>
    %79 = tpu.matmul %76, %78, %cst_46 {dimension_numbers = #tpu.dot_dimension_numbers<[1], [0], [0], [1], [0, 0, 1, 1], [], []>} : vector<8x128xbf16>, vector<128x256xbf16>, vector<8x256xf32> -> vector<8x256xf32>
    %80 = arith.addf %31, %79 : vector<8x256xf32>
    %c1 = arith.constant 1 : index
    %c0_47 = arith.constant 0 : index
    %c0_48 = arith.constant 0 : index
    %81 = vector.load %arg5[%c1, %c0_47, %c0_48] : memref<2x256x128xbf16, #tpu.memory_space<vmem>>, vector<1x256x128xbf16>
    %82 = vector.shape_cast %81 : vector<1x256x128xbf16> to vector<256x128xbf16>
    %cst_49 = arith.constant dense<0.000000e+00> : vector<8x128xf32>
    %83 = tpu.matmul %30, %82, %cst_49 {dimension_numbers = #tpu.dot_dimension_numbers<[1], [0], [0], [1], [0, 0, 1, 1], [], []>} : vector<8x256xbf16>, vector<256x128xbf16>, vector<8x128xf32> -> vector<8x128xf32>
    %c1_50 = arith.constant 1 : index
    %c0_51 = arith.constant 0 : index
    %c0_52 = arith.constant 0 : index
    %84 = vector.load %arg8[%c1_50, %c0_51, %c0_52] : memref<2x1x128xf32, #tpu.memory_space<vmem>>, vector<1x1x128xf32>
    %85 = vector.shape_cast %84 : vector<1x1x128xf32> to vector<1x128xf32>
    %86 = vector.broadcast %85 : vector<1x128xf32> to vector<8x128xf32>
    %87 = arith.addf %83, %86 : vector<8x128xf32>
    %c1_53 = arith.constant 1 : index
    %c0_54 = arith.constant 0 : index
    %c0_55 = arith.constant 0 : index
    %88 = vector.load %arg6[%c1_53, %c0_54, %c0_55] : memref<2x256x128xbf16, #tpu.memory_space<vmem>>, vector<1x256x128xbf16>
    %89 = vector.shape_cast %88 : vector<1x256x128xbf16> to vector<256x128xbf16>
    %cst_56 = arith.constant dense<0.000000e+00> : vector<8x128xf32>
    %90 = tpu.matmul %30, %89, %cst_56 {dimension_numbers = #tpu.dot_dimension_numbers<[1], [0], [0], [1], [0, 0, 1, 1], [], []>} : vector<8x256xbf16>, vector<256x128xbf16>, vector<8x128xf32> -> vector<8x128xf32>
    %c1_57 = arith.constant 1 : index
    %c0_58 = arith.constant 0 : index
    %c0_59 = arith.constant 0 : index
    %91 = vector.load %arg9[%c1_57, %c0_58, %c0_59] : memref<2x1x128xf32, #tpu.memory_space<vmem>>, vector<1x1x128xf32>
    %92 = vector.shape_cast %91 : vector<1x1x128xf32> to vector<1x128xf32>
    %93 = vector.broadcast %92 : vector<1x128xf32> to vector<8x128xf32>
    %94 = arith.addf %90, %93 : vector<8x128xf32>
    %c1_60 = arith.constant 1 : index
    %c0_61 = arith.constant 0 : index
    %c0_62 = arith.constant 0 : index
    %95 = vector.load %arg7[%c1_60, %c0_61, %c0_62] : memref<2x256x128xbf16, #tpu.memory_space<vmem>>, vector<1x256x128xbf16>
    %96 = vector.shape_cast %95 : vector<1x256x128xbf16> to vector<256x128xbf16>
    %cst_63 = arith.constant dense<0.000000e+00> : vector<8x128xf32>
    %97 = tpu.matmul %30, %96, %cst_63 {dimension_numbers = #tpu.dot_dimension_numbers<[1], [0], [0], [1], [0, 0, 1, 1], [], []>} : vector<8x256xbf16>, vector<256x128xbf16>, vector<8x128xf32> -> vector<8x128xf32>
    %c1_64 = arith.constant 1 : index
    %c0_65 = arith.constant 0 : index
    %c0_66 = arith.constant 0 : index
    %98 = vector.load %arg10[%c1_64, %c0_65, %c0_66] : memref<2x1x128xf32, #tpu.memory_space<vmem>>, vector<1x1x128xf32>
    %99 = vector.shape_cast %98 : vector<1x1x128xf32> to vector<1x128xf32>
    %100 = vector.broadcast %99 : vector<1x128xf32> to vector<8x128xf32>
    %101 = arith.addf %97, %100 : vector<8x128xf32>
    %102 = arith.truncf %87 : vector<8x128xf32> to vector<8x128xbf16>
    %103 = arith.truncf %94 : vector<8x128xf32> to vector<8x128xbf16>
    %cst_67 = arith.constant dense<0.000000e+00> : vector<8x8xf32>
    %104 = tpu.matmul %102, %103, %cst_67 {dimension_numbers = #tpu.dot_dimension_numbers<[1], [1], [0], [0], [0, 0, 1, 0], [], []>} : vector<8x128xbf16>, vector<8x128xbf16>, vector<8x8xf32> -> vector<8x8xf32>
    %cst_68 = arith.constant 0.0883883461 : f32
    %105 = vector.broadcast %cst_68 : f32 to vector<8x8xf32>
    %106 = arith.mulf %104, %105 : vector<8x8xf32>
    %cst_69 = arith.constant -1.000000e+30 : f32
    %107 = vector.shape_cast %5 : vector<1x8xi1> to vector<1x8xi1>
    %108 = vector.broadcast %107 : vector<1x8xi1> to vector<8x8xi1>
    %109 = vector.broadcast %cst_69 : f32 to vector<8x8xf32>
    %110 = arith.select %108, %106, %109 : vector<8x8xi1>, vector<8x8xf32>
    %cst_70 = arith.constant dense<0xFF800000> : vector<8xf32>
    %111 = vector.multi_reduction <maximumf>, %110, %cst_70 [1] : vector<8x8xf32> to vector<8xf32>
    %cst_71 = arith.constant 0xFF800000 : f32
    %112 = vector.broadcast %cst_71 : f32 to vector<8xf32>
    %113 = arith.maximumf %112, %111 : vector<8xf32>
    %114 = vector.shape_cast %113 : vector<8xf32> to vector<8x1xf32>
    %115 = vector.broadcast %114 : vector<8x1xf32> to vector<8x8xf32>
    %116 = arith.subf %110, %115 : vector<8x8xf32>
    %117 = math.exp %116 : vector<8x8xf32>
    %cst_72 = arith.constant dense<0.000000e+00> : vector<8xf32>
    %118 = vector.multi_reduction <add>, %117, %cst_72 [1] : vector<8x8xf32> to vector<8xf32>
    %119 = vector.shape_cast %118 : vector<8xf32> to vector<8x1xf32>
    %120 = vector.broadcast %119 : vector<8x1xf32> to vector<8x8xf32>
    %121 = arith.divf %117, %120 : vector<8x8xf32>
    %122 = arith.truncf %121 : vector<8x8xf32> to vector<8x8xbf16>
    %123 = arith.truncf %101 : vector<8x128xf32> to vector<8x128xbf16>
    %cst_73 = arith.constant dense<0.000000e+00> : vector<8x128xf32>
    %124 = tpu.matmul %122, %123, %cst_73 {dimension_numbers = #tpu.dot_dimension_numbers<[1], [0], [0], [1], [0, 0, 1, 1], [], []>} : vector<8x8xbf16>, vector<8x128xbf16>, vector<8x128xf32> -> vector<8x128xf32>
    %125 = arith.truncf %124 : vector<8x128xf32> to vector<8x128xbf16>
    %c1_74 = arith.constant 1 : index
    %c0_75 = arith.constant 0 : index
    %c0_76 = arith.constant 0 : index
    %126 = vector.load %arg11[%c1_74, %c0_75, %c0_76] : memref<2x128x256xbf16, #tpu.memory_space<vmem>>, vector<1x128x256xbf16>
    %127 = vector.shape_cast %126 : vector<1x128x256xbf16> to vector<128x256xbf16>
    %cst_77 = arith.constant dense<0.000000e+00> : vector<8x256xf32>
    %128 = tpu.matmul %125, %127, %cst_77 {dimension_numbers = #tpu.dot_dimension_numbers<[1], [0], [0], [1], [0, 0, 1, 1], [], []>} : vector<8x128xbf16>, vector<128x256xbf16>, vector<8x256xf32> -> vector<8x256xf32>
    %129 = arith.addf %80, %128 : vector<8x256xf32>
    %130 = arith.addf %1, %129 : vector<8x256xf32>
    %c0_78 = arith.constant 0 : index
    %c0_79 = arith.constant 0 : index
    %131 = vector.load %arg12[%c0_78, %c0_79] : memref<1x256xf32, #tpu.memory_space<vmem>>, vector<1x256xf32>
    %132 = vector.broadcast %131 : vector<1x256xf32> to vector<8x256xf32>
    %133 = arith.addf %130, %132 : vector<8x256xf32>
    %c0_80 = arith.constant 0 : index
    %c0_81 = arith.constant 0 : index
    %134 = vector.load %arg13[%c0_80, %c0_81] : memref<1x256xf32, #tpu.memory_space<vmem>>, vector<1x256xf32>
    %c0_82 = arith.constant 0 : index
    %c0_83 = arith.constant 0 : index
    %135 = vector.load %arg14[%c0_82, %c0_83] : memref<1x256xf32, #tpu.memory_space<vmem>>, vector<1x256xf32>
    %cst_84 = arith.constant dense<0.000000e+00> : vector<8xf32>
    %136 = vector.multi_reduction <add>, %133, %cst_84 [1] : vector<8x256xf32> to vector<8xf32>
    %137 = vector.shape_cast %136 : vector<8xf32> to vector<8x1xf32>
    %cst_85 = arith.constant 2.560000e+02 : f32
    %138 = vector.broadcast %cst_85 : f32 to vector<8x1xf32>
    %139 = arith.divf %137, %138 : vector<8x1xf32>
    %140 = vector.broadcast %139 : vector<8x1xf32> to vector<8x256xf32>
    %141 = arith.subf %133, %140 : vector<8x256xf32>
    %142 = arith.mulf %141, %141 : vector<8x256xf32>
    %cst_86 = arith.constant dense<0.000000e+00> : vector<8xf32>
    %143 = vector.multi_reduction <add>, %142, %cst_86 [1] : vector<8x256xf32> to vector<8xf32>
    %144 = vector.shape_cast %143 : vector<8xf32> to vector<8x1xf32>
    %cst_87 = arith.constant 2.560000e+02 : f32
    %145 = vector.broadcast %cst_87 : f32 to vector<8x1xf32>
    %146 = arith.divf %144, %145 : vector<8x1xf32>
    %147 = vector.broadcast %139 : vector<8x1xf32> to vector<8x256xf32>
    %148 = arith.subf %133, %147 : vector<8x256xf32>
    %cst_88 = arith.constant 9.99999974E-6 : f32
    %149 = vector.broadcast %cst_88 : f32 to vector<8x1xf32>
    %150 = arith.addf %146, %149 : vector<8x1xf32>
    %151 = math.rsqrt %150 : vector<8x1xf32>
    %152 = vector.broadcast %151 : vector<8x1xf32> to vector<8x256xf32>
    %153 = arith.mulf %148, %152 : vector<8x256xf32>
    %154 = vector.broadcast %134 : vector<1x256xf32> to vector<8x256xf32>
    %155 = arith.mulf %153, %154 : vector<8x256xf32>
    %156 = vector.broadcast %135 : vector<1x256xf32> to vector<8x256xf32>
    %157 = arith.addf %155, %156 : vector<8x256xf32>
    %158 = arith.truncf %157 : vector<8x256xf32> to vector<8x256xbf16>
    %cst_89 = arith.constant 0.000000e+00 : f32
    %159 = vector.broadcast %cst_89 : f32 to vector<8x256xf32>
    %c0_90 = arith.constant 0 : index
    %c0_91 = arith.constant 0 : index
    %160 = vector.load %arg15[%c0_90, %c0_91] : memref<256x1024xbf16, #tpu.memory_space<vmem>>, vector<256x512xbf16>
    %cst_92 = arith.constant dense<0.000000e+00> : vector<8x512xf32>
    %161 = tpu.matmul %158, %160, %cst_92 {dimension_numbers = #tpu.dot_dimension_numbers<[1], [0], [0], [1], [0, 0, 1, 1], [], []>} : vector<8x256xbf16>, vector<256x512xbf16>, vector<8x512xf32> -> vector<8x512xf32>
    %c0_93 = arith.constant 0 : index
    %c0_94 = arith.constant 0 : index
    %162 = vector.load %arg16[%c0_93, %c0_94] : memref<1x1024xf32, #tpu.memory_space<vmem>>, vector<1x512xf32>
    %163 = vector.broadcast %162 : vector<1x512xf32> to vector<8x512xf32>
    %164 = arith.addf %161, %163 : vector<8x512xf32>
    %cst_95 = arith.constant 5.000000e-01 : f32
    %165 = vector.broadcast %cst_95 : f32 to vector<8x512xf32>
    %166 = arith.mulf %165, %164 : vector<8x512xf32>
    %cst_96 = arith.constant 0.707106769 : f32
    %167 = vector.broadcast %cst_96 : f32 to vector<8x512xf32>
    %168 = arith.mulf %164, %167 : vector<8x512xf32>
    %169 = math.erf %168 : vector<8x512xf32>
    %cst_97 = arith.constant 1.000000e+00 : f32
    %170 = vector.broadcast %cst_97 : f32 to vector<8x512xf32>
    %171 = arith.addf %170, %169 : vector<8x512xf32>
    %172 = arith.mulf %166, %171 : vector<8x512xf32>
    %173 = arith.truncf %172 : vector<8x512xf32> to vector<8x512xbf16>
    %c0_98 = arith.constant 0 : index
    %c0_99 = arith.constant 0 : index
    %174 = vector.load %arg17[%c0_98, %c0_99] : memref<1024x256xbf16, #tpu.memory_space<vmem>>, vector<512x256xbf16>
    %cst_100 = arith.constant dense<0.000000e+00> : vector<8x256xf32>
    %175 = tpu.matmul %173, %174, %cst_100 {dimension_numbers = #tpu.dot_dimension_numbers<[1], [0], [0], [1], [0, 0, 1, 1], [], []>} : vector<8x512xbf16>, vector<512x256xbf16>, vector<8x256xf32> -> vector<8x256xf32>
    %176 = arith.addf %159, %175 : vector<8x256xf32>
    %c0_101 = arith.constant 0 : index
    %c512 = arith.constant 512 : index
    %177 = vector.load %arg15[%c0_101, %c512] : memref<256x1024xbf16, #tpu.memory_space<vmem>>, vector<256x512xbf16>
    %cst_102 = arith.constant dense<0.000000e+00> : vector<8x512xf32>
    %178 = tpu.matmul %158, %177, %cst_102 {dimension_numbers = #tpu.dot_dimension_numbers<[1], [0], [0], [1], [0, 0, 1, 1], [], []>} : vector<8x256xbf16>, vector<256x512xbf16>, vector<8x512xf32> -> vector<8x512xf32>
    %c0_103 = arith.constant 0 : index
    %c512_104 = arith.constant 512 : index
    %179 = vector.load %arg16[%c0_103, %c512_104] : memref<1x1024xf32, #tpu.memory_space<vmem>>, vector<1x512xf32>
    %180 = vector.broadcast %179 : vector<1x512xf32> to vector<8x512xf32>
    %181 = arith.addf %178, %180 : vector<8x512xf32>
    %cst_105 = arith.constant 5.000000e-01 : f32
    %182 = vector.broadcast %cst_105 : f32 to vector<8x512xf32>
    %183 = arith.mulf %182, %181 : vector<8x512xf32>
    %cst_106 = arith.constant 0.707106769 : f32
    %184 = vector.broadcast %cst_106 : f32 to vector<8x512xf32>
    %185 = arith.mulf %181, %184 : vector<8x512xf32>
    %186 = math.erf %185 : vector<8x512xf32>
    %cst_107 = arith.constant 1.000000e+00 : f32
    %187 = vector.broadcast %cst_107 : f32 to vector<8x512xf32>
    %188 = arith.addf %187, %186 : vector<8x512xf32>
    %189 = arith.mulf %183, %188 : vector<8x512xf32>
    %190 = arith.truncf %189 : vector<8x512xf32> to vector<8x512xbf16>
    %c512_108 = arith.constant 512 : index
    %c0_109 = arith.constant 0 : index
    %191 = vector.load %arg17[%c512_108, %c0_109] : memref<1024x256xbf16, #tpu.memory_space<vmem>>, vector<512x256xbf16>
    %cst_110 = arith.constant dense<0.000000e+00> : vector<8x256xf32>
    %192 = tpu.matmul %190, %191, %cst_110 {dimension_numbers = #tpu.dot_dimension_numbers<[1], [0], [0], [1], [0, 0, 1, 1], [], []>} : vector<8x512xbf16>, vector<512x256xbf16>, vector<8x256xf32> -> vector<8x256xf32>
    %193 = arith.addf %176, %192 : vector<8x256xf32>
    %194 = arith.addf %133, %193 : vector<8x256xf32>
    %c0_111 = arith.constant 0 : index
    %c0_112 = arith.constant 0 : index
    %195 = vector.load %arg18[%c0_111, %c0_112] : memref<1x256xf32, #tpu.memory_space<vmem>>, vector<1x256xf32>
    %196 = vector.broadcast %195 : vector<1x256xf32> to vector<8x256xf32>
    %197 = arith.addf %194, %196 : vector<8x256xf32>
    %c0_113 = arith.constant 0 : index
    %c0_114 = arith.constant 0 : index
    %c0_115 = arith.constant 0 : index
    %198 = vector.load %arg19[%c0_113, %c0_114, %c0_115] : memref<1x8x256xf32, #tpu.memory_space<vmem>>, vector<1x8x256xf32>
    %199 = vector.shape_cast %198 : vector<1x8x256xf32> to vector<8x256xf32>
    %200 = vector.shape_cast %197 : vector<8x256xf32> to vector<1x8x256xf32>
    tpu.vector_store %arg19[%c0_113, %c0_114, %c0_115], %200 {strides = array<i32>} : memref<1x8x256xf32, #tpu.memory_space<vmem>>, vector<1x8x256xf32>,
    return
  }
  func.func @transform_0(%arg0: i32) -> (i32, i32, i32) {
    %c0_i32 = arith.constant 0 : i32
    %c0_i32_0 = arith.constant 0 : i32
    %c0_i32_1 = arith.constant 0 : i32
    return %arg0, %c0_i32, %c0_i32_0 : i32, i32, i32
  }
  func.func @transform_1(%arg0: i32) -> (i32, i32, i32) {
    %c0_i32 = arith.constant 0 : i32
    %c0_i32_0 = arith.constant 0 : i32
    %c0_i32_1 = arith.constant 0 : i32
    return %arg0, %c0_i32, %c0_i32_0 : i32, i32, i32
  }
  func.func @transform_2(%arg0: i32) -> (i32, i32) {
    %c0_i32 = arith.constant 0 : i32
    %c0_i32_0 = arith.constant 0 : i32
    %c0_i32_1 = arith.constant 0 : i32
    return %c0_i32, %c0_i32_0 : i32, i32
  }
  func.func @transform_3(%arg0: i32) -> (i32, i32) {
    %c0_i32 = arith.constant 0 : i32
    %c0_i32_0 = arith.constant 0 : i32
    %c0_i32_1 = arith.constant 0 : i32
    return %c0_i32, %c0_i32_0 : i32, i32
  }
  func.func @transform_4(%arg0: i32) -> (i32, i32, i32) {
    %c0_i32 = arith.constant 0 : i32
    %c0_i32_0 = arith.constant 0 : i32
    %c0_i32_1 = arith.constant 0 : i32
    %c0_i32_2 = arith.constant 0 : i32
    return %c0_i32, %c0_i32_0, %c0_i32_1 : i32, i32, i32
  }
  func.func @transform_5(%arg0: i32) -> (i32, i32, i32) {
    %c0_i32 = arith.constant 0 : i32
    %c0_i32_0 = arith.constant 0 : i32
    %c0_i32_1 = arith.constant 0 : i32
    %c0_i32_2 = arith.constant 0 : i32
    return %c0_i32, %c0_i32_0, %c0_i32_1 : i32, i32, i32
  }
  func.func @transform_6(%arg0: i32) -> (i32, i32, i32) {
    %c0_i32 = arith.constant 0 : i32
    %c0_i32_0 = arith.constant 0 : i32
    %c0_i32_1 = arith.constant 0 : i32
    %c0_i32_2 = arith.constant 0 : i32
    return %c0_i32, %c0_i32_0, %c0_i32_1 : i32, i32, i32
  }
  func.func @transform_7(%arg0: i32) -> (i32, i32, i32) {
    %c0_i32 = arith.constant 0 : i32
    %c0_i32_0 = arith.constant 0 : i32
    %c0_i32_1 = arith.constant 0 : i32
    %c0_i32_2 = arith.constant 0 : i32
    return %c0_i32, %c0_i32_0, %c0_i32_1 : i32, i32, i32
  }
  func.func @transform_8(%arg0: i32) -> (i32, i32, i32) {
    %c0_i32 = arith.constant 0 : i32
    %c0_i32_0 = arith.constant 0 : i32
    %c0_i32_1 = arith.constant 0 : i32
    %c0_i32_2 = arith.constant 0 : i32
    return %c0_i32, %c0_i32_0, %c0_i32_1 : i32, i32, i32
  }
  func.func @transform_9(%arg0: i32) -> (i32, i32, i32) {
    %c0_i32 = arith.constant 0 : i32
    %c0_i32_0 = arith.constant 0 : i32
    %c0_i32_1 = arith.constant 0 : i32
    %c0_i32_2 = arith.constant 0 : i32
    return %c0_i32, %c0_i32_0, %c0_i32_1 : i32, i32, i32
  }
  func.func @transform_10(%arg0: i32) -> (i32, i32, i32) {
    %c0_i32 = arith.constant 0 : i32
    %c0_i32_0 = arith.constant 0 : i32
    %c0_i32_1 = arith.constant 0 : i32
    %c0_i32_2 = arith.constant 0 : i32
    return %c0_i32, %c0_i32_0, %c0_i32_1 : i32, i32, i32
  }
  func.func @transform_11(%arg0: i32) -> (i32, i32) {
    %c0_i32 = arith.constant 0 : i32
    %c0_i32_0 = arith.constant 0 : i32
    %c0_i32_1 = arith.constant 0 : i32
    return %c0_i32, %c0_i32_0 : i32, i32
  }
  func.func @transform_12(%arg0: i32) -> (i32, i32) {
    %c0_i32 = arith.constant 0 : i32
    %c0_i32_0 = arith.constant 0 : i32
    %c0_i32_1 = arith.constant 0 : i32
    return %c0_i32, %c0_i32_0 : i32, i32
  }
  func.func @transform_13(%arg0: i32) -> (i32, i32) {
    %c0_i32 = arith.constant 0 : i32
    %c0_i32_0 = arith.constant 0 : i32
    %c0_i32_1 = arith.constant 0 : i32
    return %c0_i32, %c0_i32_0 : i32, i32
  }
  func.func @transform_14(%arg0: i32) -> (i32, i32) {
    %c0_i32 = arith.constant 0 : i32
    %c0_i32_0 = arith.constant 0 : i32
    %c0_i32_1 = arith.constant 0 : i32
    return %c0_i32, %c0_i32_0 : i32, i32
  }
  func.func @transform_15(%arg0: i32) -> (i32, i32) {
    %c0_i32 = arith.constant 0 : i32
    %c0_i32_0 = arith.constant 0 : i32
    %c0_i32_1 = arith.constant 0 : i32
    return %c0_i32, %c0_i32_0 : i32, i32
  }
  func.func @transform_16(%arg0: i32) -> (i32, i32) {
    %c0_i32 = arith.constant 0 : i32
    %c0_i32_0 = arith.constant 0 : i32
    %c0_i32_1 = arith.constant 0 : i32
    return %c0_i32, %c0_i32_0 : i32, i32
  }
  func.func @transform_17(%arg0: i32) -> (i32, i32) {
    %c0_i32 = arith.constant 0 : i32
    %c0_i32_0 = arith.constant 0 : i32
    %c0_i32_1 = arith.constant 0 : i32
    return %c0_i32, %c0_i32_0 : i32, i32
  }
  func.func @transform_18(%arg0: i32) -> (i32, i32, i32) {
    %c0_i32 = arith.constant 0 : i32
    %c0_i32_0 = arith.constant 0 : i32
    %c0_i32_1 = arith.constant 0 : i32
    return %arg0, %c0_i32, %c0_i32_0 : i32, i32, i32
  }
}

</mosaic_0001>

<llo_original>
// kernel: tpu_custom_call.1
$region0: #{tpu_custom_call.1}
  #allocation0 [shape = 'u32[]', space=smem, size = 0x4, offset = 0x4, fixed_abs, tag = 'smem constant byte address 0x4 - core index']
  #allocation1 [shape = 'u32[72,128]{1,0:T(1,128)}', space=vmem, size = 0x9000, scoped, tag = 'internal scratch']
  %s0 = inlined_call_operand.hbm [shape: f32[2,8,256], index: 0, kind: input, shape index: {}]
  %s1 = inlined_call_operand.hbm [shape: f32[2,1,8], index: 1, kind: input, shape index: {}]
  %s2 = inlined_call_operand.hbm [shape: f32[1,256], index: 2, kind: input, shape index: {}]
  %s3 = inlined_call_operand.vmem [shape: f32[1,256], index: 3, kind: input, shape index: {}]
  %s4 = inlined_call_operand.hbm [shape: bf16[2,256,128], index: 4, kind: input, shape index: {}]
  %s5 = inlined_call_operand.hbm [shape: bf16[2,256,128], index: 5, kind: input, shape index: {}]
  %s6 = inlined_call_operand.hbm [shape: bf16[2,256,128], index: 6, kind: input, shape index: {}]
  %s7 = inlined_call_operand.vmem [shape: f32[2,1,128], index: 7, kind: input, shape index: {}]
  %s8 = inlined_call_operand.vmem [shape: f32[2,1,128], index: 8, kind: input, shape index: {}]
  %s9 = inlined_call_operand.hbm [shape: f32[2,1,128], index: 9, kind: input, shape index: {}]
  %s10 = inlined_call_operand.hbm [shape: bf16[2,128,256], index: 10, kind: input, shape index: {}]
  %s11 = inlined_call_operand.hbm [shape: f32[1,256], index: 11, kind: input, shape index: {}]
  %s12 = inlined_call_operand.hbm [shape: f32[1,256], index: 12, kind: input, shape index: {}]
  %s13 = inlined_call_operand.hbm [shape: f32[1,256], index: 13, kind: input, shape index: {}]
  %s14 = inlined_call_operand.hbm [shape: bf16[256,1024], index: 14, kind: input, shape index: {}]
  %s15 = inlined_call_operand.vmem [shape: f32[1,1024], index: 15, kind: input, shape index: {}]
  %s16 = inlined_call_operand.hbm [shape: bf16[1024,256], index: 16, kind: input, shape index: {}]
  %s17 = inlined_call_operand.vmem [shape: f32[1,256], index: 17, kind: input, shape index: {}]
  %s18 = inlined_call_operand.hbm [shape: f32[2,8,256], index: 18, kind: output, shape index: {}]
  %s19 = sld [smem:[#allocation0]]
  $region157: #{tpu_custom_call.1} parent=0
    _
  %s21 = ssub.s32 1, %s19
  %s22 = scalar_select 0, %s21, %s19
  $region1: #{tpu_custom_call.1} parent=0
    #allocation2 [shape = 'u8[16384]{0}', space=vmem, size = 0x4000, scoped, tag = 'input window, operand 0']
    #allocation3 [shape = 's32[2]{0}', space=sflag, size = 0x8, scoped, tag = 'scoped memory for tpu_custom_call.1']
    #allocation4 [shape = 's32[2]{0}', space=sflag, size = 0x8, scoped, tag = 'scoped memory for tpu_custom_call.1']
    #allocation5 [shape = 'u8[1024]{0}', space=vmem, size = 0x400, scoped, tag = 'input window, operand 1']
    #allocation6 [shape = 's32[2]{0}', space=sflag, size = 0x8, scoped, tag = 'scoped memory for tpu_custom_call.1']
    #allocation7 [shape = 'u8[1024]{0}', space=vmem, size = 0x400, scoped, tag = 'input window, operand 2, single buffered']
    #allocation8 [shape = 'u8[131072]{0}', space=vmem, size = 0x20000, scoped, tag = 'input window, operand 4, single buffered']
    #allocation9 [shape = 's32[1]{0}', space=sflag, size = 0x4, scoped, tag = 'scoped memory for tpu_custom_call.1']
    #allocation10 [shape = 'u8[131072]{0}', space=vmem, size = 0x20000, scoped, tag = 'input window, operand 5, single buffered']
    #allocation11 [shape = 'u8[131072]{0}', space=vmem, size = 0x20000, scoped, tag = 'input window, operand 6, single buffered']
    #allocation12 [shape = 's32[1]{0}', space=sflag, size = 0x4, scoped, tag = 'scoped memory for tpu_custom_call.1']
    #allocation13 [shape = 'u8[1024]{0}', space=vmem, size = 0x400, scoped, tag = 'input window, operand 9, single buffered']
    #allocation14 [shape = 'u8[131072]{0}', space=vmem, size = 0x20000, scoped, tag = 'input window, operand 10, single buffered']
    #allocation15 [shape = 's32[1]{0}', space=sflag, size = 0x4, scoped, tag = 'scoped memory for tpu_custom_call.1']
    #allocation16 [shape = 'u8[1024]{0}', space=vmem, size = 0x400, scoped, tag = 'input window, operand 11, single buffered']
    #allocation17 [shape = 'u8[1024]{0}', space=vmem, size = 0x400, scoped, tag = 'input window, operand 12, single buffered']
    #allocation18 [shape = 's32[1]{0}', space=sflag, size = 0x4, scoped, tag = 'scoped memory for tpu_custom_call.1']
    #allocation19 [shape = 'u8[1024]{0}', space=vmem, size = 0x400, scoped, tag = 'input window, operand 13, single buffered']
    #allocation20 [shape = 'u8[524288]{0}', space=vmem, size = 0x80000, scoped, tag = 'input window, operand 14, single buffered']
    #allocation21 [shape = 's32[1]{0}', space=sflag, size = 0x4, scoped, tag = 'scoped memory for tpu_custom_call.1']
    #allocation22 [shape = 'u8[524288]{0}', space=vmem, size = 0x80000, scoped, tag = 'input window, operand 16, single buffered']
    #allocation23 [shape = 'u8[16384]{0}', space=vmem, size = 0x4000, scoped, tag = 'output window, operand 0']
    %23 = vsyncpa [#allocation3], 0
    %s24 = scalar_lea.sflag [#allocation3], 1
    %25 = vsyncpa %s24, 0
    %26 = vsyncpa [#allocation6], 0
    %s27 = scalar_lea.sflag [#allocation6], 1
    %28 = vsyncpa %s27, 0
    %29 = vsyncpa [#allocation9], 0
    %30 = vsyncpa [#allocation12], 0
    %31 = vsyncpa [#allocation15], 0
    %32 = vsyncpa [#allocation18], 0
    %33 = vsyncpa [#allocation21], 0
    %34 = vsyncpa [#allocation4], 0
    %s35 = scalar_lea.sflag [#allocation4], 1
    %36 = vsyncpa %s35, 0
    loop: start=0, step=1, limit=4
    $region2: #{tpu_custom_call.1} parent=1 // loop_pre_header
      _
    $region3: #{tpu_custom_call.1} parent=1 // loop_header
      %s38 = sphi 0, %s42
      %p39 = scmp.ge.s32.totalorder %s38, 4
      %s48 = sphi 0, %s50
      %s51 = sphi 0, %s48
      %s52 = sphi 0, %s51
      %s68 = sphi 0, %s52
      %s74 = sphi 0, %s76
      %s77 = sphi 0, %s74
      %s78 = sphi 0, %s77
      %s94 = sphi 0, %s78
      %s98 = sphi 0, %s98
      %s100 = sphi 0, %s98
      %s101 = sphi 0, %s100
      %s115 = sphi 0, %s101
      %s119 = sphi 0, %s119
      %s121 = sphi 0, %s119
      %s122 = sphi 0, %s121
      %s136 = sphi 0, %s122
      %s140 = sphi 0, %s140
      %s142 = sphi 0, %s140
      %s143 = sphi 0, %s142
      %s157 = sphi 0, %s143
      %s161 = sphi 0, %s161
      %s163 = sphi 0, %s161
      %s164 = sphi 0, %s163
      %s178 = sphi 0, %s164
      %s182 = sphi 0, %s182
      %s184 = sphi 0, %s182
      %s185 = sphi 0, %s184
      %s199 = sphi 0, %s185
      %s203 = sphi 0, %s203
      %s205 = sphi 0, %s203
      %s206 = sphi 0, %s205
      %s220 = sphi 0, %s206
      %s224 = sphi 0, %s224
      %s226 = sphi 0, %s224
      %s227 = sphi 0, %s226
      %s241 = sphi 0, %s227
      %s245 = sphi 0, %s245
      %s247 = sphi 0, %s245
      %s248 = sphi 0, %s247
      %s262 = sphi 0, %s248
      %s266 = sphi 0, %s266
      %s268 = sphi 0, %s266
      %s269 = sphi 0, %s268
      %s283 = sphi 0, %s269
      %s287 = sphi 0, %s287
      %s289 = sphi 0, %s287
      %s290 = sphi 0, %s289
      %s304 = sphi 0, %s290
      %s308 = sphi 0, %s308
      %s310 = sphi 0, %s308
      %s311 = sphi 0, %s310
      %s325 = sphi 0, %s311
      %s329 = sphi 0, %s329
      %s331 = sphi 0, %s329
      %s332 = sphi 0, %s331
      %s346 = sphi 0, %s332
      %s350 = sphi 0, %s350
      %s352 = sphi 0, %s350
      %s353 = sphi 0, %s352
      %s367 = sphi 0, %s353
      %s371 = sphi 0, %s371
      %s373 = sphi 0, %s371
      %s374 = sphi 0, %s373
      %s388 = sphi 0, %s374
      %s392 = sphi 0, %s392
      %s394 = sphi 0, %s392
      %s395 = sphi 0, %s394
      %s409 = sphi 0, %s395
      %s413 = sphi 0, %s413
      %s415 = sphi 0, %s413
      %s416 = sphi 0, %s415
      %s430 = sphi 0, %s416
      %s436 = sphi 0, %s438
      %s439 = sphi 0, %s436
      %s440 = sphi 0, %s439
      %s456 = sphi 0, %s440
    $region4: #{tpu_custom_call.1} parent=1 // loop_header_branch
      %41 = sbr.rel (%p39) target = $region8
    $region5: #{tpu_custom_call.1} parent=1 // loop_body
      %s43 = ssub.s32 %s38, 1
      %s44 = ssub.s32 %s38, 2
      %s45 = sadd.s32 %s38, 1
      %s46 = ssub.s32 %s38, %s45
      %p47 = scmp.eq.s32.totalorder %s46, 0
      %s49 = sadd.s32 %s48, 1
      %s50 = scalar_select %p47, %s48, %s49
      %p53 = pneg %p47
      %p54 = scmp.eq.s32.totalorder %s38, 1
      %p55 = por %p53, %p54
      %p56 = scmp.ne.s32.totalorder %s48, %s51
      %p57 = scmp.eq.s32.totalorder %s38, 0
      %p58 = por %p56, %p57
      %p59 = scmp.ne.s32.totalorder %s48, %s51
      %p60 = scmp.eq.s32.totalorder %s43, 1
      %p61 = por %p59, %p60
      %p62 = scmp.ne.s32.totalorder %s51, %s52
      %p63 = scmp.eq.s32.totalorder %s43, 0
      %p64 = por %p62, %p63
      %p65 = scmp.ne.s32.totalorder %s51, %s52
      %p66 = scmp.eq.s32.totalorder %s44, 1
      %p67 = por %p65, %p66
      %p69 = scmp.ne.s32.totalorder %s52, %s68
      %p70 = scmp.eq.s32.totalorder %s44, 0
      %p71 = por %p69, %p70
      %s72 = ssub.s32 %s38, %s45
      %p73 = scmp.eq.s32.totalorder %s72, 0
      %s75 = sadd.s32 %s74, 1
      %s76 = scalar_select %p73, %s74, %s75
      %p79 = pneg %p73
      %p80 = scmp.eq.s32.totalorder %s38, 1
      %p81 = por %p79, %p80
      %p82 = scmp.ne.s32.totalorder %s74, %s77
      %p83 = scmp.eq.s32.totalorder %s38, 0
      %p84 = por %p82, %p83
      %p85 = scmp.ne.s32.totalorder %s74, %s77
      %p86 = scmp.eq.s32.totalorder %s43, 1
      %p87 = por %p85, %p86
      %p88 = scmp.ne.s32.totalorder %s77, %s78
      %p89 = scmp.eq.s32.totalorder %s43, 0
      %p90 = por %p88, %p89
      %p91 = scmp.ne.s32.totalorder %s77, %s78
      %p92 = scmp.eq.s32.totalorder %s44, 1
      %p93 = por %p91, %p92
      %p95 = scmp.ne.s32.totalorder %s78, %s94
      %p96 = scmp.eq.s32.totalorder %s44, 0
      %p97 = por %p95, %p96
      %s99 = sadd.s32 %s98, 1
      %p102 = scmp.eq.s32.totalorder %s38, 1
      %p103 = scmp.ne.s32.totalorder %s98, %s100
      %p104 = scmp.eq.s32.totalorder %s38, 0
      %p105 = por %p103, %p104
      %p106 = scmp.ne.s32.totalorder %s98, %s100
      %p107 = scmp.eq.s32.totalorder %s43, 1
      %p108 = por %p106, %p107
      %p109 = scmp.ne.s32.totalorder %s100, %s101
      %p110 = scmp.eq.s32.totalorder %s43, 0
      %p111 = por %p109, %p110
      %p112 = scmp.ne.s32.totalorder %s100, %s101
      %p113 = scmp.eq.s32.totalorder %s44, 1
      %p114 = por %p112, %p113
      %p116 = scmp.ne.s32.totalorder %s101, %s115
      %p117 = scmp.eq.s32.totalorder %s44, 0
      %p118 = por %p116, %p117
      %s120 = sadd.s32 %s119, 1
      %p123 = scmp.eq.s32.totalorder %s38, 1
      %p124 = scmp.ne.s32.totalorder %s119, %s121
      %p125 = scmp.eq.s32.totalorder %s38, 0
      %p126 = por %p124, %p125
      %p127 = scmp.ne.s32.totalorder %s119, %s121
      %p128 = scmp.eq.s32.totalorder %s43, 1
      %p129 = por %p127, %p128
      %p130 = scmp.ne.s32.totalorder %s121, %s122
      %p131 = scmp.eq.s32.totalorder %s43, 0
      %p132 = por %p130, %p131
      %p133 = scmp.ne.s32.totalorder %s121, %s122
      %p134 = scmp.eq.s32.totalorder %s44, 1
      %p135 = por %p133, %p134
      %p137 = scmp.ne.s32.totalorder %s122, %s136
      %p138 = scmp.eq.s32.totalorder %s44, 0
      %p139 = por %p137, %p138
      %s141 = sadd.s32 %s140, 1
      %p144 = scmp.eq.s32.totalorder %s38, 1
      %p145 = scmp.ne.s32.totalorder %s140, %s142
      %p146 = scmp.eq.s32.totalorder %s38, 0
      %p147 = por %p145, %p146
      %p148 = scmp.ne.s32.totalorder %s140, %s142
      %p149 = scmp.eq.s32.totalorder %s43, 1
      %p150 = por %p148, %p149
      %p151 = scmp.ne.s32.totalorder %s142, %s143
      %p152 = scmp.eq.s32.totalorder %s43, 0
      %p153 = por %p151, %p152
      %p154 = scmp.ne.s32.totalorder %s142, %s143
      %p155 = scmp.eq.s32.totalorder %s44, 1
      %p156 = por %p154, %p155
      %p158 = scmp.ne.s32.totalorder %s143, %s157
      %p159 = scmp.eq.s32.totalorder %s44, 0
      %p160 = por %p158, %p159
      %s162 = sadd.s32 %s161, 1
      %p165 = scmp.eq.s32.totalorder %s38, 1
      %p166 = scmp.ne.s32.totalorder %s161, %s163
      %p167 = scmp.eq.s32.totalorder %s38, 0
      %p168 = por %p166, %p167
      %p169 = scmp.ne.s32.totalorder %s161, %s163
      %p170 = scmp.eq.s32.totalorder %s43, 1
      %p171 = por %p169, %p170
      %p172 = scmp.ne.s32.totalorder %s163, %s164
      %p173 = scmp.eq.s32.totalorder %s43, 0
      %p174 = por %p172, %p173
      %p175 = scmp.ne.s32.totalorder %s163, %s164
      %p176 = scmp.eq.s32.totalorder %s44, 1
      %p177 = por %p175, %p176
      %p179 = scmp.ne.s32.totalorder %s164, %s178
      %p180 = scmp.eq.s32.totalorder %s44, 0
      %p181 = por %p179, %p180
      %s183 = sadd.s32 %s182, 1
      %p186 = scmp.eq.s32.totalorder %s38, 1
      %p187 = scmp.ne.s32.totalorder %s182, %s184
      %p188 = scmp.eq.s32.totalorder %s38, 0
      %p189 = por %p187, %p188
      %p190 = scmp.ne.s32.totalorder %s182, %s184
      %p191 = scmp.eq.s32.totalorder %s43, 1
      %p192 = por %p190, %p191
      %p193 = scmp.ne.s32.totalorder %s184, %s185
      %p194 = scmp.eq.s32.totalorder %s43, 0
      %p195 = por %p193, %p194
      %p196 = scmp.ne.s32.totalorder %s184, %s185
      %p197 = scmp.eq.s32.totalorder %s44, 1
      %p198 = por %p196, %p197
      %p200 = scmp.ne.s32.totalorder %s185, %s199
      %p201 = scmp.eq.s32.totalorder %s44, 0
      %p202 = por %p200, %p201
      %s204 = sadd.s32 %s203, 1
      %p207 = scmp.eq.s32.totalorder %s38, 1
      %p208 = scmp.ne.s32.totalorder %s203, %s205
      %p209 = scmp.eq.s32.totalorder %s38, 0
      %p210 = por %p208, %p209
      %p211 = scmp.ne.s32.totalorder %s203, %s205
      %p212 = scmp.eq.s32.totalorder %s43, 1
      %p213 = por %p211, %p212
      %p214 = scmp.ne.s32.totalorder %s205, %s206
      %p215 = scmp.eq.s32.totalorder %s43, 0
      %p216 = por %p214, %p215
      %p217 = scmp.ne.s32.totalorder %s205, %s206
      %p218 = scmp.eq.s32.totalorder %s44, 1
      %p219 = por %p217, %p218
      %p221 = scmp.ne.s32.totalorder %s206, %s220
      %p222 = scmp.eq.s32.totalorder %s44, 0
      %p223 = por %p221, %p222
      %s225 = sadd.s32 %s224, 1
      %p228 = scmp.eq.s32.totalorder %s38, 1
      %p229 = scmp.ne.s32.totalorder %s224, %s226
      %p230 = scmp.eq.s32.totalorder %s38, 0
      %p231 = por %p229, %p230
      %p232 = scmp.ne.s32.totalorder %s224, %s226
      %p233 = scmp.eq.s32.totalorder %s43, 1
      %p234 = por %p232, %p233
      %p235 = scmp.ne.s32.totalorder %s226, %s227
      %p236 = scmp.eq.s32.totalorder %s43, 0
      %p237 = por %p235, %p236
      %p238 = scmp.ne.s32.totalorder %s226, %s227
      %p239 = scmp.eq.s32.totalorder %s44, 1
      %p240 = por %p238, %p239
      %p242 = scmp.ne.s32.totalorder %s227, %s241
      %p243 = scmp.eq.s32.totalorder %s44, 0
      %p244 = por %p242, %p243
      %s246 = sadd.s32 %s245, 1
      %p249 = scmp.eq.s32.totalorder %s38, 1
      %p250 = scmp.ne.s32.totalorder %s245, %s247
      %p251 = scmp.eq.s32.totalorder %s38, 0
      %p252 = por %p250, %p251
      %p253 = scmp.ne.s32.totalorder %s245, %s247
      %p254 = scmp.eq.s32.totalorder %s43, 1
      %p255 = por %p253, %p254
      %p256 = scmp.ne.s32.totalorder %s247, %s248
      %p257 = scmp.eq.s32.totalorder %s43, 0
      %p258 = por %p256, %p257
      %p259 = scmp.ne.s32.totalorder %s247, %s248
      %p260 = scmp.eq.s32.totalorder %s44, 1
      %p261 = por %p259, %p260
      %p263 = scmp.ne.s32.totalorder %s248, %s262
      %p264 = scmp.eq.s32.totalorder %s44, 0
      %p265 = por %p263, %p264
      %s267 = sadd.s32 %s266, 1
      %p270 = scmp.eq.s32.totalorder %s38, 1
      %p271 = scmp.ne.s32.totalorder %s266, %s268
      %p272 = scmp.eq.s32.totalorder %s38, 0
      %p273 = por %p271, %p272
      %p274 = scmp.ne.s32.totalorder %s266, %s268
      %p275 = scmp.eq.s32.totalorder %s43, 1
      %p276 = por %p274, %p275
      %p277 = scmp.ne.s32.totalorder %s268, %s269
      %p278 = scmp.eq.s32.totalorder %s43, 0
      %p279 = por %p277, %p278
      %p280 = scmp.ne.s32.totalorder %s268, %s269
      %p281 = scmp.eq.s32.totalorder %s44, 1
      %p282 = por %p280, %p281
      %p284 = scmp.ne.s32.totalorder %s269, %s283
      %p285 = scmp.eq.s32.totalorder %s44, 0
      %p286 = por %p284, %p285
      %s288 = sadd.s32 %s287, 1
      %p291 = scmp.eq.s32.totalorder %s38, 1
      %p292 = scmp.ne.s32.totalorder %s287, %s289
      %p293 = scmp.eq.s32.totalorder %s38, 0
      %p294 = por %p292, %p293
      %p295 = scmp.ne.s32.totalorder %s287, %s289
      %p296 = scmp.eq.s32.totalorder %s43, 1
      %p297 = por %p295, %p296
      %p298 = scmp.ne.s32.totalorder %s289, %s290
      %p299 = scmp.eq.s32.totalorder %s43, 0
      %p300 = por %p298, %p299
      %p301 = scmp.ne.s32.totalorder %s289, %s290
      %p302 = scmp.eq.s32.totalorder %s44, 1
      %p303 = por %p301, %p302
      %p305 = scmp.ne.s32.totalorder %s290, %s304
      %p306 = scmp.eq.s32.totalorder %s44, 0
      %p307 = por %p305, %p306
      %s309 = sadd.s32 %s308, 1
      %p312 = scmp.eq.s32.totalorder %s38, 1
      %p313 = scmp.ne.s32.totalorder %s308, %s310
      %p314 = scmp.eq.s32.totalorder %s38, 0
      %p315 = por %p313, %p314
      %p316 = scmp.ne.s32.totalorder %s308, %s310
      %p317 = scmp.eq.s32.totalorder %s43, 1
      %p318 = por %p316, %p317
      %p319 = scmp.ne.s32.totalorder %s310, %s311
      %p320 = scmp.eq.s32.totalorder %s43, 0
      %p321 = por %p319, %p320
      %p322 = scmp.ne.s32.totalorder %s310, %s311
      %p323 = scmp.eq.s32.totalorder %s44, 1
      %p324 = por %p322, %p323
      %p326 = scmp.ne.s32.totalorder %s311, %s325
      %p327 = scmp.eq.s32.totalorder %s44, 0
      %p328 = por %p326, %p327
      %s330 = sadd.s32 %s329, 1
      %p333 = scmp.eq.s32.totalorder %s38, 1
      %p334 = scmp.ne.s32.totalorder %s329, %s331
      %p335 = scmp.eq.s32.totalorder %s38, 0
      %p336 = por %p334, %p335
      %p337 = scmp.ne.s32.totalorder %s329, %s331
      %p338 = scmp.eq.s32.totalorder %s43, 1
      %p339 = por %p337, %p338
      %p340 = scmp.ne.s32.totalorder %s331, %s332
      %p341 = scmp.eq.s32.totalorder %s43, 0
      %p342 = por %p340, %p341
      %p343 = scmp.ne.s32.totalorder %s331, %s332
      %p344 = scmp.eq.s32.totalorder %s44, 1
      %p345 = por %p343, %p344
      %p347 = scmp.ne.s32.totalorder %s332, %s346
      %p348 = scmp.eq.s32.totalorder %s44, 0
      %p349 = por %p347, %p348
      %s351 = sadd.s32 %s350, 1
      %p354 = scmp.eq.s32.totalorder %s38, 1
      %p355 = scmp.ne.s32.totalorder %s350, %s352
      %p356 = scmp.eq.s32.totalorder %s38, 0
      %p357 = por %p355, %p356
      %p358 = scmp.ne.s32.totalorder %s350, %s352
      %p359 = scmp.eq.s32.totalorder %s43, 1
      %p360 = por %p358, %p359
      %p361 = scmp.ne.s32.totalorder %s352, %s353
      %p362 = scmp.eq.s32.totalorder %s43, 0
      %p363 = por %p361, %p362
      %p364 = scmp.ne.s32.totalorder %s352, %s353
      %p365 = scmp.eq.s32.totalorder %s44, 1
      %p366 = por %p364, %p365
      %p368 = scmp.ne.s32.totalorder %s353, %s367
      %p369 = scmp.eq.s32.totalorder %s44, 0
      %p370 = por %p368, %p369
      %s372 = sadd.s32 %s371, 1
      %p375 = scmp.eq.s32.totalorder %s38, 1
      %p376 = scmp.ne.s32.totalorder %s371, %s373
      %p377 = scmp.eq.s32.totalorder %s38, 0
      %p378 = por %p376, %p377
      %p379 = scmp.ne.s32.totalorder %s371, %s373
      %p380 = scmp.eq.s32.totalorder %s43, 1
      %p381 = por %p379, %p380
      %p382 = scmp.ne.s32.totalorder %s373, %s374
      %p383 = scmp.eq.s32.totalorder %s43, 0
      %p384 = por %p382, %p383
      %p385 = scmp.ne.s32.totalorder %s373, %s374
      %p386 = scmp.eq.s32.totalorder %s44, 1
      %p387 = por %p385, %p386
      %p389 = scmp.ne.s32.totalorder %s374, %s388
      %p390 = scmp.eq.s32.totalorder %s44, 0
      %p391 = por %p389, %p390
      %s393 = sadd.s32 %s392, 1
      %p396 = scmp.eq.s32.totalorder %s38, 1
      %p397 = scmp.ne.s32.totalorder %s392, %s394
      %p398 = scmp.eq.s32.totalorder %s38, 0
      %p399 = por %p397, %p398
      %p400 = scmp.ne.s32.totalorder %s392, %s394
      %p401 = scmp.eq.s32.totalorder %s43, 1
      %p402 = por %p400, %p401
      %p403 = scmp.ne.s32.totalorder %s394, %s395
      %p404 = scmp.eq.s32.totalorder %s43, 0
      %p405 = por %p403, %p404
      %p406 = scmp.ne.s32.totalorder %s394, %s395
      %p407 = scmp.eq.s32.totalorder %s44, 1
      %p408 = por %p406, %p407
      %p410 = scmp.ne.s32.totalorder %s395, %s409
      %p411 = scmp.eq.s32.totalorder %s44, 0
      %p412 = por %p410, %p411
      %s414 = sadd.s32 %s413, 1
      %p417 = scmp.eq.s32.totalorder %s38, 1
      %p418 = scmp.ne.s32.totalorder %s413, %s415
      %p419 = scmp.eq.s32.totalorder %s38, 0
      %p420 = por %p418, %p419
      %p421 = scmp.ne.s32.totalorder %s413, %s415
      %p422 = scmp.eq.s32.totalorder %s43, 1
      %p423 = por %p421, %p422
      %p424 = scmp.ne.s32.totalorder %s415, %s416
      %p425 = scmp.eq.s32.totalorder %s43, 0
      %p426 = por %p424, %p425
      %p427 = scmp.ne.s32.totalorder %s415, %s416
      %p428 = scmp.eq.s32.totalorder %s44, 1
      %p429 = por %p427, %p428
      %p431 = scmp.ne.s32.totalorder %s416, %s430
      %p432 = scmp.eq.s32.totalorder %s44, 0
      %p433 = por %p431, %p432
      %s434 = ssub.s32 %s38, %s45
      %p435 = scmp.eq.s32.totalorder %s434, 0
      %s437 = sadd.s32 %s436, 1
      %s438 = scalar_select %p435, %s436, %s437
      %p441 = pneg %p435
      %p442 = scmp.eq.s32.totalorder %s38, 1
      %p443 = por %p441, %p442
      %p444 = scmp.ne.s32.totalorder %s436, %s439
      %p445 = scmp.eq.s32.totalorder %s38, 0
      %p446 = por %p444, %p445
      %p447 = scmp.ne.s32.totalorder %s436, %s439
      %p448 = scmp.eq.s32.totalorder %s43, 1
      %p449 = por %p447, %p448
      %p450 = scmp.ne.s32.totalorder %s439, %s440
      %p451 = scmp.eq.s32.totalorder %s43, 0
      %p452 = por %p450, %p451
      %p453 = scmp.ne.s32.totalorder %s439, %s440
      %p454 = scmp.eq.s32.totalorder %s44, 1
      %p455 = por %p453, %p454
      %p457 = scmp.ne.s32.totalorder %s440, %s456
      %p458 = scmp.eq.s32.totalorder %s44, 0
      %p459 = por %p457, %p458
      %p460 = scmp.le.s32.totalorder 1, %s38
      %p461 = scmp.lt.s32.totalorder %s38, 3
      %p462 = pnand %p460, %p461
      %p463 = pneg %p462
      // Predicated region
      $region9: #{tpu_custom_call.1} parent=5 // pred_check
        _
      $region10: #{tpu_custom_call.1} parent=5 // pred_check_branch
        %465 = sbr.rel (%p462) target = $region12
      $region11: #{tpu_custom_call.1} parent=5 // pred_region
        %s466 = ssub.s32 %s38, 1
        // Predicated region
        $region13: #{tpu_custom_call.1} parent=11 // pred_check
          %p467 = pneg %p111
        $region14: #{tpu_custom_call.1} parent=11 // pred_check_branch
          %469 = sbr.rel (%p467) target = $region16
        $region15: #{tpu_custom_call.1} parent=11 // pred_region
          %471 = vsyncadd [#allocation6], 0
          %s473 = sshll.u32 %s2, 4
          %s474 = int_to_ptr.hbm [resolvable:$true] %s473
          %s475 = sshll.u32 [#allocation7], 4
          %s476 = int_to_ptr.vmem [resolvable:$true] %s475
          %478 = dma.hbm_to_vmem [thread:$0]  %s474, 32, %s476, [#allocation6]
        $region16: #{tpu_custom_call.1} parent=11 // pred_fallthru
          _
        // Predicated region
        $region17: #{tpu_custom_call.1} parent=11 // pred_check
          %p479 = pneg %p132
        $region18: #{tpu_custom_call.1} parent=11 // pred_check_branch
          %481 = sbr.rel (%p479) target = $region20
        $region19: #{tpu_custom_call.1} parent=11 // pred_region
          _
        $region20: #{tpu_custom_call.1} parent=11 // pred_fallthru
          _
        // Predicated region
        $region21: #{tpu_custom_call.1} parent=11 // pred_check
          %p482 = pneg %p153
        $region22: #{tpu_custom_call.1} parent=11 // pred_check_branch
          %484 = sbr.rel (%p482) target = $region24
        $region23: #{tpu_custom_call.1} parent=11 // pred_region
          %486 = vsyncadd [#allocation9], 0
          %s487 = sshll.u32 %s4, 4
          %s488 = int_to_ptr.hbm [resolvable:$true] %s487
          %s489 = sshll.u32 [#allocation8], 4
          %s490 = int_to_ptr.vmem [resolvable:$true] %s489
          %495 = dma.hbm_to_vmem [thread:$0]  %s488, 4096, %s490, [#allocation9], 64, 64, 4
        $region24: #{tpu_custom_call.1} parent=11 // pred_fallthru
          _
        // Predicated region
        $region25: #{tpu_custom_call.1} parent=11 // pred_check
          %p496 = pneg %p174
        $region26: #{tpu_custom_call.1} parent=11 // pred_check_branch
          %498 = sbr.rel (%p496) target = $region28
        $region27: #{tpu_custom_call.1} parent=11 // pred_region
          %500 = vsyncadd [#allocation9], 0
          %s501 = sshll.u32 %s5, 4
          %s502 = int_to_ptr.hbm [resolvable:$true] %s501
          %s503 = sshll.u32 [#allocation10], 4
          %s504 = int_to_ptr.vmem [resolvable:$true] %s503
          %509 = dma.hbm_to_vmem [thread:$0]  %s502, 4096, %s504, [#allocation9], 64, 64, 4
        $region28: #{tpu_custom_call.1} parent=11 // pred_fallthru
          _
        // Predicated region
        $region29: #{tpu_custom_call.1} parent=11 // pred_check
          %p510 = pneg %p195
        $region30: #{tpu_custom_call.1} parent=11 // pred_check_branch
          %512 = sbr.rel (%p510) target = $region32
        $region31: #{tpu_custom_call.1} parent=11 // pred_region
          %514 = vsyncadd [#allocation12], 0
          %s515 = sshll.u32 %s6, 4
          %s516 = int_to_ptr.hbm [resolvable:$true] %s515
          %s517 = sshll.u32 [#allocation11], 4
          %s518 = int_to_ptr.vmem [resolvable:$true] %s517
          %523 = dma.hbm_to_vmem [thread:$0]  %s516, 4096, %s518, [#allocation12], 64, 64, 4
        $region32: #{tpu_custom_call.1} parent=11 // pred_fallthru
          _
        // Predicated region
        $region33: #{tpu_custom_call.1} parent=11 // pred_check
          %p524 = pneg %p216
        $region34: #{tpu_custom_call.1} parent=11 // pred_check_branch
          %526 = sbr.rel (%p524) target = $region36
        $region35: #{tpu_custom_call.1} parent=11 // pred_region
          _
        $region36: #{tpu_custom_call.1} parent=11 // pred_fallthru
          _
        // Predicated region
        $region37: #{tpu_custom_call.1} parent=11 // pred_check
          %p527 = pneg %p237
        $region38: #{tpu_custom_call.1} parent=11 // pred_check_branch
          %529 = sbr.rel (%p527) target = $region40
        $region39: #{tpu_custom_call.1} parent=11 // pred_region
          _
        $region40: #{tpu_custom_call.1} parent=11 // pred_fallthru
          _
        // Predicated region
        $region41: #{tpu_custom_call.1} parent=11 // pred_check
          %p530 = pneg %p258
        $region42: #{tpu_custom_call.1} parent=11 // pred_check_branch
          %532 = sbr.rel (%p530) target = $region44
        $region43: #{tpu_custom_call.1} parent=11 // pred_region
          %534 = vsyncadd [#allocation12], 0
          %s535 = sshll.u32 %s9, 4
          %s536 = int_to_ptr.hbm [resolvable:$true] %s535
          %s537 = sshll.u32 [#allocation13], 4
          %s538 = int_to_ptr.vmem [resolvable:$true] %s537
          %543 = dma.hbm_to_vmem [thread:$0]  %s536, 32, %s538, [#allocation12], 16, 16, 1
        $region44: #{tpu_custom_call.1} parent=11 // pred_fallthru
          _
        // Predicated region
        $region45: #{tpu_custom_call.1} parent=11 // pred_check
          %p544 = pneg %p279
        $region46: #{tpu_custom_call.1} parent=11 // pred_check_branch
          %546 = sbr.rel (%p544) target = $region48
        $region47: #{tpu_custom_call.1} parent=11 // pred_region
          %548 = vsyncadd [#allocation15], 0
          %s549 = sshll.u32 %s10, 4
          %s550 = int_to_ptr.hbm [resolvable:$true] %s549
          %s551 = sshll.u32 [#allocation14], 4
          %s552 = int_to_ptr.vmem [resolvable:$true] %s551
          %557 = dma.hbm_to_vmem [thread:$0]  %s550, 4096, %s552, [#allocation15], 128, 128, 8
        $region48: #{tpu_custom_call.1} parent=11 // pred_fallthru
          _
        // Predicated region
        $region49: #{tpu_custom_call.1} parent=11 // pred_check
          %p558 = pneg %p300
        $region50: #{tpu_custom_call.1} parent=11 // pred_check_branch
          %560 = sbr.rel (%p558) target = $region52
        $region51: #{tpu_custom_call.1} parent=11 // pred_region
          %562 = vsyncadd [#allocation15], 0
          %s564 = sshll.u32 %s11, 4
          %s565 = int_to_ptr.hbm [resolvable:$true] %s564
          %s566 = sshll.u32 [#allocation16], 4
          %s567 = int_to_ptr.vmem [resolvable:$true] %s566
          %569 = dma.hbm_to_vmem [thread:$0]  %s565, 32, %s567, [#allocation15]
        $region52: #{tpu_custom_call.1} parent=11 // pred_fallthru
          _
        // Predicated region
        $region53: #{tpu_custom_call.1} parent=11 // pred_check
          %p570 = pneg %p321
        $region54: #{tpu_custom_call.1} parent=11 // pred_check_branch
          %572 = sbr.rel (%p570) target = $region56
        $region55: #{tpu_custom_call.1} parent=11 // pred_region
          %574 = vsyncadd [#allocation18], 0
          %s576 = sshll.u32 %s12, 4
          %s577 = int_to_ptr.hbm [resolvable:$true] %s576
          %s578 = sshll.u32 [#allocation17], 4
          %s579 = int_to_ptr.vmem [resolvable:$true] %s578
          %581 = dma.hbm_to_vmem [thread:$0]  %s577, 32, %s579, [#allocation18]
        $region56: #{tpu_custom_call.1} parent=11 // pred_fallthru
          _
        // Predicated region
        $region57: #{tpu_custom_call.1} parent=11 // pred_check
          %p582 = pneg %p342
        $region58: #{tpu_custom_call.1} parent=11 // pred_check_branch
          %584 = sbr.rel (%p582) target = $region60
        $region59: #{tpu_custom_call.1} parent=11 // pred_region
          %586 = vsyncadd [#allocation18], 0
          %s588 = sshll.u32 %s13, 4
          %s589 = int_to_ptr.hbm [resolvable:$true] %s588
          %s590 = sshll.u32 [#allocation19], 4
          %s591 = int_to_ptr.vmem [resolvable:$true] %s590
          %593 = dma.hbm_to_vmem [thread:$0]  %s589, 32, %s591, [#allocation18]
        $region60: #{tpu_custom_call.1} parent=11 // pred_fallthru
          _
        // Predicated region
        $region61: #{tpu_custom_call.1} parent=11 // pred_check
          %p594 = pneg %p363
        $region62: #{tpu_custom_call.1} parent=11 // pred_check_branch
          %596 = sbr.rel (%p594) target = $region64
        $region63: #{tpu_custom_call.1} parent=11 // pred_region
          %598 = vsyncadd [#allocation21], 0
          %s599 = sshll.u32 %s14, 4
          %s600 = int_to_ptr.hbm [resolvable:$true] %s599
          %s601 = sshll.u32 [#allocation20], 4
          %s602 = int_to_ptr.vmem [resolvable:$true] %s601
          %607 = dma.hbm_to_vmem [thread:$0]  %s600, 16384, %s602, [#allocation21], 512, 512, 32
        $region64: #{tpu_custom_call.1} parent=11 // pred_fallthru
          _
        // Predicated region
        $region65: #{tpu_custom_call.1} parent=11 // pred_check
          %p608 = pneg %p384
        $region66: #{tpu_custom_call.1} parent=11 // pred_check_branch
          %610 = sbr.rel (%p608) target = $region68
        $region67: #{tpu_custom_call.1} parent=11 // pred_region
          _
        $region68: #{tpu_custom_call.1} parent=11 // pred_fallthru
          _
        // Predicated region
        $region69: #{tpu_custom_call.1} parent=11 // pred_check
          %p611 = pneg %p405
        $region70: #{tpu_custom_call.1} parent=11 // pred_check_branch
          %613 = sbr.rel (%p611) target = $region72
        $region71: #{tpu_custom_call.1} parent=11 // pred_region
          %615 = vsyncadd [#allocation21], 0
          %s616 = sshll.u32 %s16, 4
          %s617 = int_to_ptr.hbm [resolvable:$true] %s616
          %s618 = sshll.u32 [#allocation22], 4
          %s619 = int_to_ptr.vmem [resolvable:$true] %s618
          %624 = dma.hbm_to_vmem [thread:$0]  %s617, 16384, %s619, [#allocation21], 128, 128, 8
        $region72: #{tpu_custom_call.1} parent=11 // pred_fallthru
          _
        // Predicated region
        $region73: #{tpu_custom_call.1} parent=11 // pred_check
          %p625 = pneg %p426
        $region74: #{tpu_custom_call.1} parent=11 // pred_check_branch
          %627 = sbr.rel (%p625) target = $region76
        $region75: #{tpu_custom_call.1} parent=11 // pred_region
          _
        $region76: #{tpu_custom_call.1} parent=11 // pred_fallthru
          _
      $region12: #{tpu_custom_call.1} parent=5 // pred_fallthru
        _
      %p628 = scmp.lt.s32.totalorder %s38, 2
      // Predicated region
      $region77: #{tpu_custom_call.1} parent=5 // pred_check
        %p629 = pneg %p628
      $region78: #{tpu_custom_call.1} parent=5 // pred_check_branch
        %631 = sbr.rel (%p629) target = $region80
      $region79: #{tpu_custom_call.1} parent=5 // pred_region
        // Predicated region
        $region81: #{tpu_custom_call.1} parent=79 // pred_check
          %p632 = pneg %p58
        $region82: #{tpu_custom_call.1} parent=79 // pred_check_branch
          %634 = sbr.rel (%p632) target = $region84
        $region83: #{tpu_custom_call.1} parent=79 // pred_region
          %s635 = sand.u32 %s48, 1
          %s636 = scalar_lea.sflag [#allocation3], %s635
          %s637 = sand.u32 %s48, 1
          %s638 = smul.addr %s637, 16
          %s639 = scalar_lea.vmem [#allocation2], %s638
          %641 = vsyncadd %s636, 0
          %s642 = smul.addr %s38, 2
          %s643 = smul.addr %s642, 8
          %s644 = scalar_lea.hbm %s0, %s643
          %s646 = sshll.u32 %s644, 4
          %s647 = int_to_ptr.hbm [resolvable:$true] %s646
          %s648 = sshll.u32 %s639, 4
          %s649 = int_to_ptr.vmem [resolvable:$true] %s648
          %651 = dma.hbm_to_vmem [thread:$0]  %s647, 256, %s649, %s636
        $region84: #{tpu_custom_call.1} parent=79 // pred_fallthru
          _
        // Predicated region
        $region85: #{tpu_custom_call.1} parent=79 // pred_check
          %p652 = pneg %p84
        $region86: #{tpu_custom_call.1} parent=79 // pred_check_branch
          %654 = sbr.rel (%p652) target = $region88
        $region87: #{tpu_custom_call.1} parent=79 // pred_region
          %s655 = sand.u32 %s38, 1
          %s656 = scalar_lea.sflag [#allocation6], %s655
          %s657 = sand.u32 %s74, 1
          %s658 = scalar_lea.vmem [#allocation5], %s657
          %660 = vsyncadd %s656, 0
          %s661 = scalar_lea.hbm %s1, %s38
          %s663 = sshll.u32 %s661, 4
          %s664 = int_to_ptr.hbm [resolvable:$true] %s663
          %s665 = sshll.u32 %s658, 4
          %s666 = int_to_ptr.vmem [resolvable:$true] %s665
          %668 = dma.hbm_to_vmem [thread:$0]  %s664, 16, %s666, %s656
        $region88: #{tpu_custom_call.1} parent=79 // pred_fallthru
          _
      $region80: #{tpu_custom_call.1} parent=5 // pred_fallthru
        _
      %p669 = scmp.le.s32.totalorder 1, %s38
      %p670 = scmp.lt.s32.totalorder %s38, 3
      %p671 = pnand %p669, %p670
      %p672 = pneg %p671
      // Predicated region
      $region89: #{tpu_custom_call.1} parent=5 // pred_check
        _
      $region90: #{tpu_custom_call.1} parent=5 // pred_check_branch
        %674 = sbr.rel (%p671) target = $region92
      $region91: #{tpu_custom_call.1} parent=5 // pred_region
        %s675 = ssub.s32 %s38, 1
        %s676 = sand.u32 %s51, 1
        %s677 = scalar_lea.sflag [#allocation3], %s676
        %s678 = sand.u32 %s51, 1
        %s679 = smul.addr %s678, 16
        %s680 = scalar_lea.vmem [#allocation2], %s679
        // Predicated region
        $region93: #{tpu_custom_call.1} parent=91 // pred_check
          %p681 = pneg %p64
        $region94: #{tpu_custom_call.1} parent=91 // pred_check_branch
          %683 = sbr.rel (%p681) target = $region96
        $region95: #{tpu_custom_call.1} parent=91 // pred_region
          %685 = dma.done %s677, 256
        $region96: #{tpu_custom_call.1} parent=91 // pred_fallthru
          _
        %s686 = sand.u32 %s43, 1
        %s687 = scalar_lea.sflag [#allocation6], %s686
        %s688 = sand.u32 %s77, 1
        %s689 = scalar_lea.vmem [#allocation5], %s688
        // Predicated region
        $region97: #{tpu_custom_call.1} parent=91 // pred_check
          %p690 = pneg %p90
        $region98: #{tpu_custom_call.1} parent=91 // pred_check_branch
          %692 = sbr.rel (%p690) target = $region100
        $region99: #{tpu_custom_call.1} parent=91 // pred_region
          %694 = dma.done %s687, 16
        $region100: #{tpu_custom_call.1} parent=91 // pred_fallthru
          _
        // Predicated region
        $region101: #{tpu_custom_call.1} parent=91 // pred_check
          %p695 = pneg %p111
        $region102: #{tpu_custom_call.1} parent=91 // pred_check_branch
          %697 = sbr.rel (%p695) target = $region104
        $region103: #{tpu_custom_call.1} parent=91 // pred_region
          %699 = dma.done [#allocation6], 32
        $region104: #{tpu_custom_call.1} parent=91 // pred_fallthru
          _
        // Predicated region
        $region105: #{tpu_custom_call.1} parent=91 // pred_check
          %p700 = pneg %p153
        $region106: #{tpu_custom_call.1} parent=91 // pred_check_branch
          %702 = sbr.rel (%p700) target = $region108
        $region107: #{tpu_custom_call.1} parent=91 // pred_region
          %704 = dma.done [#allocation9], 4096
        $region108: #{tpu_custom_call.1} parent=91 // pred_fallthru
          _
        // Predicated region
        $region109: #{tpu_custom_call.1} parent=91 // pred_check
          %p705 = pneg %p174
        $region110: #{tpu_custom_call.1} parent=91 // pred_check_branch
          %707 = sbr.rel (%p705) target = $region112
        $region111: #{tpu_custom_call.1} parent=91 // pred_region
          %709 = dma.done [#allocation9], 4096
        $region112: #{tpu_custom_call.1} parent=91 // pred_fallthru
          _
        // Predicated region
        $region113: #{tpu_custom_call.1} parent=91 // pred_check
          %p710 = pneg %p195
        $region114: #{tpu_custom_call.1} parent=91 // pred_check_branch
          %712 = sbr.rel (%p710) target = $region116
        $region115: #{tpu_custom_call.1} parent=91 // pred_region
          %714 = dma.done [#allocation12], 4096
        $region116: #{tpu_custom_call.1} parent=91 // pred_fallthru
          _
        // Predicated region
        $region117: #{tpu_custom_call.1} parent=91 // pred_check
          %p715 = pneg %p258
        $region118: #{tpu_custom_call.1} parent=91 // pred_check_branch
          %717 = sbr.rel (%p715) target = $region120
        $region119: #{tpu_custom_call.1} parent=91 // pred_region
          %719 = dma.done [#allocation12], 32
        $region120: #{tpu_custom_call.1} parent=91 // pred_fallthru
          _
        // Predicated region
        $region121: #{tpu_custom_call.1} parent=91 // pred_check
          %p720 = pneg %p279
        $region122: #{tpu_custom_call.1} parent=91 // pred_check_branch
          %722 = sbr.rel (%p720) target = $region124
        $region123: #{tpu_custom_call.1} parent=91 // pred_region
          %724 = dma.done [#allocation15], 4096
        $region124: #{tpu_custom_call.1} parent=91 // pred_fallthru
          _
        // Predicated region
        $region125: #{tpu_custom_call.1} parent=91 // pred_check
          %p725 = pneg %p300
        $region126: #{tpu_custom_call.1} parent=91 // pred_check_branch
          %727 = sbr.rel (%p725) target = $region128
        $region127: #{tpu_custom_call.1} parent=91 // pred_region
          %729 = dma.done [#allocation15], 32
        $region128: #{tpu_custom_call.1} parent=91 // pred_fallthru
          _
        // Predicated region
        $region129: #{tpu_custom_call.1} parent=91 // pred_check
          %p730 = pneg %p321
        $region130: #{tpu_custom_call.1} parent=91 // pred_check_branch
          %732 = sbr.rel (%p730) target = $region132
        $region131: #{tpu_custom_call.1} parent=91 // pred_region
          %734 = dma.done [#allocation18], 32
        $region132: #{tpu_custom_call.1} parent=91 // pred_fallthru
          _
        // Predicated region
        $region133: #{tpu_custom_call.1} parent=91 // pred_check
          %p735 = pneg %p342
        $region134: #{tpu_custom_call.1} parent=91 // pred_check_branch
          %737 = sbr.rel (%p735) target = $region136
        $region135: #{tpu_custom_call.1} parent=91 // pred_region
          %739 = dma.done [#allocation18], 32
        $region136: #{tpu_custom_call.1} parent=91 // pred_fallthru
          _
        // Predicated region
        $region137: #{tpu_custom_call.1} parent=91 // pred_check
          %p740 = pneg %p363
        $region138: #{tpu_custom_call.1} parent=91 // pred_check_branch
          %742 = sbr.rel (%p740) target = $region140
        $region139: #{tpu_custom_call.1} parent=91 // pred_region
          %744 = dma.done [#allocation21], 16384
        $region140: #{tpu_custom_call.1} parent=91 // pred_fallthru
          _
        // Predicated region
        $region141: #{tpu_custom_call.1} parent=91 // pred_check
          %p745 = pneg %p405
        $region142: #{tpu_custom_call.1} parent=91 // pred_check_branch
          %747 = sbr.rel (%p745) target = $region144
        $region143: #{tpu_custom_call.1} parent=91 // pred_region
          %749 = dma.done [#allocation21], 16384
        $region144: #{tpu_custom_call.1} parent=91 // pred_fallthru
          _
        %s750 = sand.u32 %s51, 1
        %s751 = scalar_lea.sflag [#allocation3], %s750
        %s752 = sand.u32 %s51, 1
        %s753 = smul.addr %s752, 16
        %s754 = scalar_lea.vmem [#allocation2], %s753
        %p755 = pneg %p64
        %p756 = pneg %p61
        %s757 = sand.u32 %s43, 1
        %s758 = scalar_lea.sflag [#allocation6], %s757
        %s759 = sand.u32 %s77, 1
        %s760 = scalar_lea.vmem [#allocation5], %s759
        %p761 = pneg %p90
        %p762 = pneg %p87
        %p763 = pneg %p111
        %p764 = pneg %p108
        %p765 = pneg %p132
        %p766 = pneg %p129
        %p767 = pneg %p153
        %p768 = pneg %p150
        %p769 = pneg %p174
        %p770 = pneg %p171
        %p771 = pneg %p195
        %p772 = pneg %p192
        %p773 = pneg %p216
        %p774 = pneg %p213
        %p775 = pneg %p237
        %p776 = pneg %p234
        %p777 = pneg %p258
        %p778 = pneg %p255
        %p779 = pneg %p279
        %p780 = pneg %p276
        %p781 = pneg %p300
        %p782 = pneg %p297
        %p783 = pneg %p321
        %p784 = pneg %p318
        %p785 = pneg %p342
        %p786 = pneg %p339
        %p787 = pneg %p363
        %p788 = pneg %p360
        %p789 = pneg %p384
        %p790 = pneg %p381
        %p791 = pneg %p405
        %p792 = pneg %p402
        %p793 = pneg %p426
        %p794 = pneg %p423
        %p795 = pneg %p452
        %p796 = pneg %p449
        %s797 = sand.u32 %s439, 1
        %s798 = scalar_lea.sflag [#allocation4], %s797
        %s799 = sand.u32 %s439, 1
        %s800 = smul.addr %s799, 16
        %s801 = scalar_lea.vmem [#allocation23], %s800
        %v803 = vld [vmem:[%s680] sm:$0xff]
        %v804 = vld [vmem:[%s680 + $0x8] sm:$0xff]
        %v805 = vld [vmem:[%s689] sm:$0x1]
        %vm806 = vcmp.gt.f32.partialorder %v805, 0.5
        %v807 = vld [vmem:[#allocation7] sm:$0x3]
        %v808 = vld [vmem:[%s3] sm:$0x3]
        %v809 = vadd.f32 %v803, %v804
        %810 = vadd.xlane.f32.xlu0 %v809
        %v811 = vpop.xlane.xlu0 %810
        %v812 = vrcp.pop 256.0
        %v813 = vmul.f32 256.0, %v812
        %v814 = vsub.f32 1.0, %v813
        %v815 = vmul.f32 %v812, %v814
        %v816 = vadd.f32 %v812, %v815
        %vm817 = vweird.f32 %v812
        %v818 = vsel %vm817, %v812, %v816
        %v819 = vmul.f32 %v811, %v818
        %v820 = vsub.f32 %v803, %v819
        %v821 = vsub.f32 %v804, %v819
        %v822 = vmul.f32 %v820, %v820
        %v823 = vmul.f32 %v821, %v821
        %v824 = vadd.f32 %v822, %v823
        %825 = vadd.xlane.f32.xlu0 %v824
        %v826 = vpop.xlane.xlu0 %825
        %v827 = vmul.f32 %v826, %v818
        %v828 = vadd.f32 %v827, 1e-05
        %v829 = vrsqrt.pop %v828
        %v830 = vmul.f32 %v829, %v828
        %v831 = vmul.f32 %v830, %v829
        %v832 = vmul.f32 0.5, %v831
        %v833 = vsub.f32 1.5, %v832
        %v834 = vmul.f32 %v829, %v833
        %vm835 = vweird.f32 %v828
        %vm836 = vweird.f32 %v829
        %vm837 = vmor %vm835, %vm836
        %v838 = vsel %vm837, %v829, %v834
        %v839 = vmul.f32 %v820, %v838
        %v840 = vmul.f32 %v821, %v838
        %v842 = vperm.slane %v807, 0
        %v843 = vperm.slane %v807, 1
        %v846 = vmul.f32 %v839, %v842
        %v847 = vmul.f32 %v840, %v843
        %v849 = vperm.slane %v808, 0
        %v850 = vperm.slane %v808, 1
        %v853 = vadd.f32 %v846, %v849
        %v854 = vadd.f32 %v847, %v850
        %v855 = vpack.c.bf16 %v853, %v853
        %v856 = vpack.c.bf16 %v854, %v854
        %v857 = vld [vmem:[#allocation8] sm:$0xf]
        %v858 = vld [vmem:[#allocation8 + $0x4] sm:$0xf]
        %v859 = vld [vmem:[#allocation8 + $0x8] sm:$0xf]
        %v860 = vld [vmem:[#allocation8 + $0xc] sm:$0xf]
        %v861 = vld [vmem:[#allocation8 + $0x10] sm:$0xf]
        %v862 = vld [vmem:[#allocation8 + $0x14] sm:$0xf]
        %v863 = vld [vmem:[#allocation8 + $0x18] sm:$0xf]
        %v864 = vld [vmem:[#allocation8 + $0x1c] sm:$0xf]
        %v865 = vld [vmem:[#allocation8 + $0x20] sm:$0xf]
        %v866 = vld [vmem:[#allocation8 + $0x24] sm:$0xf]
        %v867 = vld [vmem:[#allocation8 + $0x28] sm:$0xf]
        %v868 = vld [vmem:[#allocation8 + $0x2c] sm:$0xf]
        %v869 = vld [vmem:[#allocation8 + $0x30] sm:$0xf]
        %v870 = vld [vmem:[#allocation8 + $0x34] sm:$0xf]
        %v871 = vld [vmem:[#allocation8 + $0x38] sm:$0xf]
        %v872 = vld [vmem:[#allocation8 + $0x3c] sm:$0xf]
        %v873 = vld [vmem:[#allocation8 + $0x40] sm:$0xf]
        %v874 = vld [vmem:[#allocation8 + $0x44] sm:$0xf]
        %v875 = vld [vmem:[#allocation8 + $0x48] sm:$0xf]
        %v876 = vld [vmem:[#allocation8 + $0x4c] sm:$0xf]
        %v877 = vld [vmem:[#allocation8 + $0x50] sm:$0xf]
        %v878 = vld [vmem:[#allocation8 + $0x54] sm:$0xf]
        %v879 = vld [vmem:[#allocation8 + $0x58] sm:$0xf]
        %v880 = vld [vmem:[#allocation8 + $0x5c] sm:$0xf]
        %v881 = vld [vmem:[#allocation8 + $0x60] sm:$0xf]
        %v882 = vld [vmem:[#allocation8 + $0x64] sm:$0xf]
        %v883 = vld [vmem:[#allocation8 + $0x68] sm:$0xf]
        %v884 = vld [vmem:[#allocation8 + $0x6c] sm:$0xf]
        %v885 = vld [vmem:[#allocation8 + $0x70] sm:$0xf]
        %v886 = vld [vmem:[#allocation8 + $0x74] sm:$0xf]
        %v887 = vld [vmem:[#allocation8 + $0x78] sm:$0xf]
        %v888 = vld [vmem:[#allocation8 + $0x7c] sm:$0xf]
        %v889 = vld [vmem:[%s7] sm:$0x1]
        %v891 = vperm.slane %v889, 0
        %v925 = vunpack.c.l.b16 %v857
        %v926 = vunpack.c.l.b16 %v858
        %v927 = vunpack.c.l.b16 %v859
        %v928 = vunpack.c.l.b16 %v860
        %v929 = vunpack.c.l.b16 %v861
        %v930 = vunpack.c.l.b16 %v862
        %v931 = vunpack.c.l.b16 %v863
        %v932 = vunpack.c.l.b16 %v864
        %v933 = vunpack.c.l.b16 %v865
        %v934 = vunpack.c.l.b16 %v866
        %v935 = vunpack.c.l.b16 %v867
        %v936 = vunpack.c.l.b16 %v868
        %v937 = vunpack.c.l.b16 %v869
        %v938 = vunpack.c.l.b16 %v870
        %v939 = vunpack.c.l.b16 %v871
        %v940 = vunpack.c.l.b16 %v872
        %v941 = vunpack.c.l.b16 %v873
        %v942 = vunpack.c.l.b16 %v874
        %v943 = vunpack.c.l.b16 %v875
        %v944 = vunpack.c.l.b16 %v876
        %v945 = vunpack.c.l.b16 %v877
        %v946 = vunpack.c.l.b16 %v878
        %v947 = vunpack.c.l.b16 %v879
        %v948 = vunpack.c.l.b16 %v880
        %v949 = vunpack.c.l.b16 %v881
        %v950 = vunpack.c.l.b16 %v882
        %v951 = vunpack.c.l.b16 %v883
        %v952 = vunpack.c.l.b16 %v884
        %v953 = vunpack.c.l.b16 %v885
        %v954 = vunpack.c.l.b16 %v886
        %v955 = vunpack.c.l.b16 %v887
        %v956 = vunpack.c.l.b16 %v888
        %v957 = vpack.c.b16 %v926, %v925
        %v958 = vpack.c.b16 %v928, %v927
        %v959 = vpack.c.b16 %v930, %v929
        %v960 = vpack.c.b16 %v932, %v931
        %v961 = vpack.c.b16 %v934, %v933
        %v962 = vpack.c.b16 %v936, %v935
        %v963 = vpack.c.b16 %v938, %v937
        %v964 = vpack.c.b16 %v940, %v939
        %v965 = vpack.c.b16 %v942, %v941
        %v966 = vpack.c.b16 %v944, %v943
        %v967 = vpack.c.b16 %v946, %v945
        %v968 = vpack.c.b16 %v948, %v947
        %v969 = vpack.c.b16 %v950, %v949
        %v970 = vpack.c.b16 %v952, %v951
        %v971 = vpack.c.b16 %v954, %v953
        %v972 = vpack.c.b16 %v956, %v955
        %989 = vmatpush.bf16.msra.mxu0 %v964
        %990 = vmatpush.bf16.msra.mxu0 %v963
        %991 = vmatpush.bf16.msra.mxu0 %v962
        %992 = vmatpush.bf16.msra.mxu0 %v961
        %993 = vmatpush.bf16.msra.mxu0 %v960
        %994 = vmatpush.bf16.msra.mxu0 %v959
        %995 = vmatpush.bf16.msra.mxu0 %v958
        %996 = vmatpush.bf16.msra.mxu0 %v957
        %997 = vmatmul.bf16.gmra.mxu0 %v855
        %v998 = vpop.f32.mrf.mxu0
        %v999 = vadd.f32 %v891, %v998
        %v1000 = vpop.f32.mrf.mxu0
        %1001 = vdwg.mxu0
        %1002 = vmatpush.bf16.msra.mxu0 %v972
        %1003 = vmatpush.bf16.msra.mxu0 %v971
        %1004 = vmatpush.bf16.msra.mxu0 %v970
        %1005 = vmatpush.bf16.msra.mxu0 %v969
        %1006 = vmatpush.bf16.msra.mxu0 %v968
        %1007 = vmatpush.bf16.msra.mxu0 %v967
        %1008 = vmatpush.bf16.msra.mxu0 %v966
        %1009 = vmatpush.bf16.msra.mxu0 %v965
        %1010 = vmatmul.bf16.gmra.mxu0 %v856
        %v1011 = vpop.f32.mrf.mxu0
        %v1012 = vadd.f32 %v999, %v1011
        %v1013 = vpop.f32.mrf.mxu0
        %1014 = vdwg.mxu0
        %v1015 = vld [vmem:[#allocation10] sm:$0xf]
        %v1016 = vld [vmem:[#allocation10 + $0x4] sm:$0xf]
        %v1017 = vld [vmem:[#allocation10 + $0x8] sm:$0xf]
        %v1018 = vld [vmem:[#allocation10 + $0xc] sm:$0xf]
        %v1019 = vld [vmem:[#allocation10 + $0x10] sm:$0xf]
        %v1020 = vld [vmem:[#allocation10 + $0x14] sm:$0xf]
        %v1021 = vld [vmem:[#allocation10 + $0x18] sm:$0xf]
        %v1022 = vld [vmem:[#allocation10 + $0x1c] sm:$0xf]
        %v1023 = vld [vmem:[#allocation10 + $0x20] sm:$0xf]
        %v1024 = vld [vmem:[#allocation10 + $0x24] sm:$0xf]
        %v1025 = vld [vmem:[#allocation10 + $0x28] sm:$0xf]
        %v1026 = vld [vmem:[#allocation10 + $0x2c] sm:$0xf]
        %v1027 = vld [vmem:[#allocation10 + $0x30] sm:$0xf]
        %v1028 = vld [vmem:[#allocation10 + $0x34] sm:$0xf]
        %v1029 = vld [vmem:[#allocation10 + $0x38] sm:$0xf]
        %v1030 = vld [vmem:[#allocation10 + $0x3c] sm:$0xf]
        %v1031 = vld [vmem:[#allocation10 + $0x40] sm:$0xf]
        %v1032 = vld [vmem:[#allocation10 + $0x44] sm:$0xf]
        %v1033 = vld [vmem:[#allocation10 + $0x48] sm:$0xf]
        %v1034 = vld [vmem:[#allocation10 + $0x4c] sm:$0xf]
        %v1035 = vld [vmem:[#allocation10 + $0x50] sm:$0xf]
        %v1036 = vld [vmem:[#allocation10 + $0x54] sm:$0xf]
        %v1037 = vld [vmem:[#allocation10 + $0x58] sm:$0xf]
        %v1038 = vld [vmem:[#allocation10 + $0x5c] sm:$0xf]
        %v1039 = vld [vmem:[#allocation10 + $0x60] sm:$0xf]
        %v1040 = vld [vmem:[#allocation10 + $0x64] sm:$0xf]
        %v1041 = vld [vmem:[#allocation10 + $0x68] sm:$0xf]
        %v1042 = vld [vmem:[#allocation10 + $0x6c] sm:$0xf]
        %v1043 = vld [vmem:[#allocation10 + $0x70] sm:$0xf]
        %v1044 = vld [vmem:[#allocation10 + $0x74] sm:$0xf]
        %v1045 = vld [vmem:[#allocation10 + $0x78] sm:$0xf]
        %v1046 = vld [vmem:[#allocation10 + $0x7c] sm:$0xf]
        %v1047 = vld [vmem:[%s8] sm:$0x1]
        %v1049 = vperm.slane %v1047, 0
        %v1083 = vunpack.c.l.b16 %v1015
        %v1084 = vunpack.c.l.b16 %v1016
        %v1085 = vunpack.c.l.b16 %v1017
        %v1086 = vunpack.c.l.b16 %v1018
        %v1087 = vunpack.c.l.b16 %v1019
        %v1088 = vunpack.c.l.b16 %v1020
        %v1089 = vunpack.c.l.b16 %v1021
        %v1090 = vunpack.c.l.b16 %v1022
        %v1091 = vunpack.c.l.b16 %v1023
        %v1092 = vunpack.c.l.b16 %v1024
        %v1093 = vunpack.c.l.b16 %v1025
        %v1094 = vunpack.c.l.b16 %v1026
        %v1095 = vunpack.c.l.b16 %v1027
        %v1096 = vunpack.c.l.b16 %v1028
        %v1097 = vunpack.c.l.b16 %v1029
        %v1098 = vunpack.c.l.b16 %v1030
        %v1099 = vunpack.c.l.b16 %v1031
        %v1100 = vunpack.c.l.b16 %v1032
        %v1101 = vunpack.c.l.b16 %v1033
        %v1102 = vunpack.c.l.b16 %v1034
        %v1103 = vunpack.c.l.b16 %v1035
        %v1104 = vunpack.c.l.b16 %v1036
        %v1105 = vunpack.c.l.b16 %v1037
        %v1106 = vunpack.c.l.b16 %v1038
        %v1107 = vunpack.c.l.b16 %v1039
        %v1108 = vunpack.c.l.b16 %v1040
        %v1109 = vunpack.c.l.b16 %v1041
        %v1110 = vunpack.c.l.b16 %v1042
        %v1111 = vunpack.c.l.b16 %v1043
        %v1112 = vunpack.c.l.b16 %v1044
        %v1113 = vunpack.c.l.b16 %v1045
        %v1114 = vunpack.c.l.b16 %v1046
        %v1115 = vpack.c.b16 %v1084, %v1083
        %v1116 = vpack.c.b16 %v1086, %v1085
        %v1117 = vpack.c.b16 %v1088, %v1087
        %v1118 = vpack.c.b16 %v1090, %v1089
        %v1119 = vpack.c.b16 %v1092, %v1091
        %v1120 = vpack.c.b16 %v1094, %v1093
        %v1121 = vpack.c.b16 %v1096, %v1095
        %v1122 = vpack.c.b16 %v1098, %v1097
        %v1123 = vpack.c.b16 %v1100, %v1099
        %v1124 = vpack.c.b16 %v1102, %v1101
        %v1125 = vpack.c.b16 %v1104, %v1103
        %v1126 = vpack.c.b16 %v1106, %v1105
        %v1127 = vpack.c.b16 %v1108, %v1107
        %v1128 = vpack.c.b16 %v1110, %v1109
        %v1129 = vpack.c.b16 %v1112, %v1111
        %v1130 = vpack.c.b16 %v1114, %v1113
        %1147 = vmatpush.bf16.msra.mxu0 %v1122
        %1148 = vmatpush.bf16.msra.mxu0 %v1121
        %1149 = vmatpush.bf16.msra.mxu0 %v1120
        %1150 = vmatpush.bf16.msra.mxu0 %v1119
        %1151 = vmatpush.bf16.msra.mxu0 %v1118
        %1152 = vmatpush.bf16.msra.mxu0 %v1117
        %1153 = vmatpush.bf16.msra.mxu0 %v1116
        %1154 = vmatpush.bf16.msra.mxu0 %v1115
        %1155 = vmatmul.bf16.gmra.mxu0 %v855
        %v1156 = vpop.f32.mrf.mxu0
        %v1157 = vadd.f32 %v1049, %v1156
        %v1158 = vpop.f32.mrf.mxu0
        %1159 = vdwg.mxu0
        %1160 = vmatpush.bf16.msra.mxu0 %v1130
        %1161 = vmatpush.bf16.msra.mxu0 %v1129
        %1162 = vmatpush.bf16.msra.mxu0 %v1128
        %1163 = vmatpush.bf16.msra.mxu0 %v1127
        %1164 = vmatpush.bf16.msra.mxu0 %v1126
        %1165 = vmatpush.bf16.msra.mxu0 %v1125
        %1166 = vmatpush.bf16.msra.mxu0 %v1124
        %1167 = vmatpush.bf16.msra.mxu0 %v1123
        %1168 = vmatmul.bf16.gmra.mxu0 %v856
        %v1169 = vpop.f32.mrf.mxu0
        %v1170 = vadd.f32 %v1157, %v1169
        %v1171 = vpop.f32.mrf.mxu0
        %1172 = vdwg.mxu0
        %v1173 = vld [vmem:[#allocation11] sm:$0xf]
        %v1174 = vld [vmem:[#allocation11 + $0x4] sm:$0xf]
        %v1175 = vld [vmem:[#allocation11 + $0x8] sm:$0xf]
        %v1176 = vld [vmem:[#allocation11 + $0xc] sm:$0xf]
        %v1177 = vld [vmem:[#allocation11 + $0x10] sm:$0xf]
        %v1178 = vld [vmem:[#allocation11 + $0x14] sm:$0xf]
        %v1179 = vld [vmem:[#allocation11 + $0x18] sm:$0xf]
        %v1180 = vld [vmem:[#allocation11 + $0x1c] sm:$0xf]
        %v1181 = vld [vmem:[#allocation11 + $0x20] sm:$0xf]
        %v1182 = vld [vmem:[#allocation11 + $0x24] sm:$0xf]
        %v1183 = vld [vmem:[#allocation11 + $0x28] sm:$0xf]
        %v1184 = vld [vmem:[#allocation11 + $0x2c] sm:$0xf]
        %v1185 = vld [vmem:[#allocation11 + $0x30] sm:$0xf]
        %v1186 = vld [vmem:[#allocation11 + $0x34] sm:$0xf]
        %v1187 = vld [vmem:[#allocation11 + $0x38] sm:$0xf]
        %v1188 = vld [vmem:[#allocation11 + $0x3c] sm:$0xf]
        %v1189 = vld [vmem:[#allocation11 + $0x40] sm:$0xf]
        %v1190 = vld [vmem:[#allocation11 + $0x44] sm:$0xf]
        %v1191 = vld [vmem:[#allocation11 + $0x48] sm:$0xf]
        %v1192 = vld [vmem:[#allocation11 + $0x4c] sm:$0xf]
        %v1193 = vld [vmem:[#allocation11 + $0x50] sm:$0xf]
        %v1194 = vld [vmem:[#allocation11 + $0x54] sm:$0xf]
        %v1195 = vld [vmem:[#allocation11 + $0x58] sm:$0xf]
        %v1196 = vld [vmem:[#allocation11 + $0x5c] sm:$0xf]
        %v1197 = vld [vmem:[#allocation11 + $0x60] sm:$0xf]
        %v1198 = vld [vmem:[#allocation11 + $0x64] sm:$0xf]
        %v1199 = vld [vmem:[#allocation11 + $0x68] sm:$0xf]
        %v1200 = vld [vmem:[#allocation11 + $0x6c] sm:$0xf]
        %v1201 = vld [vmem:[#allocation11 + $0x70] sm:$0xf]
        %v1202 = vld [vmem:[#allocation11 + $0x74] sm:$0xf]
        %v1203 = vld [vmem:[#allocation11 + $0x78] sm:$0xf]
        %v1204 = vld [vmem:[#allocation11 + $0x7c] sm:$0xf]
        %v1205 = vld [vmem:[#allocation13] sm:$0x1]
        %v1207 = vperm.slane %v1205, 0
        %v1241 = vunpack.c.l.b16 %v1173
        %v1242 = vunpack.c.l.b16 %v1174
        %v1243 = vunpack.c.l.b16 %v1175
        %v1244 = vunpack.c.l.b16 %v1176
        %v1245 = vunpack.c.l.b16 %v1177
        %v1246 = vunpack.c.l.b16 %v1178
        %v1247 = vunpack.c.l.b16 %v1179
        %v1248 = vunpack.c.l.b16 %v1180
        %v1249 = vunpack.c.l.b16 %v1181
        %v1250 = vunpack.c.l.b16 %v1182
        %v1251 = vunpack.c.l.b16 %v1183
        %v1252 = vunpack.c.l.b16 %v1184
        %v1253 = vunpack.c.l.b16 %v1185
        %v1254 = vunpack.c.l.b16 %v1186
        %v1255 = vunpack.c.l.b16 %v1187
        %v1256 = vunpack.c.l.b16 %v1188
        %v1257 = vunpack.c.l.b16 %v1189
        %v1258 = vunpack.c.l.b16 %v1190
        %v1259 = vunpack.c.l.b16 %v1191
        %v1260 = vunpack.c.l.b16 %v1192
        %v1261 = vunpack.c.l.b16 %v1193
        %v1262 = vunpack.c.l.b16 %v1194
        %v1263 = vunpack.c.l.b16 %v1195
        %v1264 = vunpack.c.l.b16 %v1196
        %v1265 = vunpack.c.l.b16 %v1197
        %v1266 = vunpack.c.l.b16 %v1198
        %v1267 = vunpack.c.l.b16 %v1199
        %v1268 = vunpack.c.l.b16 %v1200
        %v1269 = vunpack.c.l.b16 %v1201
        %v1270 = vunpack.c.l.b16 %v1202
        %v1271 = vunpack.c.l.b16 %v1203
        %v1272 = vunpack.c.l.b16 %v1204
        %v1273 = vpack.c.b16 %v1242, %v1241
        %v1274 = vpack.c.b16 %v1244, %v1243
        %v1275 = vpack.c.b16 %v1246, %v1245
        %v1276 = vpack.c.b16 %v1248, %v1247
        %v1277 = vpack.c.b16 %v1250, %v1249
        %v1278 = vpack.c.b16 %v1252, %v1251
        %v1279 = vpack.c.b16 %v1254, %v1253
        %v1280 = vpack.c.b16 %v1256, %v1255
        %v1281 = vpack.c.b16 %v1258, %v1257
        %v1282 = vpack.c.b16 %v1260, %v1259
        %v1283 = vpack.c.b16 %v1262, %v1261
        %v1284 = vpack.c.b16 %v1264, %v1263
        %v1285 = vpack.c.b16 %v1266, %v1265
        %v1286 = vpack.c.b16 %v1268, %v1267
        %v1287 = vpack.c.b16 %v1270, %v1269
        %v1288 = vpack.c.b16 %v1272, %v1271
        %1305 = vmatpush.bf16.msra.mxu0 %v1280
        %1306 = vmatpush.bf16.msra.mxu0 %v1279
        %1307 = vmatpush.bf16.msra.mxu0 %v1278
        %1308 = vmatpush.bf16.msra.mxu0 %v1277
        %1309 = vmatpush.bf16.msra.mxu0 %v1276
        %1310 = vmatpush.bf16.msra.mxu0 %v1275
        %1311 = vmatpush.bf16.msra.mxu0 %v1274
        %1312 = vmatpush.bf16.msra.mxu0 %v1273
        %1313 = vmatmul.bf16.gmra.mxu0 %v855
        %v1314 = vpop.f32.mrf.mxu0
        %v1315 = vadd.f32 %v1207, %v1314
        %v1316 = vpop.f32.mrf.mxu0
        %1317 = vdwg.mxu0
        %1318 = vmatpush.bf16.msra.mxu0 %v1288
        %1319 = vmatpush.bf16.msra.mxu0 %v1287
        %1320 = vmatpush.bf16.msra.mxu0 %v1286
        %1321 = vmatpush.bf16.msra.mxu0 %v1285
        %1322 = vmatpush.bf16.msra.mxu0 %v1284
        %1323 = vmatpush.bf16.msra.mxu0 %v1283
        %1324 = vmatpush.bf16.msra.mxu0 %v1282
        %1325 = vmatpush.bf16.msra.mxu0 %v1281
        %1326 = vmatmul.bf16.gmra.mxu0 %v856
        %v1327 = vpop.f32.mrf.mxu0
        %v1328 = vadd.f32 %v1315, %v1327
        %v1329 = vpop.f32.mrf.mxu0
        %1330 = vdwg.mxu0
        %v1331 = vpack.c.bf16 %v1012, %v1012
        %v1332 = vpack.c.bf16 %v1170, %v1170
        %1333 = vmatpush.bf16.xpose.msra.mxu0 0
        %1334 = vmatpush.bf16.xpose.msra.mxu0 0
        %1335 = vmatpush.bf16.xpose.msra.mxu0 0
        %1336 = vmatpush.bf16.xpose.msra.mxu0 0
        %1337 = vmatpush.bf16.xpose.msra.mxu0 0
        %1338 = vmatpush.bf16.xpose.msra.mxu0 0
        %1339 = vmatpush.bf16.xpose.msra.mxu0 0
        %1340 = vmatpush.bf16.xpose.msra.mxu0 %v1332
        %1341 = vmatmul.bf16.gmra.mxu0 %v1331
        %v1342 = vpop.f32.mrf.mxu0
        %v1343 = vadd.f32 0.0, %v1342
        %v1344 = vpop.f32.mrf.mxu0
        %1345 = vdwg.mxu0
        %v1346 = vmul.f32 %v1343, 0.088388346
        %v1347 = vsel %vm806, 1, 0
        %v1348 = vperm.slane %v1347, 0
        %vm1349 = vcmp.eq.s32.totalorder %v1348, 1
        %v1350 = vsel %vm1349, %v1346, -1e+30
        %vm1351 = vcmask 64512
        %v1352 = vsel %vm1351, %v1350, -inf
        %1353 = vmax.xlane.f32.xlu0 %v1352
        %v1354 = vpop.xlane.xlu0 %1353
        %v1355 = vsub.f32 %v1350, %v1354
        %v1356 = vmul.f32 %v1355, 1.442695
        %v1357 = vpow.pop %v1356
        %v1358 = vsel %vm1351, %v1357, 0.0
        %1359 = vadd.xlane.f32.xlu0 %v1358
        %v1360 = vpop.xlane.xlu0 %1359
        %v1361 = vrcp.pop %v1360
        %v1362 = vmul.f32 %v1360, %v1361
        %v1363 = vsub.f32 1.0, %v1362
        %v1364 = vmul.f32 %v1361, %v1363
        %v1365 = vadd.f32 %v1361, %v1364
        %vm1366 = vweird.f32 %v1360
        %vm1367 = vweird.f32 %v1361
        %vm1368 = vmor %vm1366, %vm1367
        %v1369 = vsel %vm1368, %v1361, %v1365
        %v1370 = vand.u32 2147483647, %v1360
        %vm1371 = vcmp.eq.f32.partialorder %v1370, 8.507059e+37
        %v1372 = vand.u32 %v1360, 2147483648
        %v1373 = vor.u32 1.1754944e-38, %v1372
        %v1374 = vsel %vm1371, %v1373, %v1369
        %v1375 = vmul.f32 %v1357, %v1374
        %v1376 = vpack.c.bf16 %v1375, %v1375
        %v1377 = vpack.c.bf16 %v1328, %v1328
        %v1379 = vsel %vm1351, %v1376, 0
        %vm1381 = vcmask 1043456
        %v1383 = vsel %vm1381, %v1377, 0
        %1385 = vmatpush.bf16.msra.mxu0 0
        %1386 = vmatpush.bf16.msra.mxu0 0
        %1387 = vmatpush.bf16.msra.mxu0 0
        %1388 = vmatpush.bf16.msra.mxu0 0
        %1389 = vmatpush.bf16.msra.mxu0 0
        %1390 = vmatpush.bf16.msra.mxu0 0
        %1391 = vmatpush.bf16.msra.mxu0 0
        %1392 = vmatpush.bf16.msra.mxu0 %v1383
        %1393 = vmatmul.bf16.gmra.mxu0 %v1379
        %v1394 = vpop.f32.mrf.mxu0
        %v1395 = vadd.f32 0.0, %v1394
        %v1396 = vpop.f32.mrf.mxu0
        %1397 = vdwg.mxu0
        %v1398 = vpack.c.bf16 %v1395, %v1395
        %v1399 = vld [vmem:[#allocation14] sm:$0xff]
        %v1400 = vld [vmem:[#allocation14 + $0x8] sm:$0xff]
        %v1401 = vld [vmem:[#allocation14 + $0x10] sm:$0xff]
        %v1402 = vld [vmem:[#allocation14 + $0x18] sm:$0xff]
        %v1403 = vld [vmem:[#allocation14 + $0x20] sm:$0xff]
        %v1404 = vld [vmem:[#allocation14 + $0x28] sm:$0xff]
        %v1405 = vld [vmem:[#allocation14 + $0x30] sm:$0xff]
        %v1406 = vld [vmem:[#allocation14 + $0x38] sm:$0xff]
        %v1407 = vld [vmem:[#allocation14 + $0x40] sm:$0xff]
        %v1408 = vld [vmem:[#allocation14 + $0x48] sm:$0xff]
        %v1409 = vld [vmem:[#allocation14 + $0x50] sm:$0xff]
        %v1410 = vld [vmem:[#allocation14 + $0x58] sm:$0xff]
        %v1411 = vld [vmem:[#allocation14 + $0x60] sm:$0xff]
        %v1412 = vld [vmem:[#allocation14 + $0x68] sm:$0xff]
        %v1413 = vld [vmem:[#allocation14 + $0x70] sm:$0xff]
        %v1414 = vld [vmem:[#allocation14 + $0x78] sm:$0xff]
        %s1415 = scalar_lea.vmem [#allocation8], 128
        %v1416 = vld [vmem:[%s1415] sm:$0xf]
        %v1417 = vld [vmem:[%s1415 + $0x4] sm:$0xf]
        %v1418 = vld [vmem:[%s1415 + $0x8] sm:$0xf]
        %v1419 = vld [vmem:[%s1415 + $0xc] sm:$0xf]
        %v1420 = vld [vmem:[%s1415 + $0x10] sm:$0xf]
        %v1421 = vld [vmem:[%s1415 + $0x14] sm:$0xf]
        %v1422 = vld [vmem:[%s1415 + $0x18] sm:$0xf]
        %v1423 = vld [vmem:[%s1415 + $0x1c] sm:$0xf]
        %v1424 = vld [vmem:[%s1415 + $0x20] sm:$0xf]
        %v1425 = vld [vmem:[%s1415 + $0x24] sm:$0xf]
        %v1426 = vld [vmem:[%s1415 + $0x28] sm:$0xf]
        %v1427 = vld [vmem:[%s1415 + $0x2c] sm:$0xf]
        %v1428 = vld [vmem:[%s1415 + $0x30] sm:$0xf]
        %v1429 = vld [vmem:[%s1415 + $0x34] sm:$0xf]
        %v1430 = vld [vmem:[%s1415 + $0x38] sm:$0xf]
        %v1431 = vld [vmem:[%s1415 + $0x3c] sm:$0xf]
        %v1432 = vld [vmem:[%s1415 + $0x40] sm:$0xf]
        %v1433 = vld [vmem:[%s1415 + $0x44] sm:$0xf]
        %v1434 = vld [vmem:[%s1415 + $0x48] sm:$0xf]
        %v1435 = vld [vmem:[%s1415 + $0x4c] sm:$0xf]
        %v1436 = vld [vmem:[%s1415 + $0x50] sm:$0xf]
        %v1437 = vld [vmem:[%s1415 + $0x54] sm:$0xf]
        %v1438 = vld [vmem:[%s1415 + $0x58] sm:$0xf]
        %v1439 = vld [vmem:[%s1415 + $0x5c] sm:$0xf]
        %v1440 = vld [vmem:[%s1415 + $0x60] sm:$0xf]
        %v1441 = vld [vmem:[%s1415 + $0x64] sm:$0xf]
        %v1442 = vld [vmem:[%s1415 + $0x68] sm:$0xf]
        %v1443 = vld [vmem:[%s1415 + $0x6c] sm:$0xf]
        %v1444 = vld [vmem:[%s1415 + $0x70] sm:$0xf]
        %v1445 = vld [vmem:[%s1415 + $0x74] sm:$0xf]
        %v1446 = vld [vmem:[%s1415 + $0x78] sm:$0xf]
        %v1447 = vld [vmem:[%s1415 + $0x7c] sm:$0xf]
        %s1448 = scalar_lea.vmem %s7, 1
        %v1449 = vld [vmem:[%s1448] sm:$0x1]
        %v1451 = vperm.slane %v1449, 0
        %v1485 = vunpack.c.l.b16 %v1416
        %v1486 = vunpack.c.l.b16 %v1417
        %v1487 = vunpack.c.l.b16 %v1418
        %v1488 = vunpack.c.l.b16 %v1419
        %v1489 = vunpack.c.l.b16 %v1420
        %v1490 = vunpack.c.l.b16 %v1421
        %v1491 = vunpack.c.l.b16 %v1422
        %v1492 = vunpack.c.l.b16 %v1423
        %v1493 = vunpack.c.l.b16 %v1424
        %v1494 = vunpack.c.l.b16 %v1425
        %v1495 = vunpack.c.l.b16 %v1426
        %v1496 = vunpack.c.l.b16 %v1427
        %v1497 = vunpack.c.l.b16 %v1428
        %v1498 = vunpack.c.l.b16 %v1429
        %v1499 = vunpack.c.l.b16 %v1430
        %v1500 = vunpack.c.l.b16 %v1431
        %v1501 = vunpack.c.l.b16 %v1432
        %v1502 = vunpack.c.l.b16 %v1433
        %v1503 = vunpack.c.l.b16 %v1434
        %v1504 = vunpack.c.l.b16 %v1435
        %v1505 = vunpack.c.l.b16 %v1436
        %v1506 = vunpack.c.l.b16 %v1437
        %v1507 = vunpack.c.l.b16 %v1438
        %v1508 = vunpack.c.l.b16 %v1439
        %v1509 = vunpack.c.l.b16 %v1440
        %v1510 = vunpack.c.l.b16 %v1441
        %v1511 = vunpack.c.l.b16 %v1442
        %v1512 = vunpack.c.l.b16 %v1443
        %v1513 = vunpack.c.l.b16 %v1444
        %v1514 = vunpack.c.l.b16 %v1445
        %v1515 = vunpack.c.l.b16 %v1446
        %v1516 = vunpack.c.l.b16 %v1447
        %v1517 = vpack.c.b16 %v1486, %v1485
        %v1518 = vpack.c.b16 %v1488, %v1487
        %v1519 = vpack.c.b16 %v1490, %v1489
        %v1520 = vpack.c.b16 %v1492, %v1491
        %v1521 = vpack.c.b16 %v1494, %v1493
        %v1522 = vpack.c.b16 %v1496, %v1495
        %v1523 = vpack.c.b16 %v1498, %v1497
        %v1524 = vpack.c.b16 %v1500, %v1499
        %v1525 = vpack.c.b16 %v1502, %v1501
        %v1526 = vpack.c.b16 %v1504, %v1503
        %v1527 = vpack.c.b16 %v1506, %v1505
        %v1528 = vpack.c.b16 %v1508, %v1507
        %v1529 = vpack.c.b16 %v1510, %v1509
        %v1530 = vpack.c.b16 %v1512, %v1511
        %v1531 = vpack.c.b16 %v1514, %v1513
        %v1532 = vpack.c.b16 %v1516, %v1515
        %1549 = vmatpush.bf16.msra.mxu0 %v1524
        %1550 = vmatpush.bf16.msra.mxu0 %v1523
        %1551 = vmatpush.bf16.msra.mxu0 %v1522
        %1552 = vmatpush.bf16.msra.mxu0 %v1521
        %1553 = vmatpush.bf16.msra.mxu0 %v1520
        %1554 = vmatpush.bf16.msra.mxu0 %v1519
        %1555 = vmatpush.bf16.msra.mxu0 %v1518
        %1556 = vmatpush.bf16.msra.mxu0 %v1517
        %1557 = vmatmul.bf16.gmra.mxu0 %v855
        %v1558 = vpop.f32.mrf.mxu0
        %v1559 = vadd.f32 %v1451, %v1558
        %v1560 = vpop.f32.mrf.mxu0
        %1561 = vdwg.mxu0
        %1562 = vmatpush.bf16.msra.mxu0 %v1532
        %1563 = vmatpush.bf16.msra.mxu0 %v1531
        %1564 = vmatpush.bf16.msra.mxu0 %v1530
        %1565 = vmatpush.bf16.msra.mxu0 %v1529
        %1566 = vmatpush.bf16.msra.mxu0 %v1528
        %1567 = vmatpush.bf16.msra.mxu0 %v1527
        %1568 = vmatpush.bf16.msra.mxu0 %v1526
        %1569 = vmatpush.bf16.msra.mxu0 %v1525
        %1570 = vmatmul.bf16.gmra.mxu0 %v856
        %v1571 = vpop.f32.mrf.mxu0
        %v1572 = vadd.f32 %v1559, %v1571
        %v1573 = vpop.f32.mrf.mxu0
        %1574 = vdwg.mxu0
        %s1575 = scalar_lea.vmem [#allocation10], 128
        %v1576 = vld [vmem:[%s1575] sm:$0xf]
        %v1577 = vld [vmem:[%s1575 + $0x4] sm:$0xf]
        %v1578 = vld [vmem:[%s1575 + $0x8] sm:$0xf]
        %v1579 = vld [vmem:[%s1575 + $0xc] sm:$0xf]
        %v1580 = vld [vmem:[%s1575 + $0x10] sm:$0xf]
        %v1581 = vld [vmem:[%s1575 + $0x14] sm:$0xf]
        %v1582 = vld [vmem:[%s1575 + $0x18] sm:$0xf]
        %v1583 = vld [vmem:[%s1575 + $0x1c] sm:$0xf]
        %v1584 = vld [vmem:[%s1575 + $0x20] sm:$0xf]
        %v1585 = vld [vmem:[%s1575 + $0x24] sm:$0xf]
        %v1586 = vld [vmem:[%s1575 + $0x28] sm:$0xf]
        %v1587 = vld [vmem:[%s1575 + $0x2c] sm:$0xf]
        %v1588 = vld [vmem:[%s1575 + $0x30] sm:$0xf]
        %v1589 = vld [vmem:[%s1575 + $0x34] sm:$0xf]
        %v1590 = vld [vmem:[%s1575 + $0x38] sm:$0xf]
        %v1591 = vld [vmem:[%s1575 + $0x3c] sm:$0xf]
        %v1592 = vld [vmem:[%s1575 + $0x40] sm:$0xf]
        %v1593 = vld [vmem:[%s1575 + $0x44] sm:$0xf]
        %v1594 = vld [vmem:[%s1575 + $0x48] sm:$0xf]
        %v1595 = vld [vmem:[%s1575 + $0x4c] sm:$0xf]
        %v1596 = vld [vmem:[%s1575 + $0x50] sm:$0xf]
        %v1597 = vld [vmem:[%s1575 + $0x54] sm:$0xf]
        %v1598 = vld [vmem:[%s1575 + $0x58] sm:$0xf]
        %v1599 = vld [vmem:[%s1575 + $0x5c] sm:$0xf]
        %v1600 = vld [vmem:[%s1575 + $0x60] sm:$0xf]
        %v1601 = vld [vmem:[%s1575 + $0x64] sm:$0xf]
        %v1602 = vld [vmem:[%s1575 + $0x68] sm:$0xf]
        %v1603 = vld [vmem:[%s1575 + $0x6c] sm:$0xf]
        %v1604 = vld [vmem:[%s1575 + $0x70] sm:$0xf]
        %v1605 = vld [vmem:[%s1575 + $0x74] sm:$0xf]
        %v1606 = vld [vmem:[%s1575 + $0x78] sm:$0xf]
        %v1607 = vld [vmem:[%s1575 + $0x7c] sm:$0xf]
        %s1608 = scalar_lea.vmem %s8, 1
        %v1609 = vld [vmem:[%s1608] sm:$0x1]
        %v1611 = vperm.slane %v1609, 0
        %v1645 = vunpack.c.l.b16 %v1576
        %v1646 = vunpack.c.l.b16 %v1577
        %v1647 = vunpack.c.l.b16 %v1578
        %v1648 = vunpack.c.l.b16 %v1579
        %v1649 = vunpack.c.l.b16 %v1580
        %v1650 = vunpack.c.l.b16 %v1581
        %v1651 = vunpack.c.l.b16 %v1582
        %v1652 = vunpack.c.l.b16 %v1583
        %v1653 = vunpack.c.l.b16 %v1584
        %v1654 = vunpack.c.l.b16 %v1585
        %v1655 = vunpack.c.l.b16 %v1586
        %v1656 = vunpack.c.l.b16 %v1587
        %v1657 = vunpack.c.l.b16 %v1588
        %v1658 = vunpack.c.l.b16 %v1589
        %v1659 = vunpack.c.l.b16 %v1590
        %v1660 = vunpack.c.l.b16 %v1591
        %v1661 = vunpack.c.l.b16 %v1592
        %v1662 = vunpack.c.l.b16 %v1593
        %v1663 = vunpack.c.l.b16 %v1594
        %v1664 = vunpack.c.l.b16 %v1595
        %v1665 = vunpack.c.l.b16 %v1596
        %v1666 = vunpack.c.l.b16 %v1597
        %v1667 = vunpack.c.l.b16 %v1598
        %v1668 = vunpack.c.l.b16 %v1599
        %v1669 = vunpack.c.l.b16 %v1600
        %v1670 = vunpack.c.l.b16 %v1601
        %v1671 = vunpack.c.l.b16 %v1602
        %v1672 = vunpack.c.l.b16 %v1603
        %v1673 = vunpack.c.l.b16 %v1604
        %v1674 = vunpack.c.l.b16 %v1605
        %v1675 = vunpack.c.l.b16 %v1606
        %v1676 = vunpack.c.l.b16 %v1607
        %v1677 = vpack.c.b16 %v1646, %v1645
        %v1678 = vpack.c.b16 %v1648, %v1647
        %v1679 = vpack.c.b16 %v1650, %v1649
        %v1680 = vpack.c.b16 %v1652, %v1651
        %v1681 = vpack.c.b16 %v1654, %v1653
        %v1682 = vpack.c.b16 %v1656, %v1655
        %v1683 = vpack.c.b16 %v1658, %v1657
        %v1684 = vpack.c.b16 %v1660, %v1659
        %v1685 = vpack.c.b16 %v1662, %v1661
        %v1686 = vpack.c.b16 %v1664, %v1663
        %v1687 = vpack.c.b16 %v1666, %v1665
        %v1688 = vpack.c.b16 %v1668, %v1667
        %v1689 = vpack.c.b16 %v1670, %v1669
        %v1690 = vpack.c.b16 %v1672, %v1671
        %v1691 = vpack.c.b16 %v1674, %v1673
        %v1692 = vpack.c.b16 %v1676, %v1675
        %1709 = vmatpush.bf16.msra.mxu0 %v1684
        %1710 = vmatpush.bf16.msra.mxu0 %v1683
        %1711 = vmatpush.bf16.msra.mxu0 %v1682
        %1712 = vmatpush.bf16.msra.mxu0 %v1681
        %1713 = vmatpush.bf16.msra.mxu0 %v1680
        %1714 = vmatpush.bf16.msra.mxu0 %v1679
        %1715 = vmatpush.bf16.msra.mxu0 %v1678
        %1716 = vmatpush.bf16.msra.mxu0 %v1677
        %1717 = vmatmul.bf16.gmra.mxu0 %v855
        %v1718 = vpop.f32.mrf.mxu0
        %v1719 = vadd.f32 %v1611, %v1718
        %v1720 = vpop.f32.mrf.mxu0
        %1721 = vdwg.mxu0
        %1722 = vmatpush.bf16.msra.mxu0 %v1692
        %1723 = vmatpush.bf16.msra.mxu0 %v1691
        %1724 = vmatpush.bf16.msra.mxu0 %v1690
        %1725 = vmatpush.bf16.msra.mxu0 %v1689
        %1726 = vmatpush.bf16.msra.mxu0 %v1688
        %1727 = vmatpush.bf16.msra.mxu0 %v1687
        %1728 = vmatpush.bf16.msra.mxu0 %v1686
        %1729 = vmatpush.bf16.msra.mxu0 %v1685
        %1730 = vmatmul.bf16.gmra.mxu0 %v856
        %v1731 = vpop.f32.mrf.mxu0
        %v1732 = vadd.f32 %v1719, %v1731
        %v1733 = vpop.f32.mrf.mxu0
        %1734 = vdwg.mxu0
        %s1735 = scalar_lea.vmem [#allocation11], 128
        %v1736 = vld [vmem:[%s1735] sm:$0xf]
        %v1737 = vld [vmem:[%s1735 + $0x4] sm:$0xf]
        %v1738 = vld [vmem:[%s1735 + $0x8] sm:$0xf]
        %v1739 = vld [vmem:[%s1735 + $0xc] sm:$0xf]
        %v1740 = vld [vmem:[%s1735 + $0x10] sm:$0xf]
        %v1741 = vld [vmem:[%s1735 + $0x14] sm:$0xf]
        %v1742 = vld [vmem:[%s1735 + $0x18] sm:$0xf]
        %v1743 = vld [vmem:[%s1735 + $0x1c] sm:$0xf]
        %v1744 = vld [vmem:[%s1735 + $0x20] sm:$0xf]
        %v1745 = vld [vmem:[%s1735 + $0x24] sm:$0xf]
        %v1746 = vld [vmem:[%s1735 + $0x28] sm:$0xf]
        %v1747 = vld [vmem:[%s1735 + $0x2c] sm:$0xf]
        %v1748 = vld [vmem:[%s1735 + $0x30] sm:$0xf]
        %v1749 = vld [vmem:[%s1735 + $0x34] sm:$0xf]
        %v1750 = vld [vmem:[%s1735 + $0x38] sm:$0xf]
        %v1751 = vld [vmem:[%s1735 + $0x3c] sm:$0xf]
        %v1752 = vld [vmem:[%s1735 + $0x40] sm:$0xf]
        %v1753 = vld [vmem:[%s1735 + $0x44] sm:$0xf]
        %v1754 = vld [vmem:[%s1735 + $0x48] sm:$0xf]
        %v1755 = vld [vmem:[%s1735 + $0x4c] sm:$0xf]
        %v1756 = vld [vmem:[%s1735 + $0x50] sm:$0xf]
        %v1757 = vld [vmem:[%s1735 + $0x54] sm:$0xf]
        %v1758 = vld [vmem:[%s1735 + $0x58] sm:$0xf]
        %v1759 = vld [vmem:[%s1735 + $0x5c] sm:$0xf]
        %v1760 = vld [vmem:[%s1735 + $0x60] sm:$0xf]
        %v1761 = vld [vmem:[%s1735 + $0x64] sm:$0xf]
        %v1762 = vld [vmem:[%s1735 + $0x68] sm:$0xf]
        %v1763 = vld [vmem:[%s1735 + $0x6c] sm:$0xf]
        %v1764 = vld [vmem:[%s1735 + $0x70] sm:$0xf]
        %v1765 = vld [vmem:[%s1735 + $0x74] sm:$0xf]
        %v1766 = vld [vmem:[%s1735 + $0x78] sm:$0xf]
        %v1767 = vld [vmem:[%s1735 + $0x7c] sm:$0xf]
        %s1768 = scalar_lea.vmem [#allocation13], 1
        %v1769 = vld [vmem:[%s1768] sm:$0x1]
        %v1771 = vperm.slane %v1769, 0
        %v1805 = vunpack.c.l.b16 %v1736
        %v1806 = vunpack.c.l.b16 %v1737
        %v1807 = vunpack.c.l.b16 %v1738
        %v1808 = vunpack.c.l.b16 %v1739
        %v1809 = vunpack.c.l.b16 %v1740
        %v1810 = vunpack.c.l.b16 %v1741
        %v1811 = vunpack.c.l.b16 %v1742
        %v1812 = vunpack.c.l.b16 %v1743
        %v1813 = vunpack.c.l.b16 %v1744
        %v1814 = vunpack.c.l.b16 %v1745
        %v1815 = vunpack.c.l.b16 %v1746
        %v1816 = vunpack.c.l.b16 %v1747
        %v1817 = vunpack.c.l.b16 %v1748
        %v1818 = vunpack.c.l.b16 %v1749
        %v1819 = vunpack.c.l.b16 %v1750
        %v1820 = vunpack.c.l.b16 %v1751
        %v1821 = vunpack.c.l.b16 %v1752
        %v1822 = vunpack.c.l.b16 %v1753
        %v1823 = vunpack.c.l.b16 %v1754
        %v1824 = vunpack.c.l.b16 %v1755
        %v1825 = vunpack.c.l.b16 %v1756
        %v1826 = vunpack.c.l.b16 %v1757
        %v1827 = vunpack.c.l.b16 %v1758
        %v1828 = vunpack.c.l.b16 %v1759
        %v1829 = vunpack.c.l.b16 %v1760
        %v1830 = vunpack.c.l.b16 %v1761
        %v1831 = vunpack.c.l.b16 %v1762
        %v1832 = vunpack.c.l.b16 %v1763
        %v1833 = vunpack.c.l.b16 %v1764
        %v1834 = vunpack.c.l.b16 %v1765
        %v1835 = vunpack.c.l.b16 %v1766
        %v1836 = vunpack.c.l.b16 %v1767
        %v1837 = vpack.c.b16 %v1806, %v1805
        %v1838 = vpack.c.b16 %v1808, %v1807
        %v1839 = vpack.c.b16 %v1810, %v1809
        %v1840 = vpack.c.b16 %v1812, %v1811
        %v1841 = vpack.c.b16 %v1814, %v1813
        %v1842 = vpack.c.b16 %v1816, %v1815
        %v1843 = vpack.c.b16 %v1818, %v1817
        %v1844 = vpack.c.b16 %v1820, %v1819
        %v1845 = vpack.c.b16 %v1822, %v1821
        %v1846 = vpack.c.b16 %v1824, %v1823
        %v1847 = vpack.c.b16 %v1826, %v1825
        %v1848 = vpack.c.b16 %v1828, %v1827
        %v1849 = vpack.c.b16 %v1830, %v1829
        %v1850 = vpack.c.b16 %v1832, %v1831
        %v1851 = vpack.c.b16 %v1834, %v1833
        %v1852 = vpack.c.b16 %v1836, %v1835
        %1869 = vmatpush.bf16.msra.mxu0 %v1844
        %1870 = vmatpush.bf16.msra.mxu0 %v1843
        %1871 = vmatpush.bf16.msra.mxu0 %v1842
        %1872 = vmatpush.bf16.msra.mxu0 %v1841
        %1873 = vmatpush.bf16.msra.mxu0 %v1840
        %1874 = vmatpush.bf16.msra.mxu0 %v1839
        %1875 = vmatpush.bf16.msra.mxu0 %v1838
        %1876 = vmatpush.bf16.msra.mxu0 %v1837
        %1877 = vmatmul.bf16.gmra.mxu0 %v855
        %v1878 = vpop.f32.mrf.mxu0
        %v1879 = vadd.f32 %v1771, %v1878
        %v1880 = vpop.f32.mrf.mxu0
        %1881 = vdwg.mxu0
        %1882 = vmatpush.bf16.msra.mxu0 %v1852
        %1883 = vmatpush.bf16.msra.mxu0 %v1851
        %1884 = vmatpush.bf16.msra.mxu0 %v1850
        %1885 = vmatpush.bf16.msra.mxu0 %v1849
        %1886 = vmatpush.bf16.msra.mxu0 %v1848
        %1887 = vmatpush.bf16.msra.mxu0 %v1847
        %1888 = vmatpush.bf16.msra.mxu0 %v1846
        %1889 = vmatpush.bf16.msra.mxu0 %v1845
        %1890 = vmatmul.bf16.gmra.mxu0 %v856
        %v1891 = vpop.f32.mrf.mxu0
        %v1892 = vadd.f32 %v1879, %v1891
        %v1893 = vpop.f32.mrf.mxu0
        %1894 = vdwg.mxu0
        %v1895 = vpack.c.bf16 %v1572, %v1572
        %v1896 = vpack.c.bf16 %v1732, %v1732
        %1897 = vmatpush.bf16.xpose.msra.mxu0 0
        %1898 = vmatpush.bf16.xpose.msra.mxu0 0
        %1899 = vmatpush.bf16.xpose.msra.mxu0 0
        %1900 = vmatpush.bf16.xpose.msra.mxu0 0
        %1901 = vmatpush.bf16.xpose.msra.mxu0 0
        %1902 = vmatpush.bf16.xpose.msra.mxu0 0
        %1903 = vmatpush.bf16.xpose.msra.mxu0 0
        %1904 = vmatpush.bf16.xpose.msra.mxu0 %v1896
        %1905 = vmatmul.bf16.gmra.mxu0 %v1895
        %v1906 = vpop.f32.mrf.mxu0
        %v1907 = vadd.f32 0.0, %v1906
        %v1908 = vpop.f32.mrf.mxu0
        %1909 = vdwg.mxu0
        %v1910 = vmul.f32 %v1907, 0.088388346
        %v1911 = vsel %vm1349, %v1910, -1e+30
        %v1912 = vsel %vm1351, %v1911, -inf
        %1913 = vmax.xlane.f32.xlu0 %v1912
        %v1914 = vpop.xlane.xlu0 %1913
        %v1915 = vsub.f32 %v1911, %v1914
        %v1916 = vmul.f32 %v1915, 1.442695
        %v1917 = vpow.pop %v1916
        %v1918 = vsel %vm1351, %v1917, 0.0
        %1919 = vadd.xlane.f32.xlu0 %v1918
        %v1920 = vpop.xlane.xlu0 %1919
        %v1921 = vrcp.pop %v1920
        %v1922 = vmul.f32 %v1920, %v1921
        %v1923 = vsub.f32 1.0, %v1922
        %v1924 = vmul.f32 %v1921, %v1923
        %v1925 = vadd.f32 %v1921, %v1924
        %vm1926 = vweird.f32 %v1920
        %vm1927 = vweird.f32 %v1921
        %vm1928 = vmor %vm1926, %vm1927
        %v1929 = vsel %vm1928, %v1921, %v1925
        %v1930 = vand.u32 2147483647, %v1920
        %vm1931 = vcmp.eq.f32.partialorder %v1930, 8.507059e+37
        %v1932 = vand.u32 %v1920, 2147483648
        %v1933 = vor.u32 1.1754944e-38, %v1932
        %v1934 = vsel %vm1931, %v1933, %v1929
        %v1935 = vmul.f32 %v1917, %v1934
        %v1936 = vpack.c.bf16 %v1935, %v1935
        %v1937 = vpack.c.bf16 %v1892, %v1892
        %v1939 = vsel %vm1351, %v1936, 0
        %v1942 = vsel %vm1381, %v1937, 0
        %1944 = vmatpush.bf16.msra.mxu0 0
        %1945 = vmatpush.bf16.msra.mxu0 0
        %1946 = vmatpush.bf16.msra.mxu0 0
        %1947 = vmatpush.bf16.msra.mxu0 0
        %1948 = vmatpush.bf16.msra.mxu0 0
        %1949 = vmatpush.bf16.msra.mxu0 0
        %1950 = vmatpush.bf16.msra.mxu0 0
        %1951 = vmatpush.bf16.msra.mxu0 %v1942
        %1952 = vmatmul.bf16.gmra.mxu0 %v1939
        %v1953 = vpop.f32.mrf.mxu0
        %v1954 = vadd.f32 0.0, %v1953
        %v1955 = vpop.f32.mrf.mxu0
        %1956 = vdwg.mxu0
        %v1957 = vpack.c.bf16 %v1954, %v1954
        %s1958 = scalar_lea.vmem [#allocation14], 128
        %v1959 = vld [vmem:[%s1958] sm:$0xff]
        %v1960 = vld [vmem:[%s1958 + $0x8] sm:$0xff]
        %v1961 = vld [vmem:[%s1958 + $0x10] sm:$0xff]
        %v1962 = vld [vmem:[%s1958 + $0x18] sm:$0xff]
        %v1963 = vld [vmem:[%s1958 + $0x20] sm:$0xff]
        %v1964 = vld [vmem:[%s1958 + $0x28] sm:$0xff]
        %v1965 = vld [vmem:[%s1958 + $0x30] sm:$0xff]
        %v1966 = vld [vmem:[%s1958 + $0x38] sm:$0xff]
        %v1967 = vld [vmem:[%s1958 + $0x40] sm:$0xff]
        %v1968 = vld [vmem:[%s1958 + $0x48] sm:$0xff]
        %v1969 = vld [vmem:[%s1958 + $0x50] sm:$0xff]
        %v1970 = vld [vmem:[%s1958 + $0x58] sm:$0xff]
        %v1971 = vld [vmem:[%s1958 + $0x60] sm:$0xff]
        %v1972 = vld [vmem:[%s1958 + $0x68] sm:$0xff]
        %v1973 = vld [vmem:[%s1958 + $0x70] sm:$0xff]
        %v1974 = vld [vmem:[%s1958 + $0x78] sm:$0xff]
        %v1991 = vunpack.c.l.b16 %v1959
        %v1992 = vunpack.c.h.b16 %v1959
        %v1993 = vunpack.c.l.b16 %v1960
        %v1994 = vunpack.c.h.b16 %v1960
        %v1995 = vunpack.c.l.b16 %v1961
        %v1996 = vunpack.c.h.b16 %v1961
        %v1997 = vunpack.c.l.b16 %v1962
        %v1998 = vunpack.c.h.b16 %v1962
        %v1999 = vunpack.c.l.b16 %v1963
        %v2000 = vunpack.c.h.b16 %v1963
        %v2001 = vunpack.c.l.b16 %v1964
        %v2002 = vunpack.c.h.b16 %v1964
        %v2003 = vunpack.c.l.b16 %v1965
        %v2004 = vunpack.c.h.b16 %v1965
        %v2005 = vunpack.c.l.b16 %v1966
        %v2006 = vunpack.c.h.b16 %v1966
        %v2007 = vunpack.c.l.b16 %v1967
        %v2008 = vunpack.c.h.b16 %v1967
        %v2009 = vunpack.c.l.b16 %v1968
        %v2010 = vunpack.c.h.b16 %v1968
        %v2011 = vunpack.c.l.b16 %v1969
        %v2012 = vunpack.c.h.b16 %v1969
        %v2013 = vunpack.c.l.b16 %v1970
        %v2014 = vunpack.c.h.b16 %v1970
        %v2015 = vunpack.c.l.b16 %v1971
        %v2016 = vunpack.c.h.b16 %v1971
        %v2017 = vunpack.c.l.b16 %v1972
        %v2018 = vunpack.c.h.b16 %v1972
        %v2019 = vunpack.c.l.b16 %v1973
        %v2020 = vunpack.c.h.b16 %v1973
        %v2021 = vunpack.c.l.b16 %v1974
        %v2022 = vunpack.c.h.b16 %v1974
        %v2023 = vpack.c.b16 %v1993, %v1991
        %v2024 = vpack.c.b16 %v1994, %v1992
        %v2025 = vpack.c.b16 %v1997, %v1995
        %v2026 = vpack.c.b16 %v1998, %v1996
        %v2027 = vpack.c.b16 %v2001, %v1999
        %v2028 = vpack.c.b16 %v2002, %v2000
        %v2029 = vpack.c.b16 %v2005, %v2003
        %v2030 = vpack.c.b16 %v2006, %v2004
        %v2031 = vpack.c.b16 %v2009, %v2007
        %v2032 = vpack.c.b16 %v2010, %v2008
        %v2033 = vpack.c.b16 %v2013, %v2011
        %v2034 = vpack.c.b16 %v2014, %v2012
        %v2035 = vpack.c.b16 %v2017, %v2015
        %v2036 = vpack.c.b16 %v2018, %v2016
        %v2037 = vpack.c.b16 %v2021, %v2019
        %v2038 = vpack.c.b16 %v2022, %v2020
        %2055 = vmatpush.bf16.msra.mxu0 %v2037
        %2056 = vmatpush.bf16.msra.mxu0 %v2035
        %2057 = vmatpush.bf16.msra.mxu0 %v2033
        %2058 = vmatpush.bf16.msra.mxu0 %v2031
        %2059 = vmatpush.bf16.msra.mxu0 %v2029
        %2060 = vmatpush.bf16.msra.mxu0 %v2027
        %2061 = vmatpush.bf16.msra.mxu0 %v2025
        %2062 = vmatpush.bf16.msra.mxu0 %v2023
        %2063 = vmatmul.bf16.gmra.mxu0 %v1957
        %v2064 = vpop.f32.mrf.mxu0
        %v2065 = vadd.f32 0.0, %v2064
        %v2066 = vpop.f32.mrf.mxu0
        %2067 = vdwg.mxu0
        %2068 = vmatpush.bf16.msra.mxu0 %v2038
        %2069 = vmatpush.bf16.msra.mxu0 %v2036
        %2070 = vmatpush.bf16.msra.mxu0 %v2034
        %2071 = vmatpush.bf16.msra.mxu0 %v2032
        %2072 = vmatpush.bf16.msra.mxu0 %v2030
        %2073 = vmatpush.bf16.msra.mxu0 %v2028
        %2074 = vmatpush.bf16.msra.mxu0 %v2026
        %2075 = vmatpush.bf16.msra.mxu0 %v2024
        %2076 = vmatmul.bf16.gmra.mxu0 %v1957
        %v2077 = vpop.f32.mrf.mxu0
        %v2078 = vadd.f32 0.0, %v2077
        %v2079 = vpop.f32.mrf.mxu0
        %2080 = vdwg.mxu0
        %v2097 = vunpack.c.l.b16 %v1399
        %v2098 = vunpack.c.h.b16 %v1399
        %v2099 = vunpack.c.l.b16 %v1400
        %v2100 = vunpack.c.h.b16 %v1400
        %v2101 = vunpack.c.l.b16 %v1401
        %v2102 = vunpack.c.h.b16 %v1401
        %v2103 = vunpack.c.l.b16 %v1402
        %v2104 = vunpack.c.h.b16 %v1402
        %v2105 = vunpack.c.l.b16 %v1403
        %v2106 = vunpack.c.h.b16 %v1403
        %v2107 = vunpack.c.l.b16 %v1404
        %v2108 = vunpack.c.h.b16 %v1404
        %v2109 = vunpack.c.l.b16 %v1405
        %v2110 = vunpack.c.h.b16 %v1405
        %v2111 = vunpack.c.l.b16 %v1406
        %v2112 = vunpack.c.h.b16 %v1406
        %v2113 = vunpack.c.l.b16 %v1407
        %v2114 = vunpack.c.h.b16 %v1407
        %v2115 = vunpack.c.l.b16 %v1408
        %v2116 = vunpack.c.h.b16 %v1408
        %v2117 = vunpack.c.l.b16 %v1409
        %v2118 = vunpack.c.h.b16 %v1409
        %v2119 = vunpack.c.l.b16 %v1410
        %v2120 = vunpack.c.h.b16 %v1410
        %v2121 = vunpack.c.l.b16 %v1411
        %v2122 = vunpack.c.h.b16 %v1411
        %v2123 = vunpack.c.l.b16 %v1412
        %v2124 = vunpack.c.h.b16 %v1412
        %v2125 = vunpack.c.l.b16 %v1413
        %v2126 = vunpack.c.h.b16 %v1413
        %v2127 = vunpack.c.l.b16 %v1414
        %v2128 = vunpack.c.h.b16 %v1414
        %v2129 = vpack.c.b16 %v2099, %v2097
        %v2130 = vpack.c.b16 %v2100, %v2098
        %v2131 = vpack.c.b16 %v2103, %v2101
        %v2132 = vpack.c.b16 %v2104, %v2102
        %v2133 = vpack.c.b16 %v2107, %v2105
        %v2134 = vpack.c.b16 %v2108, %v2106
        %v2135 = vpack.c.b16 %v2111, %v2109
        %v2136 = vpack.c.b16 %v2112, %v2110
        %v2137 = vpack.c.b16 %v2115, %v2113
        %v2138 = vpack.c.b16 %v2116, %v2114
        %v2139 = vpack.c.b16 %v2119, %v2117
        %v2140 = vpack.c.b16 %v2120, %v2118
        %v2141 = vpack.c.b16 %v2123, %v2121
        %v2142 = vpack.c.b16 %v2124, %v2122
        %v2143 = vpack.c.b16 %v2127, %v2125
        %v2144 = vpack.c.b16 %v2128, %v2126
        %2161 = vmatpush.bf16.msra.mxu0 %v2143
        %2162 = vmatpush.bf16.msra.mxu0 %v2141
        %2163 = vmatpush.bf16.msra.mxu0 %v2139
        %2164 = vmatpush.bf16.msra.mxu0 %v2137
        %2165 = vmatpush.bf16.msra.mxu0 %v2135
        %2166 = vmatpush.bf16.msra.mxu0 %v2133
        %2167 = vmatpush.bf16.msra.mxu0 %v2131
        %2168 = vmatpush.bf16.msra.mxu0 %v2129
        %2169 = vmatmul.bf16.gmra.mxu0 %v1398
        %v2170 = vpop.f32.mrf.mxu0
        %v2171 = vadd.f32 %v2065, %v2170
        %v2172 = vpop.f32.mrf.mxu0
        %2173 = vdwg.mxu0
        %2174 = vmatpush.bf16.msra.mxu0 %v2144
        %2175 = vmatpush.bf16.msra.mxu0 %v2142
        %2176 = vmatpush.bf16.msra.mxu0 %v2140
        %2177 = vmatpush.bf16.msra.mxu0 %v2138
        %2178 = vmatpush.bf16.msra.mxu0 %v2136
        %2179 = vmatpush.bf16.msra.mxu0 %v2134
        %2180 = vmatpush.bf16.msra.mxu0 %v2132
        %2181 = vmatpush.bf16.msra.mxu0 %v2130
        %2182 = vmatmul.bf16.gmra.mxu0 %v1398
        %v2183 = vpop.f32.mrf.mxu0
        %v2184 = vadd.f32 %v2078, %v2183
        %v2185 = vpop.f32.mrf.mxu0
        %2186 = vdwg.mxu0
        %v2187 = vadd.f32 %v803, %v2171
        %v2188 = vadd.f32 %v804, %v2184
        %v2189 = vld [vmem:[#allocation16] sm:$0x3]
        %v2191 = vperm.slane %v2189, 0
        %v2192 = vperm.slane %v2189, 1
        %v2195 = vadd.f32 %v2187, %v2191
        %v2196 = vadd.f32 %v2188, %v2192
        %v2197 = vld [vmem:[#allocation17] sm:$0x3]
        %v2198 = vld [vmem:[#allocation19] sm:$0x3]
        %v2199 = vadd.f32 %v2195, %v2196
        %2200 = vadd.xlane.f32.xlu0 %v2199
        %v2201 = vpop.xlane.xlu0 %2200
        %v2202 = vmul.f32 %v2201, %v818
        %v2203 = vsub.f32 %v2195, %v2202
        %v2204 = vsub.f32 %v2196, %v2202
        %v2205 = vmul.f32 %v2203, %v2203
        %v2206 = vmul.f32 %v2204, %v2204
        %v2207 = vadd.f32 %v2205, %v2206
        %2208 = vadd.xlane.f32.xlu0 %v2207
        %v2209 = vpop.xlane.xlu0 %2208
        %v2210 = vmul.f32 %v2209, %v818
        %v2211 = vadd.f32 %v2210, 1e-05
        %v2212 = vrsqrt.pop %v2211
        %v2213 = vmul.f32 %v2212, %v2211
        %v2214 = vmul.f32 %v2213, %v2212
        %v2215 = vmul.f32 0.5, %v2214
        %v2216 = vsub.f32 1.5, %v2215
        %v2217 = vmul.f32 %v2212, %v2216
        %vm2218 = vweird.f32 %v2211
        %vm2219 = vweird.f32 %v2212
        %vm2220 = vmor %vm2218, %vm2219
        %v2221 = vsel %vm2220, %v2212, %v2217
        %v2222 = vmul.f32 %v2203, %v2221
        %v2223 = vmul.f32 %v2204, %v2221
        %v2225 = vperm.slane %v2197, 0
        %v2226 = vperm.slane %v2197, 1
        %v2229 = vmul.f32 %v2222, %v2225
        %v2230 = vmul.f32 %v2223, %v2226
        %v2232 = vperm.slane %v2198, 0
        %v2233 = vperm.slane %v2198, 1
        %v2236 = vadd.f32 %v2229, %v2232
        %v2237 = vadd.f32 %v2230, %v2233
        %v2238 = vpack.c.bf16 %v2236, %v2236
        %v2239 = vpack.c.bf16 %v2237, %v2237
        %v2240 = vld [vmem:[#allocation20] sm:$0xff]
        %v2241 = vld [vmem:[#allocation20 + $0x8] sm:$0xff]
        %v2242 = vld [vmem:[#allocation20 + $0x20] sm:$0xff]
        %v2243 = vld [vmem:[#allocation20 + $0x28] sm:$0xff]
        %v2244 = vld [vmem:[#allocation20 + $0x40] sm:$0xff]
        %v2245 = vld [vmem:[#allocation20 + $0x48] sm:$0xff]
        %v2246 = vld [vmem:[#allocation20 + $0x60] sm:$0xff]
        %v2247 = vld [vmem:[#allocation20 + $0x68] sm:$0xff]
        %v2248 = vld [vmem:[#allocation20 + $0x80] sm:$0xff]
        %v2249 = vld [vmem:[#allocation20 + $0x88] sm:$0xff]
        %v2250 = vld [vmem:[#allocation20 + $0xa0] sm:$0xff]
        %v2251 = vld [vmem:[#allocation20 + $0xa8] sm:$0xff]
        %v2252 = vld [vmem:[#allocation20 + $0xc0] sm:$0xff]
        %v2253 = vld [vmem:[#allocation20 + $0xc8] sm:$0xff]
        %v2254 = vld [vmem:[#allocation20 + $0xe0] sm:$0xff]
        %v2255 = vld [vmem:[#allocation20 + $0xe8] sm:$0xff]
        %v2256 = vld [vmem:[#allocation20 + $0x100] sm:$0xff]
        %v2257 = vld [vmem:[#allocation20 + $0x108] sm:$0xff]
        %v2258 = vld [vmem:[#allocation20 + $0x120] sm:$0xff]
        %v2259 = vld [vmem:[#allocation20 + $0x128] sm:$0xff]
        %v2260 = vld [vmem:[#allocation20 + $0x140] sm:$0xff]
        %v2261 = vld [vmem:[#allocation20 + $0x148] sm:$0xff]
        %v2262 = vld [vmem:[#allocation20 + $0x160] sm:$0xff]
        %v2263 = vld [vmem:[#allocation20 + $0x168] sm:$0xff]
        %v2264 = vld [vmem:[#allocation20 + $0x180] sm:$0xff]
        %v2265 = vld [vmem:[#allocation20 + $0x188] sm:$0xff]
        %v2266 = vld [vmem:[#allocation20 + $0x1a0] sm:$0xff]
        %v2267 = vld [vmem:[#allocation20 + $0x1a8] sm:$0xff]
        %v2268 = vld [vmem:[#allocation20 + $0x1c0] sm:$0xff]
        %v2269 = vld [vmem:[#allocation20 + $0x1c8] sm:$0xff]
        %v2270 = vld [vmem:[#allocation20 + $0x1e0] sm:$0xff]
        %v2271 = vld [vmem:[#allocation20 + $0x1e8] sm:$0xff]
        %v2272 = vld [vmem:[#allocation20 + $0x200] sm:$0xff]
        %v2273 = vld [vmem:[#allocation20 + $0x208] sm:$0xff]
        %v2274 = vld [vmem:[#allocation20 + $0x220] sm:$0xff]
        %v2275 = vld [vmem:[#allocation20 + $0x228] sm:$0xff]
        %v2276 = vld [vmem:[#allocation20 + $0x240] sm:$0xff]
        %v2277 = vld [vmem:[#allocation20 + $0x248] sm:$0xff]
        %v2278 = vld [vmem:[#allocation20 + $0x260] sm:$0xff]
        %v2279 = vld [vmem:[#allocation20 + $0x268] sm:$0xff]
        %v2280 = vld [vmem:[#allocation20 + $0x280] sm:$0xff]
        %v2281 = vld [vmem:[#allocation20 + $0x288] sm:$0xff]
        %v2282 = vld [vmem:[#allocation20 + $0x2a0] sm:$0xff]
        %v2283 = vld [vmem:[#allocation20 + $0x2a8] sm:$0xff]
        %v2284 = vld [vmem:[#allocation20 + $0x2c0] sm:$0xff]
        %v2285 = vld [vmem:[#allocation20 + $0x2c8] sm:$0xff]
        %v2286 = vld [vmem:[#allocation20 + $0x2e0] sm:$0xff]
        %v2287 = vld [vmem:[#allocation20 + $0x2e8] sm:$0xff]
        %v2288 = vld [vmem:[#allocation20 + $0x300] sm:$0xff]
        %v2289 = vld [vmem:[#allocation20 + $0x308] sm:$0xff]
        %v2290 = vld [vmem:[#allocation20 + $0x320] sm:$0xff]
        %v2291 = vld [vmem:[#allocation20 + $0x328] sm:$0xff]
        %v2292 = vld [vmem:[#allocation20 + $0x340] sm:$0xff]
        %v2293 = vld [vmem:[#allocation20 + $0x348] sm:$0xff]
        %v2294 = vld [vmem:[#allocation20 + $0x360] sm:$0xff]
        %v2295 = vld [vmem:[#allocation20 + $0x368] sm:$0xff]
        %v2296 = vld [vmem:[#allocation20 + $0x380] sm:$0xff]
        %v2297 = vld [vmem:[#allocation20 + $0x388] sm:$0xff]
        %v2298 = vld [vmem:[#allocation20 + $0x3a0] sm:$0xff]
        %v2299 = vld [vmem:[#allocation20 + $0x3a8] sm:$0xff]
        %v2300 = vld [vmem:[#allocation20 + $0x3c0] sm:$0xff]
        %v2301 = vld [vmem:[#allocation20 + $0x3c8] sm:$0xff]
        %v2302 = vld [vmem:[#allocation20 + $0x3e0] sm:$0xff]
        %v2303 = vld [vmem:[#allocation20 + $0x3e8] sm:$0xff]
        %v2304 = vld [vmem:[%s15] sm:$0xf]
        %v2306 = vperm.slane %v2304, 0
        %v2307 = vperm.slane %v2304, 1
        %v2308 = vperm.slane %v2304, 2
        %v2309 = vperm.slane %v2304, 3
        %v2378 = vunpack.c.l.b16 %v2240
        %v2379 = vunpack.c.h.b16 %v2240
        %v2380 = vunpack.c.l.b16 %v2241
        %v2381 = vunpack.c.h.b16 %v2241
        %v2382 = vunpack.c.l.b16 %v2242
        %v2383 = vunpack.c.h.b16 %v2242
        %v2384 = vunpack.c.l.b16 %v2243
        %v2385 = vunpack.c.h.b16 %v2243
        %v2386 = vunpack.c.l.b16 %v2244
        %v2387 = vunpack.c.h.b16 %v2244
        %v2388 = vunpack.c.l.b16 %v2245
        %v2389 = vunpack.c.h.b16 %v2245
        %v2390 = vunpack.c.l.b16 %v2246
        %v2391 = vunpack.c.h.b16 %v2246
        %v2392 = vunpack.c.l.b16 %v2247
        %v2393 = vunpack.c.h.b16 %v2247
        %v2394 = vunpack.c.l.b16 %v2248
        %v2395 = vunpack.c.h.b16 %v2248
        %v2396 = vunpack.c.l.b16 %v2249
        %v2397 = vunpack.c.h.b16 %v2249
        %v2398 = vunpack.c.l.b16 %v2250
        %v2399 = vunpack.c.h.b16 %v2250
        %v2400 = vunpack.c.l.b16 %v2251
        %v2401 = vunpack.c.h.b16 %v2251
        %v2402 = vunpack.c.l.b16 %v2252
        %v2403 = vunpack.c.h.b16 %v2252
        %v2404 = vunpack.c.l.b16 %v2253
        %v2405 = vunpack.c.h.b16 %v2253
        %v2406 = vunpack.c.l.b16 %v2254
        %v2407 = vunpack.c.h.b16 %v2254
        %v2408 = vunpack.c.l.b16 %v2255
        %v2409 = vunpack.c.h.b16 %v2255
        %v2410 = vunpack.c.l.b16 %v2256
        %v2411 = vunpack.c.h.b16 %v2256
        %v2412 = vunpack.c.l.b16 %v2257
        %v2413 = vunpack.c.h.b16 %v2257
        %v2414 = vunpack.c.l.b16 %v2258
        %v2415 = vunpack.c.h.b16 %v2258
        %v2416 = vunpack.c.l.b16 %v2259
        %v2417 = vunpack.c.h.b16 %v2259
        %v2418 = vunpack.c.l.b16 %v2260
        %v2419 = vunpack.c.h.b16 %v2260
        %v2420 = vunpack.c.l.b16 %v2261
        %v2421 = vunpack.c.h.b16 %v2261
        %v2422 = vunpack.c.l.b16 %v2262
        %v2423 = vunpack.c.h.b16 %v2262
        %v2424 = vunpack.c.l.b16 %v2263
        %v2425 = vunpack.c.h.b16 %v2263
        %v2426 = vunpack.c.l.b16 %v2264
        %v2427 = vunpack.c.h.b16 %v2264
        %v2428 = vunpack.c.l.b16 %v2265
        %v2429 = vunpack.c.h.b16 %v2265
        %v2430 = vunpack.c.l.b16 %v2266
        %v2431 = vunpack.c.h.b16 %v2266
        %v2432 = vunpack.c.l.b16 %v2267
        %v2433 = vunpack.c.h.b16 %v2267
        %v2434 = vunpack.c.l.b16 %v2268
        %v2435 = vunpack.c.h.b16 %v2268
        %v2436 = vunpack.c.l.b16 %v2269
        %v2437 = vunpack.c.h.b16 %v2269
        %v2438 = vunpack.c.l.b16 %v2270
        %v2439 = vunpack.c.h.b16 %v2270
        %v2440 = vunpack.c.l.b16 %v2271
        %v2441 = vunpack.c.h.b16 %v2271
        %v2442 = vunpack.c.l.b16 %v2272
        %v2443 = vunpack.c.h.b16 %v2272
        %v2444 = vunpack.c.l.b16 %v2273
        %v2445 = vunpack.c.h.b16 %v2273
        %v2446 = vunpack.c.l.b16 %v2274
        %v2447 = vunpack.c.h.b16 %v2274
        %v2448 = vunpack.c.l.b16 %v2275
        %v2449 = vunpack.c.h.b16 %v2275
        %v2450 = vunpack.c.l.b16 %v2276
        %v2451 = vunpack.c.h.b16 %v2276
        %v2452 = vunpack.c.l.b16 %v2277
        %v2453 = vunpack.c.h.b16 %v2277
        %v2454 = vunpack.c.l.b16 %v2278
        %v2455 = vunpack.c.h.b16 %v2278
        %v2456 = vunpack.c.l.b16 %v2279
        %v2457 = vunpack.c.h.b16 %v2279
        %v2458 = vunpack.c.l.b16 %v2280
        %v2459 = vunpack.c.h.b16 %v2280
        %v2460 = vunpack.c.l.b16 %v2281
        %v2461 = vunpack.c.h.b16 %v2281
        %v2462 = vunpack.c.l.b16 %v2282
        %v2463 = vunpack.c.h.b16 %v2282
        %v2464 = vunpack.c.l.b16 %v2283
        %v2465 = vunpack.c.h.b16 %v2283
        %v2466 = vunpack.c.l.b16 %v2284
        %v2467 = vunpack.c.h.b16 %v2284
        %v2468 = vunpack.c.l.b16 %v2285
        %v2469 = vunpack.c.h.b16 %v2285
        %v2470 = vunpack.c.l.b16 %v2286
        %v2471 = vunpack.c.h.b16 %v2286
        %v2472 = vunpack.c.l.b16 %v2287
        %v2473 = vunpack.c.h.b16 %v2287
        %v2474 = vunpack.c.l.b16 %v2288
        %v2475 = vunpack.c.h.b16 %v2288
        %v2476 = vunpack.c.l.b16 %v2289
        %v2477 = vunpack.c.h.b16 %v2289
        %v2478 = vunpack.c.l.b16 %v2290
        %v2479 = vunpack.c.h.b16 %v2290
        %v2480 = vunpack.c.l.b16 %v2291
        %v2481 = vunpack.c.h.b16 %v2291
        %v2482 = vunpack.c.l.b16 %v2292
        %v2483 = vunpack.c.h.b16 %v2292
        %v2484 = vunpack.c.l.b16 %v2293
        %v2485 = vunpack.c.h.b16 %v2293
        %v2486 = vunpack.c.l.b16 %v2294
        %v2487 = vunpack.c.h.b16 %v2294
        %v2488 = vunpack.c.l.b16 %v2295
        %v2489 = vunpack.c.h.b16 %v2295
        %v2490 = vunpack.c.l.b16 %v2296
        %v2491 = vunpack.c.h.b16 %v2296
        %v2492 = vunpack.c.l.b16 %v2297
        %v2493 = vunpack.c.h.b16 %v2297
        %v2494 = vunpack.c.l.b16 %v2298
        %v2495 = vunpack.c.h.b16 %v2298
        %v2496 = vunpack.c.l.b16 %v2299
        %v2497 = vunpack.c.h.b16 %v2299
        %v2498 = vunpack.c.l.b16 %v2300
        %v2499 = vunpack.c.h.b16 %v2300
        %v2500 = vunpack.c.l.b16 %v2301
        %v2501 = vunpack.c.h.b16 %v2301
        %v2502 = vunpack.c.l.b16 %v2302
        %v2503 = vunpack.c.h.b16 %v2302
        %v2504 = vunpack.c.l.b16 %v2303
        %v2505 = vunpack.c.h.b16 %v2303
        %v2506 = vpack.c.b16 %v2382, %v2378
        %v2507 = vpack.c.b16 %v2383, %v2379
        %v2508 = vpack.c.b16 %v2384, %v2380
        %v2509 = vpack.c.b16 %v2385, %v2381
        %v2510 = vpack.c.b16 %v2390, %v2386
        %v2511 = vpack.c.b16 %v2391, %v2387
        %v2512 = vpack.c.b16 %v2392, %v2388
        %v2513 = vpack.c.b16 %v2393, %v2389
        %v2514 = vpack.c.b16 %v2398, %v2394
        %v2515 = vpack.c.b16 %v2399, %v2395
        %v2516 = vpack.c.b16 %v2400, %v2396
        %v2517 = vpack.c.b16 %v2401, %v2397
        %v2518 = vpack.c.b16 %v2406, %v2402
        %v2519 = vpack.c.b16 %v2407, %v2403
        %v2520 = vpack.c.b16 %v2408, %v2404
        %v2521 = vpack.c.b16 %v2409, %v2405
        %v2522 = vpack.c.b16 %v2414, %v2410
        %v2523 = vpack.c.b16 %v2415, %v2411
        %v2524 = vpack.c.b16 %v2416, %v2412
        %v2525 = vpack.c.b16 %v2417, %v2413
        %v2526 = vpack.c.b16 %v2422, %v2418
        %v2527 = vpack.c.b16 %v2423, %v2419
        %v2528 = vpack.c.b16 %v2424, %v2420
        %v2529 = vpack.c.b16 %v2425, %v2421
        %v2530 = vpack.c.b16 %v2430, %v2426
        %v2531 = vpack.c.b16 %v2431, %v2427
        %v2532 = vpack.c.b16 %v2432, %v2428
        %v2533 = vpack.c.b16 %v2433, %v2429
        %v2534 = vpack.c.b16 %v2438, %v2434
        %v2535 = vpack.c.b16 %v2439, %v2435
        %v2536 = vpack.c.b16 %v2440, %v2436
        %v2537 = vpack.c.b16 %v2441, %v2437
        %v2538 = vpack.c.b16 %v2446, %v2442
        %v2539 = vpack.c.b16 %v2447, %v2443
        %v2540 = vpack.c.b16 %v2448, %v2444
        %v2541 = vpack.c.b16 %v2449, %v2445
        %v2542 = vpack.c.b16 %v2454, %v2450
        %v2543 = vpack.c.b16 %v2455, %v2451
        %v2544 = vpack.c.b16 %v2456, %v2452
        %v2545 = vpack.c.b16 %v2457, %v2453
        %v2546 = vpack.c.b16 %v2462, %v2458
        %v2547 = vpack.c.b16 %v2463, %v2459
        %v2548 = vpack.c.b16 %v2464, %v2460
        %v2549 = vpack.c.b16 %v2465, %v2461
        %v2550 = vpack.c.b16 %v2470, %v2466
        %v2551 = vpack.c.b16 %v2471, %v2467
        %v2552 = vpack.c.b16 %v2472, %v2468
        %v2553 = vpack.c.b16 %v2473, %v2469
        %v2554 = vpack.c.b16 %v2478, %v2474
        %v2555 = vpack.c.b16 %v2479, %v2475
        %v2556 = vpack.c.b16 %v2480, %v2476
        %v2557 = vpack.c.b16 %v2481, %v2477
        %v2558 = vpack.c.b16 %v2486, %v2482
        %v2559 = vpack.c.b16 %v2487, %v2483
        %v2560 = vpack.c.b16 %v2488, %v2484
        %v2561 = vpack.c.b16 %v2489, %v2485
        %v2562 = vpack.c.b16 %v2494, %v2490
        %v2563 = vpack.c.b16 %v2495, %v2491
        %v2564 = vpack.c.b16 %v2496, %v2492
        %v2565 = vpack.c.b16 %v2497, %v2493
        %v2566 = vpack.c.b16 %v2502, %v2498
        %v2567 = vpack.c.b16 %v2503, %v2499
        %v2568 = vpack.c.b16 %v2504, %v2500
        %v2569 = vpack.c.b16 %v2505, %v2501
        %2634 = vmatpush.bf16.msra.mxu0 %v2534
        %2635 = vmatpush.bf16.msra.mxu0 %v2530
        %2636 = vmatpush.bf16.msra.mxu0 %v2526
        %2637 = vmatpush.bf16.msra.mxu0 %v2522
        %2638 = vmatpush.bf16.msra.mxu0 %v2518
        %2639 = vmatpush.bf16.msra.mxu0 %v2514
        %2640 = vmatpush.bf16.msra.mxu0 %v2510
        %2641 = vmatpush.bf16.msra.mxu0 %v2506
        %2642 = vmatmul.bf16.gmra.mxu0 %v2238
        %v2643 = vpop.f32.mrf.mxu0
        %v2644 = vadd.f32 %v2306, %v2643
        %v2645 = vpop.f32.mrf.mxu0
        %2646 = vdwg.mxu0
        %2647 = vmatpush.bf16.msra.mxu0 %v2566
        %2648 = vmatpush.bf16.msra.mxu0 %v2562
        %2649 = vmatpush.bf16.msra.mxu0 %v2558
        %2650 = vmatpush.bf16.msra.mxu0 %v2554
        %2651 = vmatpush.bf16.msra.mxu0 %v2550
        %2652 = vmatpush.bf16.msra.mxu0 %v2546
        %2653 = vmatpush.bf16.msra.mxu0 %v2542
        %2654 = vmatpush.bf16.msra.mxu0 %v2538
        %2655 = vmatmul.bf16.gmra.mxu0 %v2239
        %v2656 = vpop.f32.mrf.mxu0
        %v2657 = vadd.f32 %v2644, %v2656
        %v2658 = vpop.f32.mrf.mxu0
        %2659 = vdwg.mxu0
        %2660 = vmatpush.bf16.msra.mxu0 %v2535
        %2661 = vmatpush.bf16.msra.mxu0 %v2531
        %2662 = vmatpush.bf16.msra.mxu0 %v2527
        %2663 = vmatpush.bf16.msra.mxu0 %v2523
        %2664 = vmatpush.bf16.msra.mxu0 %v2519
        %2665 = vmatpush.bf16.msra.mxu0 %v2515
        %2666 = vmatpush.bf16.msra.mxu0 %v2511
        %2667 = vmatpush.bf16.msra.mxu0 %v2507
        %2668 = vmatmul.bf16.gmra.mxu0 %v2238
        %v2669 = vpop.f32.mrf.mxu0
        %v2670 = vadd.f32 %v2307, %v2669
        %v2671 = vpop.f32.mrf.mxu0
        %2672 = vdwg.mxu0
        %2673 = vmatpush.bf16.msra.mxu0 %v2567
        %2674 = vmatpush.bf16.msra.mxu0 %v2563
        %2675 = vmatpush.bf16.msra.mxu0 %v2559
        %2676 = vmatpush.bf16.msra.mxu0 %v2555
        %2677 = vmatpush.bf16.msra.mxu0 %v2551
        %2678 = vmatpush.bf16.msra.mxu0 %v2547
        %2679 = vmatpush.bf16.msra.mxu0 %v2543
        %2680 = vmatpush.bf16.msra.mxu0 %v2539
        %2681 = vmatmul.bf16.gmra.mxu0 %v2239
        %v2682 = vpop.f32.mrf.mxu0
        %v2683 = vadd.f32 %v2670, %v2682
        %v2684 = vpop.f32.mrf.mxu0
        %2685 = vdwg.mxu0
        %2686 = vmatpush.bf16.msra.mxu0 %v2536
        %2687 = vmatpush.bf16.msra.mxu0 %v2532
        %2688 = vmatpush.bf16.msra.mxu0 %v2528
        %2689 = vmatpush.bf16.msra.mxu0 %v2524
        %2690 = vmatpush.bf16.msra.mxu0 %v2520
        %2691 = vmatpush.bf16.msra.mxu0 %v2516
        %2692 = vmatpush.bf16.msra.mxu0 %v2512
        %2693 = vmatpush.bf16.msra.mxu0 %v2508
        %2694 = vmatmul.bf16.gmra.mxu0 %v2238
        %v2695 = vpop.f32.mrf.mxu0
        %v2696 = vadd.f32 %v2308, %v2695
        %v2697 = vpop.f32.mrf.mxu0
        %2698 = vdwg.mxu0
        %2699 = vmatpush.bf16.msra.mxu0 %v2568
        %2700 = vmatpush.bf16.msra.mxu0 %v2564
        %2701 = vmatpush.bf16.msra.mxu0 %v2560
        %2702 = vmatpush.bf16.msra.mxu0 %v2556
        %2703 = vmatpush.bf16.msra.mxu0 %v2552
        %2704 = vmatpush.bf16.msra.mxu0 %v2548
        %2705 = vmatpush.bf16.msra.mxu0 %v2544
        %2706 = vmatpush.bf16.msra.mxu0 %v2540
        %2707 = vmatmul.bf16.gmra.mxu0 %v2239
        %v2708 = vpop.f32.mrf.mxu0
        %v2709 = vadd.f32 %v2696, %v2708
        %v2710 = vpop.f32.mrf.mxu0
        %2711 = vdwg.mxu0
        %2712 = vmatpush.bf16.msra.mxu0 %v2537
        %2713 = vmatpush.bf16.msra.mxu0 %v2533
        %2714 = vmatpush.bf16.msra.mxu0 %v2529
        %2715 = vmatpush.bf16.msra.mxu0 %v2525
        %2716 = vmatpush.bf16.msra.mxu0 %v2521
        %2717 = vmatpush.bf16.msra.mxu0 %v2517
        %2718 = vmatpush.bf16.msra.mxu0 %v2513
        %2719 = vmatpush.bf16.msra.mxu0 %v2509
        %2720 = vmatmul.bf16.gmra.mxu0 %v2238
        %v2721 = vpop.f32.mrf.mxu0
        %v2722 = vadd.f32 %v2309, %v2721
        %v2723 = vpop.f32.mrf.mxu0
        %2724 = vdwg.mxu0
        %2725 = vmatpush.bf16.msra.mxu0 %v2569
        %2726 = vmatpush.bf16.msra.mxu0 %v2565
        %2727 = vmatpush.bf16.msra.mxu0 %v2561
        %2728 = vmatpush.bf16.msra.mxu0 %v2557
        %2729 = vmatpush.bf16.msra.mxu0 %v2553
        %2730 = vmatpush.bf16.msra.mxu0 %v2549
        %2731 = vmatpush.bf16.msra.mxu0 %v2545
        %2732 = vmatpush.bf16.msra.mxu0 %v2541
        %2733 = vmatmul.bf16.gmra.mxu0 %v2239
        %v2734 = vpop.f32.mrf.mxu0
        %v2735 = vadd.f32 %v2722, %v2734
        %v2736 = vpop.f32.mrf.mxu0
        %2737 = vdwg.mxu0
        %v2738 = vmul.f32 %v2657, 0.5
        %v2739 = vmul.f32 %v2683, 0.5
        %v2740 = vmul.f32 %v2709, 0.5
        %v2741 = vmul.f32 %v2735, 0.5
        %v2742 = vmul.f32 %v2657, 0.70710677
        %v2743 = vmul.f32 %v2683, 0.70710677
        %v2744 = vmul.f32 %v2709, 0.70710677
        %v2745 = vmul.f32 %v2735, 0.70710677
        %v2746 = vmul.f32 %v2742, %v2742
        %v2747 = vmin.f32 16.0, %v2746
        %v2748 = vmul.f32 %v2747, 2.1237322e-06
        %v2749 = vadd.f32 %v2748, 0.00028619796
        %v2750 = vmul.f32 %v2747, %v2749
        %v2751 = vadd.f32 %v2750, 0.0036580483
        %v2752 = vmul.f32 %v2747, %v2751
        %v2753 = vadd.f32 %v2752, 0.05243302
        %v2754 = vmul.f32 %v2747, %v2753
        %v2755 = vadd.f32 %v2754, 0.18741608
        %v2756 = vmul.f32 %v2747, %v2755
        %v2757 = vadd.f32 %v2756, 1.1283791
        %v2758 = vmul.f32 %v2742, %v2757
        %v2759 = vmul.f32 %v2747, 3.8918573e-05
        %v2760 = vadd.f32 %v2759, 0.001143296
        %v2761 = vmul.f32 %v2747, %v2760
        %v2762 = vadd.f32 %v2761, 0.014752088
        %v2763 = vmul.f32 %v2747, %v2762
        %v2764 = vadd.f32 %v2763, 0.112945676
        %v2765 = vmul.f32 %v2747, %v2764
        %v2766 = vadd.f32 %v2765, 0.4994258
        %v2767 = vmul.f32 %v2747, %v2766
        %v2768 = vadd.f32 %v2767, 1.0
        %v2769 = vrcp.pop %v2768
        %v2770 = vmul.f32 %v2768, %v2769
        %v2771 = vsub.f32 1.0, %v2770
        %v2772 = vmul.f32 %v2769, %v2771
        %v2773 = vadd.f32 %v2769, %v2772
        %vm2774 = vweird.f32 %v2768
        %vm2775 = vweird.f32 %v2769
        %vm2776 = vmor %vm2774, %vm2775
        %v2777 = vsel %vm2776, %v2769, %v2773
        %v2778 = vand.u32 2147483647, %v2768
        %vm2779 = vcmp.eq.f32.partialorder %v2778, 8.507059e+37
        %v2780 = vand.u32 %v2768, 2147483648
        %v2781 = vor.u32 1.1754944e-38, %v2780
        %v2782 = vsel %vm2779, %v2781, %v2777
        %v2783 = vmul.f32 %v2758, %v2782
        %v2784 = vmin.f32 %v2783, 1.0
        %v2785 = vmax.f32 %v2784, -1.0
        %v2786 = vmul.f32 %v2743, %v2743
        %v2787 = vmin.f32 16.0, %v2786
        %v2788 = vmul.f32 %v2787, 2.1237322e-06
        %v2789 = vadd.f32 %v2788, 0.00028619796
        %v2790 = vmul.f32 %v2787, %v2789
        %v2791 = vadd.f32 %v2790, 0.0036580483
        %v2792 = vmul.f32 %v2787, %v2791
        %v2793 = vadd.f32 %v2792, 0.05243302
        %v2794 = vmul.f32 %v2787, %v2793
        %v2795 = vadd.f32 %v2794, 0.18741608
        %v2796 = vmul.f32 %v2787, %v2795
        %v2797 = vadd.f32 %v2796, 1.1283791
        %v2798 = vmul.f32 %v2743, %v2797
        %v2799 = vmul.f32 %v2787, 3.8918573e-05
        %v2800 = vadd.f32 %v2799, 0.001143296
        %v2801 = vmul.f32 %v2787, %v2800
        %v2802 = vadd.f32 %v2801, 0.014752088
        %v2803 = vmul.f32 %v2787, %v2802
        %v2804 = vadd.f32 %v2803, 0.112945676
        %v2805 = vmul.f32 %v2787, %v2804
        %v2806 = vadd.f32 %v2805, 0.4994258
        %v2807 = vmul.f32 %v2787, %v2806
        %v2808 = vadd.f32 %v2807, 1.0
        %v2809 = vrcp.pop %v2808
        %v2810 = vmul.f32 %v2808, %v2809
        %v2811 = vsub.f32 1.0, %v2810
        %v2812 = vmul.f32 %v2809, %v2811
        %v2813 = vadd.f32 %v2809, %v2812
        %vm2814 = vweird.f32 %v2808
        %vm2815 = vweird.f32 %v2809
        %vm2816 = vmor %vm2814, %vm2815
        %v2817 = vsel %vm2816, %v2809, %v2813
        %v2818 = vand.u32 2147483647, %v2808
        %vm2819 = vcmp.eq.f32.partialorder %v2818, 8.507059e+37
        %v2820 = vand.u32 %v2808, 2147483648
        %v2821 = vor.u32 1.1754944e-38, %v2820
        %v2822 = vsel %vm2819, %v2821, %v2817
        %v2823 = vmul.f32 %v2798, %v2822
        %v2824 = vmin.f32 %v2823, 1.0
        %v2825 = vmax.f32 %v2824, -1.0
        %v2826 = vmul.f32 %v2744, %v2744
        %v2827 = vmin.f32 16.0, %v2826
        %v2828 = vmul.f32 %v2827, 2.1237322e-06
        %v2829 = vadd.f32 %v2828, 0.00028619796
        %v2830 = vmul.f32 %v2827, %v2829
        %v2831 = vadd.f32 %v2830, 0.0036580483
        %v2832 = vmul.f32 %v2827, %v2831
        %v2833 = vadd.f32 %v2832, 0.05243302
        %v2834 = vmul.f32 %v2827, %v2833
        %v2835 = vadd.f32 %v2834, 0.18741608
        %v2836 = vmul.f32 %v2827, %v2835
        %v2837 = vadd.f32 %v2836, 1.1283791
        %v2838 = vmul.f32 %v2744, %v2837
        %v2839 = vmul.f32 %v2827, 3.8918573e-05
        %v2840 = vadd.f32 %v2839, 0.001143296
        %v2841 = vmul.f32 %v2827, %v2840
        %v2842 = vadd.f32 %v2841, 0.014752088
        %v2843 = vmul.f32 %v2827, %v2842
        %v2844 = vadd.f32 %v2843, 0.112945676
        %v2845 = vmul.f32 %v2827, %v2844
        %v2846 = vadd.f32 %v2845, 0.4994258
        %v2847 = vmul.f32 %v2827, %v2846
        %v2848 = vadd.f32 %v2847, 1.0
        %v2849 = vrcp.pop %v2848
        %v2850 = vmul.f32 %v2848, %v2849
        %v2851 = vsub.f32 1.0, %v2850
        %v2852 = vmul.f32 %v2849, %v2851
        %v2853 = vadd.f32 %v2849, %v2852
        %vm2854 = vweird.f32 %v2848
        %vm2855 = vweird.f32 %v2849
        %vm2856 = vmor %vm2854, %vm2855
        %v2857 = vsel %vm2856, %v2849, %v2853
        %v2858 = vand.u32 2147483647, %v2848
        %vm2859 = vcmp.eq.f32.partialorder %v2858, 8.507059e+37
        %v2860 = vand.u32 %v2848, 2147483648
        %v2861 = vor.u32 1.1754944e-38, %v2860
        %v2862 = vsel %vm2859, %v2861, %v2857
        %v2863 = vmul.f32 %v2838, %v2862
        %v2864 = vmin.f32 %v2863, 1.0
        %v2865 = vmax.f32 %v2864, -1.0
        %v2866 = vmul.f32 %v2745, %v2745
        %v2867 = vmin.f32 16.0, %v2866
        %v2868 = vmul.f32 %v2867, 2.1237322e-06
        %v2869 = vadd.f32 %v2868, 0.00028619796
        %v2870 = vmul.f32 %v2867, %v2869
        %v2871 = vadd.f32 %v2870, 0.0036580483
        %v2872 = vmul.f32 %v2867, %v2871
        %v2873 = vadd.f32 %v2872, 0.05243302
        %v2874 = vmul.f32 %v2867, %v2873
        %v2875 = vadd.f32 %v2874, 0.18741608
        %v2876 = vmul.f32 %v2867, %v2875
        %v2877 = vadd.f32 %v2876, 1.1283791
        %v2878 = vmul.f32 %v2745, %v2877
        %v2879 = vmul.f32 %v2867, 3.8918573e-05
        %v2880 = vadd.f32 %v2879, 0.001143296
        %v2881 = vmul.f32 %v2867, %v2880
        %v2882 = vadd.f32 %v2881, 0.014752088
        %v2883 = vmul.f32 %v2867, %v2882
        %v2884 = vadd.f32 %v2883, 0.112945676
        %v2885 = vmul.f32 %v2867, %v2884
        %v2886 = vadd.f32 %v2885, 0.4994258
        %v2887 = vmul.f32 %v2867, %v2886
        %v2888 = vadd.f32 %v2887, 1.0
        %v2889 = vrcp.pop %v2888
        %v2890 = vmul.f32 %v2888, %v2889
        %v2891 = vsub.f32 1.0, %v2890
        %v2892 = vmul.f32 %v2889, %v2891
        %v2893 = vadd.f32 %v2889, %v2892
        %vm2894 = vweird.f32 %v2888
        %vm2895 = vweird.f32 %v2889
        %vm2896 = vmor %vm2894, %vm2895
        %v2897 = vsel %vm2896, %v2889, %v2893
        %v2898 = vand.u32 2147483647, %v2888
        %vm2899 = vcmp.eq.f32.partialorder %v2898, 8.507059e+37
        %v2900 = vand.u32 %v2888, 2147483648
        %v2901 = vor.u32 1.1754944e-38, %v2900
        %v2902 = vsel %vm2899, %v2901, %v2897
        %v2903 = vmul.f32 %v2878, %v2902
        %v2904 = vmin.f32 %v2903, 1.0
        %v2905 = vmax.f32 %v2904, -1.0
        %v2906 = vadd.f32 %v2785, 1.0
        %v2907 = vadd.f32 %v2825, 1.0
        %v2908 = vadd.f32 %v2865, 1.0
        %v2909 = vadd.f32 %v2905, 1.0
        %v2910 = vmul.f32 %v2738, %v2906
        %v2911 = vmul.f32 %v2739, %v2907
        %v2912 = vmul.f32 %v2740, %v2908
        %v2913 = vmul.f32 %v2741, %v2909
        %v2914 = vpack.c.bf16 %v2910, %v2910
        %v2915 = vpack.c.bf16 %v2911, %v2911
        %v2916 = vpack.c.bf16 %v2912, %v2912
        %v2917 = vpack.c.bf16 %v2913, %v2913
        %v2918 = vld [vmem:[#allocation22] sm:$0xff]
        %v2919 = vld [vmem:[#allocation22 + $0x8] sm:$0xff]
        %v2920 = vld [vmem:[#allocation22 + $0x10] sm:$0xff]
        %v2921 = vld [vmem:[#allocation22 + $0x18] sm:$0xff]
        %v2922 = vld [vmem:[#allocation22 + $0x20] sm:$0xff]
        %v2923 = vld [vmem:[#allocation22 + $0x28] sm:$0xff]
        %v2924 = vld [vmem:[#allocation22 + $0x30] sm:$0xff]
        %v2925 = vld [vmem:[#allocation22 + $0x38] sm:$0xff]
        %v2926 = vld [vmem:[#allocation22 + $0x40] sm:$0xff]
        %v2927 = vld [vmem:[#allocation22 + $0x48] sm:$0xff]
        %v2928 = vld [vmem:[#allocation22 + $0x50] sm:$0xff]
        %v2929 = vld [vmem:[#allocation22 + $0x58] sm:$0xff]
        %v2930 = vld [vmem:[#allocation22 + $0x60] sm:$0xff]
        %v2931 = vld [vmem:[#allocation22 + $0x68] sm:$0xff]
        %v2932 = vld [vmem:[#allocation22 + $0x70] sm:$0xff]
        %v2933 = vld [vmem:[#allocation22 + $0x78] sm:$0xff]
        %v2934 = vld [vmem:[#allocation22 + $0x80] sm:$0xff]
        %v2935 = vld [vmem:[#allocation22 + $0x88] sm:$0xff]
        %v2936 = vld [vmem:[#allocation22 + $0x90] sm:$0xff]
        %v2937 = vld [vmem:[#allocation22 + $0x98] sm:$0xff]
        %v2938 = vld [vmem:[#allocation22 + $0xa0] sm:$0xff]
        %v2939 = vld [vmem:[#allocation22 + $0xa8] sm:$0xff]
        %v2940 = vld [vmem:[#allocation22 + $0xb0] sm:$0xff]
        %v2941 = vld [vmem:[#allocation22 + $0xb8] sm:$0xff]
        %v2942 = vld [vmem:[#allocation22 + $0xc0] sm:$0xff]
        %v2943 = vld [vmem:[#allocation22 + $0xc8] sm:$0xff]
        %v2944 = vld [vmem:[#allocation22 + $0xd0] sm:$0xff]
        %v2945 = vld [vmem:[#allocation22 + $0xd8] sm:$0xff]
        %v2946 = vld [vmem:[#allocation22 + $0xe0] sm:$0xff]
        %v2947 = vld [vmem:[#allocation22 + $0xe8] sm:$0xff]
        %v2948 = vld [vmem:[#allocation22 + $0xf0] sm:$0xff]
        %v2949 = vld [vmem:[#allocation22 + $0xf8] sm:$0xff]
        %v2950 = vld [vmem:[#allocation22 + $0x100] sm:$0xff]
        %v2951 = vld [vmem:[#allocation22 + $0x108] sm:$0xff]
        %v2952 = vld [vmem:[#allocation22 + $0x110] sm:$0xff]
        %v2953 = vld [vmem:[#allocation22 + $0x118] sm:$0xff]
        %v2954 = vld [vmem:[#allocation22 + $0x120] sm:$0xff]
        %v2955 = vld [vmem:[#allocation22 + $0x128] sm:$0xff]
        %v2956 = vld [vmem:[#allocation22 + $0x130] sm:$0xff]
        %v2957 = vld [vmem:[#allocation22 + $0x138] sm:$0xff]
        %v2958 = vld [vmem:[#allocation22 + $0x140] sm:$0xff]
        %v2959 = vld [vmem:[#allocation22 + $0x148] sm:$0xff]
        %v2960 = vld [vmem:[#allocation22 + $0x150] sm:$0xff]
        %v2961 = vld [vmem:[#allocation22 + $0x158] sm:$0xff]
        %v2962 = vld [vmem:[#allocation22 + $0x160] sm:$0xff]
        %v2963 = vld [vmem:[#allocation22 + $0x168] sm:$0xff]
        %v2964 = vld [vmem:[#allocation22 + $0x170] sm:$0xff]
        %v2965 = vld [vmem:[#allocation22 + $0x178] sm:$0xff]
        %v2966 = vld [vmem:[#allocation22 + $0x180] sm:$0xff]
        %v2967 = vld [vmem:[#allocation22 + $0x188] sm:$0xff]
        %v2968 = vld [vmem:[#allocation22 + $0x190] sm:$0xff]
        %v2969 = vld [vmem:[#allocation22 + $0x198] sm:$0xff]
        %v2970 = vld [vmem:[#allocation22 + $0x1a0] sm:$0xff]
        %v2971 = vld [vmem:[#allocation22 + $0x1a8] sm:$0xff]
        %v2972 = vld [vmem:[#allocation22 + $0x1b0] sm:$0xff]
        %v2973 = vld [vmem:[#allocation22 + $0x1b8] sm:$0xff]
        %v2974 = vld [vmem:[#allocation22 + $0x1c0] sm:$0xff]
        %v2975 = vld [vmem:[#allocation22 + $0x1c8] sm:$0xff]
        %v2976 = vld [vmem:[#allocation22 + $0x1d0] sm:$0xff]
        %v2977 = vld [vmem:[#allocation22 + $0x1d8] sm:$0xff]
        %v2978 = vld [vmem:[#allocation22 + $0x1e0] sm:$0xff]
        %v2979 = vld [vmem:[#allocation22 + $0x1e8] sm:$0xff]
        %v2980 = vld [vmem:[#allocation22 + $0x1f0] sm:$0xff]
        %v2981 = vld [vmem:[#allocation22 + $0x1f8] sm:$0xff]
        %v2982 = vld [vmem:[#allocation20 + $0x10] sm:$0xff]
        %v2983 = vld [vmem:[#allocation20 + $0x18] sm:$0xff]
        %v2984 = vld [vmem:[#allocation20 + $0x30] sm:$0xff]
        %v2985 = vld [vmem:[#allocation20 + $0x38] sm:$0xff]
        %v2986 = vld [vmem:[#allocation20 + $0x50] sm:$0xff]
        %v2987 = vld [vmem:[#allocation20 + $0x58] sm:$0xff]
        %v2988 = vld [vmem:[#allocation20 + $0x70] sm:$0xff]
        %v2989 = vld [vmem:[#allocation20 + $0x78] sm:$0xff]
        %v2990 = vld [vmem:[#allocation20 + $0x90] sm:$0xff]
        %v2991 = vld [vmem:[#allocation20 + $0x98] sm:$0xff]
        %v2992 = vld [vmem:[#allocation20 + $0xb0] sm:$0xff]
        %v2993 = vld [vmem:[#allocation20 + $0xb8] sm:$0xff]
        %v2994 = vld [vmem:[#allocation20 + $0xd0] sm:$0xff]
        %v2995 = vld [vmem:[#allocation20 + $0xd8] sm:$0xff]
        %v2996 = vld [vmem:[#allocation20 + $0xf0] sm:$0xff]
        %v2997 = vld [vmem:[#allocation20 + $0xf8] sm:$0xff]
        %v2998 = vld [vmem:[#allocation20 + $0x110] sm:$0xff]
        %v2999 = vld [vmem:[#allocation20 + $0x118] sm:$0xff]
        %v3000 = vld [vmem:[#allocation20 + $0x130] sm:$0xff]
        %v3001 = vld [vmem:[#allocation20 + $0x138] sm:$0xff]
        %v3002 = vld [vmem:[#allocation20 + $0x150] sm:$0xff]
        %v3003 = vld [vmem:[#allocation20 + $0x158] sm:$0xff]
        %v3004 = vld [vmem:[#allocation20 + $0x170] sm:$0xff]
        %v3005 = vld [vmem:[#allocation20 + $0x178] sm:$0xff]
        %v3006 = vld [vmem:[#allocation20 + $0x190] sm:$0xff]
        %v3007 = vld [vmem:[#allocation20 + $0x198] sm:$0xff]
        %v3008 = vld [vmem:[#allocation20 + $0x1b0] sm:$0xff]
        %v3009 = vld [vmem:[#allocation20 + $0x1b8] sm:$0xff]
        %v3010 = vld [vmem:[#allocation20 + $0x1d0] sm:$0xff]
        %v3011 = vld [vmem:[#allocation20 + $0x1d8] sm:$0xff]
        %v3012 = vld [vmem:[#allocation20 + $0x1f0] sm:$0xff]
        %v3013 = vld [vmem:[#allocation20 + $0x1f8] sm:$0xff]
        %v3014 = vld [vmem:[#allocation20 + $0x210] sm:$0xff]
        %v3015 = vld [vmem:[#allocation20 + $0x218] sm:$0xff]
        %v3016 = vld [vmem:[#allocation20 + $0x230] sm:$0xff]
        %v3017 = vld [vmem:[#allocation20 + $0x238] sm:$0xff]
        %v3018 = vld [vmem:[#allocation20 + $0x250] sm:$0xff]
        %v3019 = vld [vmem:[#allocation20 + $0x258] sm:$0xff]
        %v3020 = vld [vmem:[#allocation20 + $0x270] sm:$0xff]
        %v3021 = vld [vmem:[#allocation20 + $0x278] sm:$0xff]
        %v3022 = vld [vmem:[#allocation20 + $0x290] sm:$0xff]
        %v3023 = vld [vmem:[#allocation20 + $0x298] sm:$0xff]
        %v3024 = vld [vmem:[#allocation20 + $0x2b0] sm:$0xff]
        %v3025 = vld [vmem:[#allocation20 + $0x2b8] sm:$0xff]
        %v3026 = vld [vmem:[#allocation20 + $0x2d0] sm:$0xff]
        %v3027 = vld [vmem:[#allocation20 + $0x2d8] sm:$0xff]
        %v3028 = vld [vmem:[#allocation20 + $0x2f0] sm:$0xff]
        %v3029 = vld [vmem:[#allocation20 + $0x2f8] sm:$0xff]
        %v3030 = vld [vmem:[#allocation20 + $0x310] sm:$0xff]
        %v3031 = vld [vmem:[#allocation20 + $0x318] sm:$0xff]
        %v3032 = vld [vmem:[#allocation20 + $0x330] sm:$0xff]
        %v3033 = vld [vmem:[#allocation20 + $0x338] sm:$0xff]
        %v3034 = vld [vmem:[#allocation20 + $0x350] sm:$0xff]
        %v3035 = vld [vmem:[#allocation20 + $0x358] sm:$0xff]
        %v3036 = vld [vmem:[#allocation20 + $0x370] sm:$0xff]
        %v3037 = vld [vmem:[#allocation20 + $0x378] sm:$0xff]
        %v3038 = vld [vmem:[#allocation20 + $0x390] sm:$0xff]
        %v3039 = vld [vmem:[#allocation20 + $0x398] sm:$0xff]
        %v3040 = vld [vmem:[#allocation20 + $0x3b0] sm:$0xff]
        %v3041 = vld [vmem:[#allocation20 + $0x3b8] sm:$0xff]
        %v3042 = vld [vmem:[#allocation20 + $0x3d0] sm:$0xff]
        %v3043 = vld [vmem:[#allocation20 + $0x3d8] sm:$0xff]
        %v3044 = vld [vmem:[#allocation20 + $0x3f0] sm:$0xff]
        %v3045 = vld [vmem:[#allocation20 + $0x3f8] sm:$0xff]
        %v3046 = vld [vmem:[%s15 + $0x4] sm:$0xf]
        %v3048 = vperm.slane %v3046, 0
        %v3049 = vperm.slane %v3046, 1
        %v3050 = vperm.slane %v3046, 2
        %v3051 = vperm.slane %v3046, 3
        %v3120 = vunpack.c.l.b16 %v2982
        %v3121 = vunpack.c.h.b16 %v2982
        %v3122 = vunpack.c.l.b16 %v2983
        %v3123 = vunpack.c.h.b16 %v2983
        %v3124 = vunpack.c.l.b16 %v2984
        %v3125 = vunpack.c.h.b16 %v2984
        %v3126 = vunpack.c.l.b16 %v2985
        %v3127 = vunpack.c.h.b16 %v2985
        %v3128 = vunpack.c.l.b16 %v2986
        %v3129 = vunpack.c.h.b16 %v2986
        %v3130 = vunpack.c.l.b16 %v2987
        %v3131 = vunpack.c.h.b16 %v2987
        %v3132 = vunpack.c.l.b16 %v2988
        %v3133 = vunpack.c.h.b16 %v2988
        %v3134 = vunpack.c.l.b16 %v2989
        %v3135 = vunpack.c.h.b16 %v2989
        %v3136 = vunpack.c.l.b16 %v2990
        %v3137 = vunpack.c.h.b16 %v2990
        %v3138 = vunpack.c.l.b16 %v2991
        %v3139 = vunpack.c.h.b16 %v2991
        %v3140 = vunpack.c.l.b16 %v2992
        %v3141 = vunpack.c.h.b16 %v2992
        %v3142 = vunpack.c.l.b16 %v2993
        %v3143 = vunpack.c.h.b16 %v2993
        %v3144 = vunpack.c.l.b16 %v2994
        %v3145 = vunpack.c.h.b16 %v2994
        %v3146 = vunpack.c.l.b16 %v2995
        %v3147 = vunpack.c.h.b16 %v2995
        %v3148 = vunpack.c.l.b16 %v2996
        %v3149 = vunpack.c.h.b16 %v2996
        %v3150 = vunpack.c.l.b16 %v2997
        %v3151 = vunpack.c.h.b16 %v2997
        %v3152 = vunpack.c.l.b16 %v2998
        %v3153 = vunpack.c.h.b16 %v2998
        %v3154 = vunpack.c.l.b16 %v2999
        %v3155 = vunpack.c.h.b16 %v2999
        %v3156 = vunpack.c.l.b16 %v3000
        %v3157 = vunpack.c.h.b16 %v3000
        %v3158 = vunpack.c.l.b16 %v3001
        %v3159 = vunpack.c.h.b16 %v3001
        %v3160 = vunpack.c.l.b16 %v3002
        %v3161 = vunpack.c.h.b16 %v3002
        %v3162 = vunpack.c.l.b16 %v3003
        %v3163 = vunpack.c.h.b16 %v3003
        %v3164 = vunpack.c.l.b16 %v3004
        %v3165 = vunpack.c.h.b16 %v3004
        %v3166 = vunpack.c.l.b16 %v3005
        %v3167 = vunpack.c.h.b16 %v3005
        %v3168 = vunpack.c.l.b16 %v3006
        %v3169 = vunpack.c.h.b16 %v3006
        %v3170 = vunpack.c.l.b16 %v3007
        %v3171 = vunpack.c.h.b16 %v3007
        %v3172 = vunpack.c.l.b16 %v3008
        %v3173 = vunpack.c.h.b16 %v3008
        %v3174 = vunpack.c.l.b16 %v3009
        %v3175 = vunpack.c.h.b16 %v3009
        %v3176 = vunpack.c.l.b16 %v3010
        %v3177 = vunpack.c.h.b16 %v3010
        %v3178 = vunpack.c.l.b16 %v3011
        %v3179 = vunpack.c.h.b16 %v3011
        %v3180 = vunpack.c.l.b16 %v3012
        %v3181 = vunpack.c.h.b16 %v3012
        %v3182 = vunpack.c.l.b16 %v3013
        %v3183 = vunpack.c.h.b16 %v3013
        %v3184 = vunpack.c.l.b16 %v3014
        %v3185 = vunpack.c.h.b16 %v3014
        %v3186 = vunpack.c.l.b16 %v3015
        %v3187 = vunpack.c.h.b16 %v3015
        %v3188 = vunpack.c.l.b16 %v3016
        %v3189 = vunpack.c.h.b16 %v3016
        %v3190 = vunpack.c.l.b16 %v3017
        %v3191 = vunpack.c.h.b16 %v3017
        %v3192 = vunpack.c.l.b16 %v3018
        %v3193 = vunpack.c.h.b16 %v3018
        %v3194 = vunpack.c.l.b16 %v3019
        %v3195 = vunpack.c.h.b16 %v3019
        %v3196 = vunpack.c.l.b16 %v3020
        %v3197 = vunpack.c.h.b16 %v3020
        %v3198 = vunpack.c.l.b16 %v3021
        %v3199 = vunpack.c.h.b16 %v3021
        %v3200 = vunpack.c.l.b16 %v3022
        %v3201 = vunpack.c.h.b16 %v3022
        %v3202 = vunpack.c.l.b16 %v3023
        %v3203 = vunpack.c.h.b16 %v3023
        %v3204 = vunpack.c.l.b16 %v3024
        %v3205 = vunpack.c.h.b16 %v3024
        %v3206 = vunpack.c.l.b16 %v3025
        %v3207 = vunpack.c.h.b16 %v3025
        %v3208 = vunpack.c.l.b16 %v3026
        %v3209 = vunpack.c.h.b16 %v3026
        %v3210 = vunpack.c.l.b16 %v3027
        %v3211 = vunpack.c.h.b16 %v3027
        %v3212 = vunpack.c.l.b16 %v3028
        %v3213 = vunpack.c.h.b16 %v3028
        %v3214 = vunpack.c.l.b16 %v3029
        %v3215 = vunpack.c.h.b16 %v3029
        %v3216 = vunpack.c.l.b16 %v3030
        %v3217 = vunpack.c.h.b16 %v3030
        %v3218 = vunpack.c.l.b16 %v3031
        %v3219 = vunpack.c.h.b16 %v3031
        %v3220 = vunpack.c.l.b16 %v3032
        %v3221 = vunpack.c.h.b16 %v3032
        %v3222 = vunpack.c.l.b16 %v3033
        %v3223 = vunpack.c.h.b16 %v3033
        %v3224 = vunpack.c.l.b16 %v3034
        %v3225 = vunpack.c.h.b16 %v3034
        %v3226 = vunpack.c.l.b16 %v3035
        %v3227 = vunpack.c.h.b16 %v3035
        %v3228 = vunpack.c.l.b16 %v3036
        %v3229 = vunpack.c.h.b16 %v3036
        %v3230 = vunpack.c.l.b16 %v3037
        %v3231 = vunpack.c.h.b16 %v3037
        %v3232 = vunpack.c.l.b16 %v3038
        %v3233 = vunpack.c.h.b16 %v3038
        %v3234 = vunpack.c.l.b16 %v3039
        %v3235 = vunpack.c.h.b16 %v3039
        %v3236 = vunpack.c.l.b16 %v3040
        %v3237 = vunpack.c.h.b16 %v3040
        %v3238 = vunpack.c.l.b16 %v3041
        %v3239 = vunpack.c.h.b16 %v3041
        %v3240 = vunpack.c.l.b16 %v3042
        %v3241 = vunpack.c.h.b16 %v3042
        %v3242 = vunpack.c.l.b16 %v3043
        %v3243 = vunpack.c.h.b16 %v3043
        %v3244 = vunpack.c.l.b16 %v3044
        %v3245 = vunpack.c.h.b16 %v3044
        %v3246 = vunpack.c.l.b16 %v3045
        %v3247 = vunpack.c.h.b16 %v3045
        %v3248 = vpack.c.b16 %v3124, %v3120
        %v3249 = vpack.c.b16 %v3125, %v3121
        %v3250 = vpack.c.b16 %v3126, %v3122
        %v3251 = vpack.c.b16 %v3127, %v3123
        %v3252 = vpack.c.b16 %v3132, %v3128
        %v3253 = vpack.c.b16 %v3133, %v3129
        %v3254 = vpack.c.b16 %v3134, %v3130
        %v3255 = vpack.c.b16 %v3135, %v3131
        %v3256 = vpack.c.b16 %v3140, %v3136
        %v3257 = vpack.c.b16 %v3141, %v3137
        %v3258 = vpack.c.b16 %v3142, %v3138
        %v3259 = vpack.c.b16 %v3143, %v3139
        %v3260 = vpack.c.b16 %v3148, %v3144
        %v3261 = vpack.c.b16 %v3149, %v3145
        %v3262 = vpack.c.b16 %v3150, %v3146
        %v3263 = vpack.c.b16 %v3151, %v3147
        %v3264 = vpack.c.b16 %v3156, %v3152
        %v3265 = vpack.c.b16 %v3157, %v3153
        %v3266 = vpack.c.b16 %v3158, %v3154
        %v3267 = vpack.c.b16 %v3159, %v3155
        %v3268 = vpack.c.b16 %v3164, %v3160
        %v3269 = vpack.c.b16 %v3165, %v3161
        %v3270 = vpack.c.b16 %v3166, %v3162
        %v3271 = vpack.c.b16 %v3167, %v3163
        %v3272 = vpack.c.b16 %v3172, %v3168
        %v3273 = vpack.c.b16 %v3173, %v3169
        %v3274 = vpack.c.b16 %v3174, %v3170
        %v3275 = vpack.c.b16 %v3175, %v3171
        %v3276 = vpack.c.b16 %v3180, %v3176
        %v3277 = vpack.c.b16 %v3181, %v3177
        %v3278 = vpack.c.b16 %v3182, %v3178
        %v3279 = vpack.c.b16 %v3183, %v3179
        %v3280 = vpack.c.b16 %v3188, %v3184
        %v3281 = vpack.c.b16 %v3189, %v3185
        %v3282 = vpack.c.b16 %v3190, %v3186
        %v3283 = vpack.c.b16 %v3191, %v3187
        %v3284 = vpack.c.b16 %v3196, %v3192
        %v3285 = vpack.c.b16 %v3197, %v3193
        %v3286 = vpack.c.b16 %v3198, %v3194
        %v3287 = vpack.c.b16 %v3199, %v3195
        %v3288 = vpack.c.b16 %v3204, %v3200
        %v3289 = vpack.c.b16 %v3205, %v3201
        %v3290 = vpack.c.b16 %v3206, %v3202
        %v3291 = vpack.c.b16 %v3207, %v3203
        %v3292 = vpack.c.b16 %v3212, %v3208
        %v3293 = vpack.c.b16 %v3213, %v3209
        %v3294 = vpack.c.b16 %v3214, %v3210
        %v3295 = vpack.c.b16 %v3215, %v3211
        %v3296 = vpack.c.b16 %v3220, %v3216
        %v3297 = vpack.c.b16 %v3221, %v3217
        %v3298 = vpack.c.b16 %v3222, %v3218
        %v3299 = vpack.c.b16 %v3223, %v3219
        %v3300 = vpack.c.b16 %v3228, %v3224
        %v3301 = vpack.c.b16 %v3229, %v3225
        %v3302 = vpack.c.b16 %v3230, %v3226
        %v3303 = vpack.c.b16 %v3231, %v3227
        %v3304 = vpack.c.b16 %v3236, %v3232
        %v3305 = vpack.c.b16 %v3237, %v3233
        %v3306 = vpack.c.b16 %v3238, %v3234
        %v3307 = vpack.c.b16 %v3239, %v3235
        %v3308 = vpack.c.b16 %v3244, %v3240
        %v3309 = vpack.c.b16 %v3245, %v3241
        %v3310 = vpack.c.b16 %v3246, %v3242
        %v3311 = vpack.c.b16 %v3247, %v3243
        %3376 = vmatpush.bf16.msra.mxu0 %v3276
        %3377 = vmatpush.bf16.msra.mxu0 %v3272
        %3378 = vmatpush.bf16.msra.mxu0 %v3268
        %3379 = vmatpush.bf16.msra.mxu0 %v3264
        %3380 = vmatpush.bf16.msra.mxu0 %v3260
        %3381 = vmatpush.bf16.msra.mxu0 %v3256
        %3382 = vmatpush.bf16.msra.mxu0 %v3252
        %3383 = vmatpush.bf16.msra.mxu0 %v3248
        %3384 = vmatmul.bf16.gmra.mxu0 %v2238
        %v3385 = vpop.f32.mrf.mxu0
        %v3386 = vadd.f32 %v3048, %v3385
        %v3387 = vpop.f32.mrf.mxu0
        %3388 = vdwg.mxu0
        %3389 = vmatpush.bf16.msra.mxu0 %v3308
        %3390 = vmatpush.bf16.msra.mxu0 %v3304
        %3391 = vmatpush.bf16.msra.mxu0 %v3300
        %3392 = vmatpush.bf16.msra.mxu0 %v3296
        %3393 = vmatpush.bf16.msra.mxu0 %v3292
        %3394 = vmatpush.bf16.msra.mxu0 %v3288
        %3395 = vmatpush.bf16.msra.mxu0 %v3284
        %3396 = vmatpush.bf16.msra.mxu0 %v3280
        %3397 = vmatmul.bf16.gmra.mxu0 %v2239
        %v3398 = vpop.f32.mrf.mxu0
        %v3399 = vadd.f32 %v3386, %v3398
        %v3400 = vpop.f32.mrf.mxu0
        %3401 = vdwg.mxu0
        %3402 = vmatpush.bf16.msra.mxu0 %v3277
        %3403 = vmatpush.bf16.msra.mxu0 %v3273
        %3404 = vmatpush.bf16.msra.mxu0 %v3269
        %3405 = vmatpush.bf16.msra.mxu0 %v3265
        %3406 = vmatpush.bf16.msra.mxu0 %v3261
        %3407 = vmatpush.bf16.msra.mxu0 %v3257
        %3408 = vmatpush.bf16.msra.mxu0 %v3253
        %3409 = vmatpush.bf16.msra.mxu0 %v3249
        %3410 = vmatmul.bf16.gmra.mxu0 %v2238
        %v3411 = vpop.f32.mrf.mxu0
        %v3412 = vadd.f32 %v3049, %v3411
        %v3413 = vpop.f32.mrf.mxu0
        %3414 = vdwg.mxu0
        %3415 = vmatpush.bf16.msra.mxu0 %v3309
        %3416 = vmatpush.bf16.msra.mxu0 %v3305
        %3417 = vmatpush.bf16.msra.mxu0 %v3301
        %3418 = vmatpush.bf16.msra.mxu0 %v3297
        %3419 = vmatpush.bf16.msra.mxu0 %v3293
        %3420 = vmatpush.bf16.msra.mxu0 %v3289
        %3421 = vmatpush.bf16.msra.mxu0 %v3285
        %3422 = vmatpush.bf16.msra.mxu0 %v3281
        %3423 = vmatmul.bf16.gmra.mxu0 %v2239
        %v3424 = vpop.f32.mrf.mxu0
        %v3425 = vadd.f32 %v3412, %v3424
        %v3426 = vpop.f32.mrf.mxu0
        %3427 = vdwg.mxu0
        %3428 = vmatpush.bf16.msra.mxu0 %v3278
        %3429 = vmatpush.bf16.msra.mxu0 %v3274
        %3430 = vmatpush.bf16.msra.mxu0 %v3270
        %3431 = vmatpush.bf16.msra.mxu0 %v3266
        %3432 = vmatpush.bf16.msra.mxu0 %v3262
        %3433 = vmatpush.bf16.msra.mxu0 %v3258
        %3434 = vmatpush.bf16.msra.mxu0 %v3254
        %3435 = vmatpush.bf16.msra.mxu0 %v3250
        %3436 = vmatmul.bf16.gmra.mxu0 %v2238
        %v3437 = vpop.f32.mrf.mxu0
        %v3438 = vadd.f32 %v3050, %v3437
        %v3439 = vpop.f32.mrf.mxu0
        %3440 = vdwg.mxu0
        %3441 = vmatpush.bf16.msra.mxu0 %v3310
        %3442 = vmatpush.bf16.msra.mxu0 %v3306
        %3443 = vmatpush.bf16.msra.mxu0 %v3302
        %3444 = vmatpush.bf16.msra.mxu0 %v3298
        %3445 = vmatpush.bf16.msra.mxu0 %v3294
        %3446 = vmatpush.bf16.msra.mxu0 %v3290
        %3447 = vmatpush.bf16.msra.mxu0 %v3286
        %3448 = vmatpush.bf16.msra.mxu0 %v3282
        %3449 = vmatmul.bf16.gmra.mxu0 %v2239
        %v3450 = vpop.f32.mrf.mxu0
        %v3451 = vadd.f32 %v3438, %v3450
        %v3452 = vpop.f32.mrf.mxu0
        %3453 = vdwg.mxu0
        %3454 = vmatpush.bf16.msra.mxu0 %v3279
        %3455 = vmatpush.bf16.msra.mxu0 %v3275
        %3456 = vmatpush.bf16.msra.mxu0 %v3271
        %3457 = vmatpush.bf16.msra.mxu0 %v3267
        %3458 = vmatpush.bf16.msra.mxu0 %v3263
        %3459 = vmatpush.bf16.msra.mxu0 %v3259
        %3460 = vmatpush.bf16.msra.mxu0 %v3255
        %3461 = vmatpush.bf16.msra.mxu0 %v3251
        %3462 = vmatmul.bf16.gmra.mxu0 %v2238
        %v3463 = vpop.f32.mrf.mxu0
        %v3464 = vadd.f32 %v3051, %v3463
        %v3465 = vpop.f32.mrf.mxu0
        %3466 = vdwg.mxu0
        %3467 = vmatpush.bf16.msra.mxu0 %v3311
        %3468 = vmatpush.bf16.msra.mxu0 %v3307
        %3469 = vmatpush.bf16.msra.mxu0 %v3303
        %3470 = vmatpush.bf16.msra.mxu0 %v3299
        %3471 = vmatpush.bf16.msra.mxu0 %v3295
        %3472 = vmatpush.bf16.msra.mxu0 %v3291
        %3473 = vmatpush.bf16.msra.mxu0 %v3287
        %3474 = vmatpush.bf16.msra.mxu0 %v3283
        %3475 = vmatmul.bf16.gmra.mxu0 %v2239
        %v3476 = vpop.f32.mrf.mxu0
        %v3477 = vadd.f32 %v3464, %v3476
        %v3478 = vpop.f32.mrf.mxu0
        %3479 = vdwg.mxu0
        %v3480 = vmul.f32 %v3399, 0.5
        %v3481 = vmul.f32 %v3425, 0.5
        %v3482 = vmul.f32 %v3451, 0.5
        %v3483 = vmul.f32 %v3477, 0.5
        %v3484 = vmul.f32 %v3399, 0.70710677
        %v3485 = vmul.f32 %v3425, 0.70710677
        %v3486 = vmul.f32 %v3451, 0.70710677
        %v3487 = vmul.f32 %v3477, 0.70710677
        %v3488 = vmul.f32 %v3484, %v3484
        %v3489 = vmin.f32 16.0, %v3488
        %v3490 = vmul.f32 %v3489, 2.1237322e-06
        %v3491 = vadd.f32 %v3490, 0.00028619796
        %v3492 = vmul.f32 %v3489, %v3491
        %v3493 = vadd.f32 %v3492, 0.0036580483
        %v3494 = vmul.f32 %v3489, %v3493
        %v3495 = vadd.f32 %v3494, 0.05243302
        %v3496 = vmul.f32 %v3489, %v3495
        %v3497 = vadd.f32 %v3496, 0.18741608
        %v3498 = vmul.f32 %v3489, %v3497
        %v3499 = vadd.f32 %v3498, 1.1283791
        %v3500 = vmul.f32 %v3484, %v3499
        %v3501 = vmul.f32 %v3489, 3.8918573e-05
        %v3502 = vadd.f32 %v3501, 0.001143296
        %v3503 = vmul.f32 %v3489, %v3502
        %v3504 = vadd.f32 %v3503, 0.014752088
        %v3505 = vmul.f32 %v3489, %v3504
        %v3506 = vadd.f32 %v3505, 0.112945676
        %v3507 = vmul.f32 %v3489, %v3506
        %v3508 = vadd.f32 %v3507, 0.4994258
        %v3509 = vmul.f32 %v3489, %v3508
        %v3510 = vadd.f32 %v3509, 1.0
        %v3511 = vrcp.pop %v3510
        %v3512 = vmul.f32 %v3510, %v3511
        %v3513 = vsub.f32 1.0, %v3512
        %v3514 = vmul.f32 %v3511, %v3513
        %v3515 = vadd.f32 %v3511, %v3514
        %vm3516 = vweird.f32 %v3510
        %vm3517 = vweird.f32 %v3511
        %vm3518 = vmor %vm3516, %vm3517
        %v3519 = vsel %vm3518, %v3511, %v3515
        %v3520 = vand.u32 2147483647, %v3510
        %vm3521 = vcmp.eq.f32.partialorder %v3520, 8.507059e+37
        %v3522 = vand.u32 %v3510, 2147483648
        %v3523 = vor.u32 1.1754944e-38, %v3522
        %v3524 = vsel %vm3521, %v3523, %v3519
        %v3525 = vmul.f32 %v3500, %v3524
        %v3526 = vmin.f32 %v3525, 1.0
        %v3527 = vmax.f32 %v3526, -1.0
        %v3528 = vmul.f32 %v3485, %v3485
        %v3529 = vmin.f32 16.0, %v3528
        %v3530 = vmul.f32 %v3529, 2.1237322e-06
        %v3531 = vadd.f32 %v3530, 0.00028619796
        %v3532 = vmul.f32 %v3529, %v3531
        %v3533 = vadd.f32 %v3532, 0.0036580483
        %v3534 = vmul.f32 %v3529, %v3533
        %v3535 = vadd.f32 %v3534, 0.05243302
        %v3536 = vmul.f32 %v3529, %v3535
        %v3537 = vadd.f32 %v3536, 0.18741608
        %v3538 = vmul.f32 %v3529, %v3537
        %v3539 = vadd.f32 %v3538, 1.1283791
        %v3540 = vmul.f32 %v3485, %v3539
        %v3541 = vmul.f32 %v3529, 3.8918573e-05
        %v3542 = vadd.f32 %v3541, 0.001143296
        %v3543 = vmul.f32 %v3529, %v3542
        %v3544 = vadd.f32 %v3543, 0.014752088
        %v3545 = vmul.f32 %v3529, %v3544
        %v3546 = vadd.f32 %v3545, 0.112945676
        %v3547 = vmul.f32 %v3529, %v3546
        %v3548 = vadd.f32 %v3547, 0.4994258
        %v3549 = vmul.f32 %v3529, %v3548
        %v3550 = vadd.f32 %v3549, 1.0
        %v3551 = vrcp.pop %v3550
        %v3552 = vmul.f32 %v3550, %v3551
        %v3553 = vsub.f32 1.0, %v3552
        %v3554 = vmul.f32 %v3551, %v3553
        %v3555 = vadd.f32 %v3551, %v3554
        %vm3556 = vweird.f32 %v3550
        %vm3557 = vweird.f32 %v3551
        %vm3558 = vmor %vm3556, %vm3557
        %v3559 = vsel %vm3558, %v3551, %v3555
        %v3560 = vand.u32 2147483647, %v3550
        %vm3561 = vcmp.eq.f32.partialorder %v3560, 8.507059e+37
        %v3562 = vand.u32 %v3550, 2147483648
        %v3563 = vor.u32 1.1754944e-38, %v3562
        %v3564 = vsel %vm3561, %v3563, %v3559
        %v3565 = vmul.f32 %v3540, %v3564
        %v3566 = vmin.f32 %v3565, 1.0
        %v3567 = vmax.f32 %v3566, -1.0
        %v3568 = vmul.f32 %v3486, %v3486
        %v3569 = vmin.f32 16.0, %v3568
        %v3570 = vmul.f32 %v3569, 2.1237322e-06
        %v3571 = vadd.f32 %v3570, 0.00028619796
        %v3572 = vmul.f32 %v3569, %v3571
        %v3573 = vadd.f32 %v3572, 0.0036580483
        %v3574 = vmul.f32 %v3569, %v3573
        %v3575 = vadd.f32 %v3574, 0.05243302
        %v3576 = vmul.f32 %v3569, %v3575
        %v3577 = vadd.f32 %v3576, 0.18741608
        %v3578 = vmul.f32 %v3569, %v3577
        %v3579 = vadd.f32 %v3578, 1.1283791
        %v3580 = vmul.f32 %v3486, %v3579
        %v3581 = vmul.f32 %v3569, 3.8918573e-05
        %v3582 = vadd.f32 %v3581, 0.001143296
        %v3583 = vmul.f32 %v3569, %v3582
        %v3584 = vadd.f32 %v3583, 0.014752088
        %v3585 = vmul.f32 %v3569, %v3584
        %v3586 = vadd.f32 %v3585, 0.112945676
        %v3587 = vmul.f32 %v3569, %v3586
        %v3588 = vadd.f32 %v3587, 0.4994258
        %v3589 = vmul.f32 %v3569, %v3588
        %v3590 = vadd.f32 %v3589, 1.0
        %v3591 = vrcp.pop %v3590
        %v3592 = vmul.f32 %v3590, %v3591
        %v3593 = vsub.f32 1.0, %v3592
        %v3594 = vmul.f32 %v3591, %v3593
        %v3595 = vadd.f32 %v3591, %v3594
        %vm3596 = vweird.f32 %v3590
        %vm3597 = vweird.f32 %v3591
        %vm3598 = vmor %vm3596, %vm3597
        %v3599 = vsel %vm3598, %v3591, %v3595
        %v3600 = vand.u32 2147483647, %v3590
        %vm3601 = vcmp.eq.f32.partialorder %v3600, 8.507059e+37
        %v3602 = vand.u32 %v3590, 2147483648
        %v3603 = vor.u32 1.1754944e-38, %v3602
        %v3604 = vsel %vm3601, %v3603, %v3599
        %v3605 = vmul.f32 %v3580, %v3604
        %v3606 = vmin.f32 %v3605, 1.0
        %v3607 = vmax.f32 %v3606, -1.0
        %v3608 = vmul.f32 %v3487, %v3487
        %v3609 = vmin.f32 16.0, %v3608
        %v3610 = vmul.f32 %v3609, 2.1237322e-06
        %v3611 = vadd.f32 %v3610, 0.00028619796
        %v3612 = vmul.f32 %v3609, %v3611
        %v3613 = vadd.f32 %v3612, 0.0036580483
        %v3614 = vmul.f32 %v3609, %v3613
        %v3615 = vadd.f32 %v3614, 0.05243302
        %v3616 = vmul.f32 %v3609, %v3615
        %v3617 = vadd.f32 %v3616, 0.18741608
        %v3618 = vmul.f32 %v3609, %v3617
        %v3619 = vadd.f32 %v3618, 1.1283791
        %v3620 = vmul.f32 %v3487, %v3619
        %v3621 = vmul.f32 %v3609, 3.8918573e-05
        %v3622 = vadd.f32 %v3621, 0.001143296
        %v3623 = vmul.f32 %v3609, %v3622
        %v3624 = vadd.f32 %v3623, 0.014752088
        %v3625 = vmul.f32 %v3609, %v3624
        %v3626 = vadd.f32 %v3625, 0.112945676
        %v3627 = vmul.f32 %v3609, %v3626
        %v3628 = vadd.f32 %v3627, 0.4994258
        %v3629 = vmul.f32 %v3609, %v3628
        %v3630 = vadd.f32 %v3629, 1.0
        %v3631 = vrcp.pop %v3630
        %v3632 = vmul.f32 %v3630, %v3631
        %v3633 = vsub.f32 1.0, %v3632
        %v3634 = vmul.f32 %v3631, %v3633
        %v3635 = vadd.f32 %v3631, %v3634
        %vm3636 = vweird.f32 %v3630
        %vm3637 = vweird.f32 %v3631
        %vm3638 = vmor %vm3636, %vm3637
        %v3639 = vsel %vm3638, %v3631, %v3635
        %v3640 = vand.u32 2147483647, %v3630
        %vm3641 = vcmp.eq.f32.partialorder %v3640, 8.507059e+37
        %v3642 = vand.u32 %v3630, 2147483648
        %v3643 = vor.u32 1.1754944e-38, %v3642
        %v3644 = vsel %vm3641, %v3643, %v3639
        %v3645 = vmul.f32 %v3620, %v3644
        %v3646 = vmin.f32 %v3645, 1.0
        %v3647 = vmax.f32 %v3646, -1.0
        %v3648 = vadd.f32 %v3527, 1.0
        %v3649 = vadd.f32 %v3567, 1.0
        %v3650 = vadd.f32 %v3607, 1.0
        %v3651 = vadd.f32 %v3647, 1.0
        %v3652 = vmul.f32 %v3480, %v3648
        %v3653 = vmul.f32 %v3481, %v3649
        %v3654 = vmul.f32 %v3482, %v3650
        %v3655 = vmul.f32 %v3483, %v3651
        %v3656 = vpack.c.bf16 %v3652, %v3652
        %v3657 = vpack.c.bf16 %v3653, %v3653
        %v3658 = vpack.c.bf16 %v3654, %v3654
        %v3659 = vpack.c.bf16 %v3655, %v3655
        %v3660 = vld [vmem:[#allocation22 + $0x200] sm:$0xff]
        %v3661 = vld [vmem:[#allocation22 + $0x208] sm:$0xff]
        %v3662 = vld [vmem:[#allocation22 + $0x210] sm:$0xff]
        %v3663 = vld [vmem:[#allocation22 + $0x218] sm:$0xff]
        %v3664 = vld [vmem:[#allocation22 + $0x220] sm:$0xff]
        %v3665 = vld [vmem:[#allocation22 + $0x228] sm:$0xff]
        %v3666 = vld [vmem:[#allocation22 + $0x230] sm:$0xff]
        %v3667 = vld [vmem:[#allocation22 + $0x238] sm:$0xff]
        %v3668 = vld [vmem:[#allocation22 + $0x240] sm:$0xff]
        %v3669 = vld [vmem:[#allocation22 + $0x248] sm:$0xff]
        %v3670 = vld [vmem:[#allocation22 + $0x250] sm:$0xff]
        %v3671 = vld [vmem:[#allocation22 + $0x258] sm:$0xff]
        %v3672 = vld [vmem:[#allocation22 + $0x260] sm:$0xff]
        %v3673 = vld [vmem:[#allocation22 + $0x268] sm:$0xff]
        %v3674 = vld [vmem:[#allocation22 + $0x270] sm:$0xff]
        %v3675 = vld [vmem:[#allocation22 + $0x278] sm:$0xff]
        %v3676 = vld [vmem:[#allocation22 + $0x280] sm:$0xff]
        %v3677 = vld [vmem:[#allocation22 + $0x288] sm:$0xff]
        %v3678 = vld [vmem:[#allocation22 + $0x290] sm:$0xff]
        %v3679 = vld [vmem:[#allocation22 + $0x298] sm:$0xff]
        %v3680 = vld [vmem:[#allocation22 + $0x2a0] sm:$0xff]
        %v3681 = vld [vmem:[#allocation22 + $0x2a8] sm:$0xff]
        %v3682 = vld [vmem:[#allocation22 + $0x2b0] sm:$0xff]
        %v3683 = vld [vmem:[#allocation22 + $0x2b8] sm:$0xff]
        %v3684 = vld [vmem:[#allocation22 + $0x2c0] sm:$0xff]
        %v3685 = vld [vmem:[#allocation22 + $0x2c8] sm:$0xff]
        %v3686 = vld [vmem:[#allocation22 + $0x2d0] sm:$0xff]
        %v3687 = vld [vmem:[#allocation22 + $0x2d8] sm:$0xff]
        %v3688 = vld [vmem:[#allocation22 + $0x2e0] sm:$0xff]
        %v3689 = vld [vmem:[#allocation22 + $0x2e8] sm:$0xff]
        %v3690 = vld [vmem:[#allocation22 + $0x2f0] sm:$0xff]
        %v3691 = vld [vmem:[#allocation22 + $0x2f8] sm:$0xff]
        %v3692 = vld [vmem:[#allocation22 + $0x300] sm:$0xff]
        %v3693 = vld [vmem:[#allocation22 + $0x308] sm:$0xff]
        %v3694 = vld [vmem:[#allocation22 + $0x310] sm:$0xff]
        %v3695 = vld [vmem:[#allocation22 + $0x318] sm:$0xff]
        %v3696 = vld [vmem:[#allocation22 + $0x320] sm:$0xff]
        %v3697 = vld [vmem:[#allocation22 + $0x328] sm:$0xff]
        %v3698 = vld [vmem:[#allocation22 + $0x330] sm:$0xff]
        %v3699 = vld [vmem:[#allocation22 + $0x338] sm:$0xff]
        %v3700 = vld [vmem:[#allocation22 + $0x340] sm:$0xff]
        %v3701 = vld [vmem:[#allocation22 + $0x348] sm:$0xff]
        %v3702 = vld [vmem:[#allocation22 + $0x350] sm:$0xff]
        %v3703 = vld [vmem:[#allocation22 + $0x358] sm:$0xff]
        %v3704 = vld [vmem:[#allocation22 + $0x360] sm:$0xff]
        %v3705 = vld [vmem:[#allocation22 + $0x368] sm:$0xff]
        %v3706 = vld [vmem:[#allocation22 + $0x370] sm:$0xff]
        %v3707 = vld [vmem:[#allocation22 + $0x378] sm:$0xff]
        %v3708 = vld [vmem:[#allocation22 + $0x380] sm:$0xff]
        %v3709 = vld [vmem:[#allocation22 + $0x388] sm:$0xff]
        %v3710 = vld [vmem:[#allocation22 + $0x390] sm:$0xff]
        %v3711 = vld [vmem:[#allocation22 + $0x398] sm:$0xff]
        %v3712 = vld [vmem:[#allocation22 + $0x3a0] sm:$0xff]
        %v3713 = vld [vmem:[#allocation22 + $0x3a8] sm:$0xff]
        %v3714 = vld [vmem:[#allocation22 + $0x3b0] sm:$0xff]
        %v3715 = vld [vmem:[#allocation22 + $0x3b8] sm:$0xff]
        %v3716 = vld [vmem:[#allocation22 + $0x3c0] sm:$0xff]
        %v3717 = vld [vmem:[#allocation22 + $0x3c8] sm:$0xff]
        %v3718 = vld [vmem:[#allocation22 + $0x3d0] sm:$0xff]
        %v3719 = vld [vmem:[#allocation22 + $0x3d8] sm:$0xff]
        %v3720 = vld [vmem:[#allocation22 + $0x3e0] sm:$0xff]
        %v3721 = vld [vmem:[#allocation22 + $0x3e8] sm:$0xff]
        %v3722 = vld [vmem:[#allocation22 + $0x3f0] sm:$0xff]
        %v3723 = vld [vmem:[#allocation22 + $0x3f8] sm:$0xff]
        %v3788 = vunpack.c.l.b16 %v3660
        %v3789 = vunpack.c.h.b16 %v3660
        %v3790 = vunpack.c.l.b16 %v3661
        %v3791 = vunpack.c.h.b16 %v3661
        %v3792 = vunpack.c.l.b16 %v3662
        %v3793 = vunpack.c.h.b16 %v3662
        %v3794 = vunpack.c.l.b16 %v3663
        %v3795 = vunpack.c.h.b16 %v3663
        %v3796 = vunpack.c.l.b16 %v3664
        %v3797 = vunpack.c.h.b16 %v3664
        %v3798 = vunpack.c.l.b16 %v3665
        %v3799 = vunpack.c.h.b16 %v3665
        %v3800 = vunpack.c.l.b16 %v3666
        %v3801 = vunpack.c.h.b16 %v3666
        %v3802 = vunpack.c.l.b16 %v3667
        %v3803 = vunpack.c.h.b16 %v3667
        %v3804 = vunpack.c.l.b16 %v3668
        %v3805 = vunpack.c.h.b16 %v3668
        %v3806 = vunpack.c.l.b16 %v3669
        %v3807 = vunpack.c.h.b16 %v3669
        %v3808 = vunpack.c.l.b16 %v3670
        %v3809 = vunpack.c.h.b16 %v3670
        %v3810 = vunpack.c.l.b16 %v3671
        %v3811 = vunpack.c.h.b16 %v3671
        %v3812 = vunpack.c.l.b16 %v3672
        %v3813 = vunpack.c.h.b16 %v3672
        %v3814 = vunpack.c.l.b16 %v3673
        %v3815 = vunpack.c.h.b16 %v3673
        %v3816 = vunpack.c.l.b16 %v3674
        %v3817 = vunpack.c.h.b16 %v3674
        %v3818 = vunpack.c.l.b16 %v3675
        %v3819 = vunpack.c.h.b16 %v3675
        %v3820 = vunpack.c.l.b16 %v3676
        %v3821 = vunpack.c.h.b16 %v3676
        %v3822 = vunpack.c.l.b16 %v3677
        %v3823 = vunpack.c.h.b16 %v3677
        %v3824 = vunpack.c.l.b16 %v3678
        %v3825 = vunpack.c.h.b16 %v3678
        %v3826 = vunpack.c.l.b16 %v3679
        %v3827 = vunpack.c.h.b16 %v3679
        %v3828 = vunpack.c.l.b16 %v3680
        %v3829 = vunpack.c.h.b16 %v3680
        %v3830 = vunpack.c.l.b16 %v3681
        %v3831 = vunpack.c.h.b16 %v3681
        %v3832 = vunpack.c.l.b16 %v3682
        %v3833 = vunpack.c.h.b16 %v3682
        %v3834 = vunpack.c.l.b16 %v3683
        %v3835 = vunpack.c.h.b16 %v3683
        %v3836 = vunpack.c.l.b16 %v3684
        %v3837 = vunpack.c.h.b16 %v3684
        %v3838 = vunpack.c.l.b16 %v3685
        %v3839 = vunpack.c.h.b16 %v3685
        %v3840 = vunpack.c.l.b16 %v3686
        %v3841 = vunpack.c.h.b16 %v3686
        %v3842 = vunpack.c.l.b16 %v3687
        %v3843 = vunpack.c.h.b16 %v3687
        %v3844 = vunpack.c.l.b16 %v3688
        %v3845 = vunpack.c.h.b16 %v3688
        %v3846 = vunpack.c.l.b16 %v3689
        %v3847 = vunpack.c.h.b16 %v3689
        %v3848 = vunpack.c.l.b16 %v3690
        %v3849 = vunpack.c.h.b16 %v3690
        %v3850 = vunpack.c.l.b16 %v3691
        %v3851 = vunpack.c.h.b16 %v3691
        %v3852 = vunpack.c.l.b16 %v3692
        %v3853 = vunpack.c.h.b16 %v3692
        %v3854 = vunpack.c.l.b16 %v3693
        %v3855 = vunpack.c.h.b16 %v3693
        %v3856 = vunpack.c.l.b16 %v3694
        %v3857 = vunpack.c.h.b16 %v3694
        %v3858 = vunpack.c.l.b16 %v3695
        %v3859 = vunpack.c.h.b16 %v3695
        %v3860 = vunpack.c.l.b16 %v3696
        %v3861 = vunpack.c.h.b16 %v3696
        %v3862 = vunpack.c.l.b16 %v3697
        %v3863 = vunpack.c.h.b16 %v3697
        %v3864 = vunpack.c.l.b16 %v3698
        %v3865 = vunpack.c.h.b16 %v3698
        %v3866 = vunpack.c.l.b16 %v3699
        %v3867 = vunpack.c.h.b16 %v3699
        %v3868 = vunpack.c.l.b16 %v3700
        %v3869 = vunpack.c.h.b16 %v3700
        %v3870 = vunpack.c.l.b16 %v3701
        %v3871 = vunpack.c.h.b16 %v3701
        %v3872 = vunpack.c.l.b16 %v3702
        %v3873 = vunpack.c.h.b16 %v3702
        %v3874 = vunpack.c.l.b16 %v3703
        %v3875 = vunpack.c.h.b16 %v3703
        %v3876 = vunpack.c.l.b16 %v3704
        %v3877 = vunpack.c.h.b16 %v3704
        %v3878 = vunpack.c.l.b16 %v3705
        %v3879 = vunpack.c.h.b16 %v3705
        %v3880 = vunpack.c.l.b16 %v3706
        %v3881 = vunpack.c.h.b16 %v3706
        %v3882 = vunpack.c.l.b16 %v3707
        %v3883 = vunpack.c.h.b16 %v3707
        %v3884 = vunpack.c.l.b16 %v3708
        %v3885 = vunpack.c.h.b16 %v3708
        %v3886 = vunpack.c.l.b16 %v3709
        %v3887 = vunpack.c.h.b16 %v3709
        %v3888 = vunpack.c.l.b16 %v3710
        %v3889 = vunpack.c.h.b16 %v3710
        %v3890 = vunpack.c.l.b16 %v3711
        %v3891 = vunpack.c.h.b16 %v3711
        %v3892 = vunpack.c.l.b16 %v3712
        %v3893 = vunpack.c.h.b16 %v3712
        %v3894 = vunpack.c.l.b16 %v3713
        %v3895 = vunpack.c.h.b16 %v3713
        %v3896 = vunpack.c.l.b16 %v3714
        %v3897 = vunpack.c.h.b16 %v3714
        %v3898 = vunpack.c.l.b16 %v3715
        %v3899 = vunpack.c.h.b16 %v3715
        %v3900 = vunpack.c.l.b16 %v3716
        %v3901 = vunpack.c.h.b16 %v3716
        %v3902 = vunpack.c.l.b16 %v3717
        %v3903 = vunpack.c.h.b16 %v3717
        %v3904 = vunpack.c.l.b16 %v3718
        %v3905 = vunpack.c.h.b16 %v3718
        %v3906 = vunpack.c.l.b16 %v3719
        %v3907 = vunpack.c.h.b16 %v3719
        %v3908 = vunpack.c.l.b16 %v3720
        %v3909 = vunpack.c.h.b16 %v3720
        %v3910 = vunpack.c.l.b16 %v3721
        %v3911 = vunpack.c.h.b16 %v3721
        %v3912 = vunpack.c.l.b16 %v3722
        %v3913 = vunpack.c.h.b16 %v3722
        %v3914 = vunpack.c.l.b16 %v3723
        %v3915 = vunpack.c.h.b16 %v3723
        %v3916 = vpack.c.b16 %v3790, %v3788
        %v3917 = vpack.c.b16 %v3791, %v3789
        %v3918 = vpack.c.b16 %v3794, %v3792
        %v3919 = vpack.c.b16 %v3795, %v3793
        %v3920 = vpack.c.b16 %v3798, %v3796
        %v3921 = vpack.c.b16 %v3799, %v3797
        %v3922 = vpack.c.b16 %v3802, %v3800
        %v3923 = vpack.c.b16 %v3803, %v3801
        %v3924 = vpack.c.b16 %v3806, %v3804
        %v3925 = vpack.c.b16 %v3807, %v3805
        %v3926 = vpack.c.b16 %v3810, %v3808
        %v3927 = vpack.c.b16 %v3811, %v3809
        %v3928 = vpack.c.b16 %v3814, %v3812
        %v3929 = vpack.c.b16 %v3815, %v3813
        %v3930 = vpack.c.b16 %v3818, %v3816
        %v3931 = vpack.c.b16 %v3819, %v3817
        %v3932 = vpack.c.b16 %v3822, %v3820
        %v3933 = vpack.c.b16 %v3823, %v3821
        %v3934 = vpack.c.b16 %v3826, %v3824
        %v3935 = vpack.c.b16 %v3827, %v3825
        %v3936 = vpack.c.b16 %v3830, %v3828
        %v3937 = vpack.c.b16 %v3831, %v3829
        %v3938 = vpack.c.b16 %v3834, %v3832
        %v3939 = vpack.c.b16 %v3835, %v3833
        %v3940 = vpack.c.b16 %v3838, %v3836
        %v3941 = vpack.c.b16 %v3839, %v3837
        %v3942 = vpack.c.b16 %v3842, %v3840
        %v3943 = vpack.c.b16 %v3843, %v3841
        %v3944 = vpack.c.b16 %v3846, %v3844
        %v3945 = vpack.c.b16 %v3847, %v3845
        %v3946 = vpack.c.b16 %v3850, %v3848
        %v3947 = vpack.c.b16 %v3851, %v3849
        %v3948 = vpack.c.b16 %v3854, %v3852
        %v3949 = vpack.c.b16 %v3855, %v3853
        %v3950 = vpack.c.b16 %v3858, %v3856
        %v3951 = vpack.c.b16 %v3859, %v3857
        %v3952 = vpack.c.b16 %v3862, %v3860
        %v3953 = vpack.c.b16 %v3863, %v3861
        %v3954 = vpack.c.b16 %v3866, %v3864
        %v3955 = vpack.c.b16 %v3867, %v3865
        %v3956 = vpack.c.b16 %v3870, %v3868
        %v3957 = vpack.c.b16 %v3871, %v3869
        %v3958 = vpack.c.b16 %v3874, %v3872
        %v3959 = vpack.c.b16 %v3875, %v3873
        %v3960 = vpack.c.b16 %v3878, %v3876
        %v3961 = vpack.c.b16 %v3879, %v3877
        %v3962 = vpack.c.b16 %v3882, %v3880
        %v3963 = vpack.c.b16 %v3883, %v3881
        %v3964 = vpack.c.b16 %v3886, %v3884
        %v3965 = vpack.c.b16 %v3887, %v3885
        %v3966 = vpack.c.b16 %v3890, %v3888
        %v3967 = vpack.c.b16 %v3891, %v3889
        %v3968 = vpack.c.b16 %v3894, %v3892
        %v3969 = vpack.c.b16 %v3895, %v3893
        %v3970 = vpack.c.b16 %v3898, %v3896
        %v3971 = vpack.c.b16 %v3899, %v3897
        %v3972 = vpack.c.b16 %v3902, %v3900
        %v3973 = vpack.c.b16 %v3903, %v3901
        %v3974 = vpack.c.b16 %v3906, %v3904
        %v3975 = vpack.c.b16 %v3907, %v3905
        %v3976 = vpack.c.b16 %v3910, %v3908
        %v3977 = vpack.c.b16 %v3911, %v3909
        %v3978 = vpack.c.b16 %v3914, %v3912
        %v3979 = vpack.c.b16 %v3915, %v3913
        %4044 = vmatpush.bf16.msra.mxu0 %v3930
        %4045 = vmatpush.bf16.msra.mxu0 %v3928
        %4046 = vmatpush.bf16.msra.mxu0 %v3926
        %4047 = vmatpush.bf16.msra.mxu0 %v3924
        %4048 = vmatpush.bf16.msra.mxu0 %v3922
        %4049 = vmatpush.bf16.msra.mxu0 %v3920
        %4050 = vmatpush.bf16.msra.mxu0 %v3918
        %4051 = vmatpush.bf16.msra.mxu0 %v3916
        %4052 = vmatmul.bf16.gmra.mxu0 %v3656
        %v4053 = vpop.f32.mrf.mxu0
        %v4054 = vadd.f32 0.0, %v4053
        %v4055 = vpop.f32.mrf.mxu0
        %4056 = vdwg.mxu0
        %4057 = vmatpush.bf16.msra.mxu0 %v3946
        %4058 = vmatpush.bf16.msra.mxu0 %v3944
        %4059 = vmatpush.bf16.msra.mxu0 %v3942
        %4060 = vmatpush.bf16.msra.mxu0 %v3940
        %4061 = vmatpush.bf16.msra.mxu0 %v3938
        %4062 = vmatpush.bf16.msra.mxu0 %v3936
        %4063 = vmatpush.bf16.msra.mxu0 %v3934
        %4064 = vmatpush.bf16.msra.mxu0 %v3932
        %4065 = vmatmul.bf16.gmra.mxu0 %v3657
        %v4066 = vpop.f32.mrf.mxu0
        %v4067 = vadd.f32 %v4054, %v4066
        %v4068 = vpop.f32.mrf.mxu0
        %4069 = vdwg.mxu0
        %4070 = vmatpush.bf16.msra.mxu0 %v3962
        %4071 = vmatpush.bf16.msra.mxu0 %v3960
        %4072 = vmatpush.bf16.msra.mxu0 %v3958
        %4073 = vmatpush.bf16.msra.mxu0 %v3956
        %4074 = vmatpush.bf16.msra.mxu0 %v3954
        %4075 = vmatpush.bf16.msra.mxu0 %v3952
        %4076 = vmatpush.bf16.msra.mxu0 %v3950
        %4077 = vmatpush.bf16.msra.mxu0 %v3948
        %4078 = vmatmul.bf16.gmra.mxu0 %v3658
        %v4079 = vpop.f32.mrf.mxu0
        %v4080 = vadd.f32 %v4067, %v4079
        %v4081 = vpop.f32.mrf.mxu0
        %4082 = vdwg.mxu0
        %4083 = vmatpush.bf16.msra.mxu0 %v3978
        %4084 = vmatpush.bf16.msra.mxu0 %v3976
        %4085 = vmatpush.bf16.msra.mxu0 %v3974
        %4086 = vmatpush.bf16.msra.mxu0 %v3972
        %4087 = vmatpush.bf16.msra.mxu0 %v3970
        %4088 = vmatpush.bf16.msra.mxu0 %v3968
        %4089 = vmatpush.bf16.msra.mxu0 %v3966
        %4090 = vmatpush.bf16.msra.mxu0 %v3964
        %4091 = vmatmul.bf16.gmra.mxu0 %v3659
        %v4092 = vpop.f32.mrf.mxu0
        %v4093 = vadd.f32 %v4080, %v4092
        %v4094 = vpop.f32.mrf.mxu0
        %4095 = vdwg.mxu0
        %4096 = vmatpush.bf16.msra.mxu0 %v3931
        %4097 = vmatpush.bf16.msra.mxu0 %v3929
        %4098 = vmatpush.bf16.msra.mxu0 %v3927
        %4099 = vmatpush.bf16.msra.mxu0 %v3925
        %4100 = vmatpush.bf16.msra.mxu0 %v3923
        %4101 = vmatpush.bf16.msra.mxu0 %v3921
        %4102 = vmatpush.bf16.msra.mxu0 %v3919
        %4103 = vmatpush.bf16.msra.mxu0 %v3917
        %4104 = vmatmul.bf16.gmra.mxu0 %v3656
        %v4105 = vpop.f32.mrf.mxu0
        %v4106 = vadd.f32 0.0, %v4105
        %v4107 = vpop.f32.mrf.mxu0
        %4108 = vdwg.mxu0
        %4109 = vmatpush.bf16.msra.mxu0 %v3947
        %4110 = vmatpush.bf16.msra.mxu0 %v3945
        %4111 = vmatpush.bf16.msra.mxu0 %v3943
        %4112 = vmatpush.bf16.msra.mxu0 %v3941
        %4113 = vmatpush.bf16.msra.mxu0 %v3939
        %4114 = vmatpush.bf16.msra.mxu0 %v3937
        %4115 = vmatpush.bf16.msra.mxu0 %v3935
        %4116 = vmatpush.bf16.msra.mxu0 %v3933
        %4117 = vmatmul.bf16.gmra.mxu0 %v3657
        %v4118 = vpop.f32.mrf.mxu0
        %v4119 = vadd.f32 %v4106, %v4118
        %v4120 = vpop.f32.mrf.mxu0
        %4121 = vdwg.mxu0
        %4122 = vmatpush.bf16.msra.mxu0 %v3963
        %4123 = vmatpush.bf16.msra.mxu0 %v3961
        %4124 = vmatpush.bf16.msra.mxu0 %v3959
        %4125 = vmatpush.bf16.msra.mxu0 %v3957
        %4126 = vmatpush.bf16.msra.mxu0 %v3955
        %4127 = vmatpush.bf16.msra.mxu0 %v3953
        %4128 = vmatpush.bf16.msra.mxu0 %v3951
        %4129 = vmatpush.bf16.msra.mxu0 %v3949
        %4130 = vmatmul.bf16.gmra.mxu0 %v3658
        %v4131 = vpop.f32.mrf.mxu0
        %v4132 = vadd.f32 %v4119, %v4131
        %v4133 = vpop.f32.mrf.mxu0
        %4134 = vdwg.mxu0
        %4135 = vmatpush.bf16.msra.mxu0 %v3979
        %4136 = vmatpush.bf16.msra.mxu0 %v3977
        %4137 = vmatpush.bf16.msra.mxu0 %v3975
        %4138 = vmatpush.bf16.msra.mxu0 %v3973
        %4139 = vmatpush.bf16.msra.mxu0 %v3971
        %4140 = vmatpush.bf16.msra.mxu0 %v3969
        %4141 = vmatpush.bf16.msra.mxu0 %v3967
        %4142 = vmatpush.bf16.msra.mxu0 %v3965
        %4143 = vmatmul.bf16.gmra.mxu0 %v3659
        %v4144 = vpop.f32.mrf.mxu0
        %v4145 = vadd.f32 %v4132, %v4144
        %v4146 = vpop.f32.mrf.mxu0
        %4147 = vdwg.mxu0
        %v4212 = vunpack.c.l.b16 %v2918
        %v4213 = vunpack.c.h.b16 %v2918
        %v4214 = vunpack.c.l.b16 %v2919
        %v4215 = vunpack.c.h.b16 %v2919
        %v4216 = vunpack.c.l.b16 %v2920
        %v4217 = vunpack.c.h.b16 %v2920
        %v4218 = vunpack.c.l.b16 %v2921
        %v4219 = vunpack.c.h.b16 %v2921
        %v4220 = vunpack.c.l.b16 %v2922
        %v4221 = vunpack.c.h.b16 %v2922
        %v4222 = vunpack.c.l.b16 %v2923
        %v4223 = vunpack.c.h.b16 %v2923
        %v4224 = vunpack.c.l.b16 %v2924
        %v4225 = vunpack.c.h.b16 %v2924
        %v4226 = vunpack.c.l.b16 %v2925
        %v4227 = vunpack.c.h.b16 %v2925
        %v4228 = vunpack.c.l.b16 %v2926
        %v4229 = vunpack.c.h.b16 %v2926
        %v4230 = vunpack.c.l.b16 %v2927
        %v4231 = vunpack.c.h.b16 %v2927
        %v4232 = vunpack.c.l.b16 %v2928
        %v4233 = vunpack.c.h.b16 %v2928
        %v4234 = vunpack.c.l.b16 %v2929
        %v4235 = vunpack.c.h.b16 %v2929
        %v4236 = vunpack.c.l.b16 %v2930
        %v4237 = vunpack.c.h.b16 %v2930
        %v4238 = vunpack.c.l.b16 %v2931
        %v4239 = vunpack.c.h.b16 %v2931
        %v4240 = vunpack.c.l.b16 %v2932
        %v4241 = vunpack.c.h.b16 %v2932
        %v4242 = vunpack.c.l.b16 %v2933
        %v4243 = vunpack.c.h.b16 %v2933
        %v4244 = vunpack.c.l.b16 %v2934
        %v4245 = vunpack.c.h.b16 %v2934
        %v4246 = vunpack.c.l.b16 %v2935
        %v4247 = vunpack.c.h.b16 %v2935
        %v4248 = vunpack.c.l.b16 %v2936
        %v4249 = vunpack.c.h.b16 %v2936
        %v4250 = vunpack.c.l.b16 %v2937
        %v4251 = vunpack.c.h.b16 %v2937
        %v4252 = vunpack.c.l.b16 %v2938
        %v4253 = vunpack.c.h.b16 %v2938
        %v4254 = vunpack.c.l.b16 %v2939
        %v4255 = vunpack.c.h.b16 %v2939
        %v4256 = vunpack.c.l.b16 %v2940
        %v4257 = vunpack.c.h.b16 %v2940
        %v4258 = vunpack.c.l.b16 %v2941
        %v4259 = vunpack.c.h.b16 %v2941
        %v4260 = vunpack.c.l.b16 %v2942
        %v4261 = vunpack.c.h.b16 %v2942
        %v4262 = vunpack.c.l.b16 %v2943
        %v4263 = vunpack.c.h.b16 %v2943
        %v4264 = vunpack.c.l.b16 %v2944
        %v4265 = vunpack.c.h.b16 %v2944
        %v4266 = vunpack.c.l.b16 %v2945
        %v4267 = vunpack.c.h.b16 %v2945
        %v4268 = vunpack.c.l.b16 %v2946
        %v4269 = vunpack.c.h.b16 %v2946
        %v4270 = vunpack.c.l.b16 %v2947
        %v4271 = vunpack.c.h.b16 %v2947
        %v4272 = vunpack.c.l.b16 %v2948
        %v4273 = vunpack.c.h.b16 %v2948
        %v4274 = vunpack.c.l.b16 %v2949
        %v4275 = vunpack.c.h.b16 %v2949
        %v4276 = vunpack.c.l.b16 %v2950
        %v4277 = vunpack.c.h.b16 %v2950
        %v4278 = vunpack.c.l.b16 %v2951
        %v4279 = vunpack.c.h.b16 %v2951
        %v4280 = vunpack.c.l.b16 %v2952
        %v4281 = vunpack.c.h.b16 %v2952
        %v4282 = vunpack.c.l.b16 %v2953
        %v4283 = vunpack.c.h.b16 %v2953
        %v4284 = vunpack.c.l.b16 %v2954
        %v4285 = vunpack.c.h.b16 %v2954
        %v4286 = vunpack.c.l.b16 %v2955
        %v4287 = vunpack.c.h.b16 %v2955
        %v4288 = vunpack.c.l.b16 %v2956
        %v4289 = vunpack.c.h.b16 %v2956
        %v4290 = vunpack.c.l.b16 %v2957
        %v4291 = vunpack.c.h.b16 %v2957
        %v4292 = vunpack.c.l.b16 %v2958
        %v4293 = vunpack.c.h.b16 %v2958
        %v4294 = vunpack.c.l.b16 %v2959
        %v4295 = vunpack.c.h.b16 %v2959
        %v4296 = vunpack.c.l.b16 %v2960
        %v4297 = vunpack.c.h.b16 %v2960
        %v4298 = vunpack.c.l.b16 %v2961
        %v4299 = vunpack.c.h.b16 %v2961
        %v4300 = vunpack.c.l.b16 %v2962
        %v4301 = vunpack.c.h.b16 %v2962
        %v4302 = vunpack.c.l.b16 %v2963
        %v4303 = vunpack.c.h.b16 %v2963
        %v4304 = vunpack.c.l.b16 %v2964
        %v4305 = vunpack.c.h.b16 %v2964
        %v4306 = vunpack.c.l.b16 %v2965
        %v4307 = vunpack.c.h.b16 %v2965
        %v4308 = vunpack.c.l.b16 %v2966
        %v4309 = vunpack.c.h.b16 %v2966
        %v4310 = vunpack.c.l.b16 %v2967
        %v4311 = vunpack.c.h.b16 %v2967
        %v4312 = vunpack.c.l.b16 %v2968
        %v4313 = vunpack.c.h.b16 %v2968
        %v4314 = vunpack.c.l.b16 %v2969
        %v4315 = vunpack.c.h.b16 %v2969
        %v4316 = vunpack.c.l.b16 %v2970
        %v4317 = vunpack.c.h.b16 %v2970
        %v4318 = vunpack.c.l.b16 %v2971
        %v4319 = vunpack.c.h.b16 %v2971
        %v4320 = vunpack.c.l.b16 %v2972
        %v4321 = vunpack.c.h.b16 %v2972
        %v4322 = vunpack.c.l.b16 %v2973
        %v4323 = vunpack.c.h.b16 %v2973
        %v4324 = vunpack.c.l.b16 %v2974
        %v4325 = vunpack.c.h.b16 %v2974
        %v4326 = vunpack.c.l.b16 %v2975
        %v4327 = vunpack.c.h.b16 %v2975
        %v4328 = vunpack.c.l.b16 %v2976
        %v4329 = vunpack.c.h.b16 %v2976
        %v4330 = vunpack.c.l.b16 %v2977
        %v4331 = vunpack.c.h.b16 %v2977
        %v4332 = vunpack.c.l.b16 %v2978
        %v4333 = vunpack.c.h.b16 %v2978
        %v4334 = vunpack.c.l.b16 %v2979
        %v4335 = vunpack.c.h.b16 %v2979
        %v4336 = vunpack.c.l.b16 %v2980
        %v4337 = vunpack.c.h.b16 %v2980
        %v4338 = vunpack.c.l.b16 %v2981
        %v4339 = vunpack.c.h.b16 %v2981
        %v4340 = vpack.c.b16 %v4214, %v4212
        %v4341 = vpack.c.b16 %v4215, %v4213
        %v4342 = vpack.c.b16 %v4218, %v4216
        %v4343 = vpack.c.b16 %v4219, %v4217
        %v4344 = vpack.c.b16 %v4222, %v4220
        %v4345 = vpack.c.b16 %v4223, %v4221
        %v4346 = vpack.c.b16 %v4226, %v4224
        %v4347 = vpack.c.b16 %v4227, %v4225
        %v4348 = vpack.c.b16 %v4230, %v4228
        %v4349 = vpack.c.b16 %v4231, %v4229
        %v4350 = vpack.c.b16 %v4234, %v4232
        %v4351 = vpack.c.b16 %v4235, %v4233
        %v4352 = vpack.c.b16 %v4238, %v4236
        %v4353 = vpack.c.b16 %v4239, %v4237
        %v4354 = vpack.c.b16 %v4242, %v4240
        %v4355 = vpack.c.b16 %v4243, %v4241
        %v4356 = vpack.c.b16 %v4246, %v4244
        %v4357 = vpack.c.b16 %v4247, %v4245
        %v4358 = vpack.c.b16 %v4250, %v4248
        %v4359 = vpack.c.b16 %v4251, %v4249
        %v4360 = vpack.c.b16 %v4254, %v4252
        %v4361 = vpack.c.b16 %v4255, %v4253
        %v4362 = vpack.c.b16 %v4258, %v4256
        %v4363 = vpack.c.b16 %v4259, %v4257
        %v4364 = vpack.c.b16 %v4262, %v4260
        %v4365 = vpack.c.b16 %v4263, %v4261
        %v4366 = vpack.c.b16 %v4266, %v4264
        %v4367 = vpack.c.b16 %v4267, %v4265
        %v4368 = vpack.c.b16 %v4270, %v4268
        %v4369 = vpack.c.b16 %v4271, %v4269
        %v4370 = vpack.c.b16 %v4274, %v4272
        %v4371 = vpack.c.b16 %v4275, %v4273
        %v4372 = vpack.c.b16 %v4278, %v4276
        %v4373 = vpack.c.b16 %v4279, %v4277
        %v4374 = vpack.c.b16 %v4282, %v4280
        %v4375 = vpack.c.b16 %v4283, %v4281
        %v4376 = vpack.c.b16 %v4286, %v4284
        %v4377 = vpack.c.b16 %v4287, %v4285
        %v4378 = vpack.c.b16 %v4290, %v4288
        %v4379 = vpack.c.b16 %v4291, %v4289
        %v4380 = vpack.c.b16 %v4294, %v4292
        %v4381 = vpack.c.b16 %v4295, %v4293
        %v4382 = vpack.c.b16 %v4298, %v4296
        %v4383 = vpack.c.b16 %v4299, %v4297
        %v4384 = vpack.c.b16 %v4302, %v4300
        %v4385 = vpack.c.b16 %v4303, %v4301
        %v4386 = vpack.c.b16 %v4306, %v4304
        %v4387 = vpack.c.b16 %v4307, %v4305
        %v4388 = vpack.c.b16 %v4310, %v4308
        %v4389 = vpack.c.b16 %v4311, %v4309
        %v4390 = vpack.c.b16 %v4314, %v4312
        %v4391 = vpack.c.b16 %v4315, %v4313
        %v4392 = vpack.c.b16 %v4318, %v4316
        %v4393 = vpack.c.b16 %v4319, %v4317
        %v4394 = vpack.c.b16 %v4322, %v4320
        %v4395 = vpack.c.b16 %v4323, %v4321
        %v4396 = vpack.c.b16 %v4326, %v4324
        %v4397 = vpack.c.b16 %v4327, %v4325
        %v4398 = vpack.c.b16 %v4330, %v4328
        %v4399 = vpack.c.b16 %v4331, %v4329
        %v4400 = vpack.c.b16 %v4334, %v4332
        %v4401 = vpack.c.b16 %v4335, %v4333
        %v4402 = vpack.c.b16 %v4338, %v4336
        %v4403 = vpack.c.b16 %v4339, %v4337
        %4468 = vmatpush.bf16.msra.mxu0 %v4354
        %4469 = vmatpush.bf16.msra.mxu0 %v4352
        %4470 = vmatpush.bf16.msra.mxu0 %v4350
        %4471 = vmatpush.bf16.msra.mxu0 %v4348
        %4472 = vmatpush.bf16.msra.mxu0 %v4346
        %4473 = vmatpush.bf16.msra.mxu0 %v4344
        %4474 = vmatpush.bf16.msra.mxu0 %v4342
        %4475 = vmatpush.bf16.msra.mxu0 %v4340
        %4476 = vmatmul.bf16.gmra.mxu0 %v2914
        %v4477 = vpop.f32.mrf.mxu0
        %v4478 = vadd.f32 %v4093, %v4477
        %v4479 = vpop.f32.mrf.mxu0
        %4480 = vdwg.mxu0
        %4481 = vmatpush.bf16.msra.mxu0 %v4370
        %4482 = vmatpush.bf16.msra.mxu0 %v4368
        %4483 = vmatpush.bf16.msra.mxu0 %v4366
        %4484 = vmatpush.bf16.msra.mxu0 %v4364
        %4485 = vmatpush.bf16.msra.mxu0 %v4362
        %4486 = vmatpush.bf16.msra.mxu0 %v4360
        %4487 = vmatpush.bf16.msra.mxu0 %v4358
        %4488 = vmatpush.bf16.msra.mxu0 %v4356
        %4489 = vmatmul.bf16.gmra.mxu0 %v2915
        %v4490 = vpop.f32.mrf.mxu0
        %v4491 = vadd.f32 %v4478, %v4490
        %v4492 = vpop.f32.mrf.mxu0
        %4493 = vdwg.mxu0
        %4494 = vmatpush.bf16.msra.mxu0 %v4386
        %4495 = vmatpush.bf16.msra.mxu0 %v4384
        %4496 = vmatpush.bf16.msra.mxu0 %v4382
        %4497 = vmatpush.bf16.msra.mxu0 %v4380
        %4498 = vmatpush.bf16.msra.mxu0 %v4378
        %4499 = vmatpush.bf16.msra.mxu0 %v4376
        %4500 = vmatpush.bf16.msra.mxu0 %v4374
        %4501 = vmatpush.bf16.msra.mxu0 %v4372
        %4502 = vmatmul.bf16.gmra.mxu0 %v2916
        %v4503 = vpop.f32.mrf.mxu0
        %v4504 = vadd.f32 %v4491, %v4503
        %v4505 = vpop.f32.mrf.mxu0
        %4506 = vdwg.mxu0
        %4507 = vmatpush.bf16.msra.mxu0 %v4402
        %4508 = vmatpush.bf16.msra.mxu0 %v4400
        %4509 = vmatpush.bf16.msra.mxu0 %v4398
        %4510 = vmatpush.bf16.msra.mxu0 %v4396
        %4511 = vmatpush.bf16.msra.mxu0 %v4394
        %4512 = vmatpush.bf16.msra.mxu0 %v4392
        %4513 = vmatpush.bf16.msra.mxu0 %v4390
        %4514 = vmatpush.bf16.msra.mxu0 %v4388
        %4515 = vmatmul.bf16.gmra.mxu0 %v2917
        %v4516 = vpop.f32.mrf.mxu0
        %v4517 = vadd.f32 %v4504, %v4516
        %v4518 = vpop.f32.mrf.mxu0
        %4519 = vdwg.mxu0
        %4520 = vmatpush.bf16.msra.mxu0 %v4355
        %4521 = vmatpush.bf16.msra.mxu0 %v4353
        %4522 = vmatpush.bf16.msra.mxu0 %v4351
        %4523 = vmatpush.bf16.msra.mxu0 %v4349
        %4524 = vmatpush.bf16.msra.mxu0 %v4347
        %4525 = vmatpush.bf16.msra.mxu0 %v4345
        %4526 = vmatpush.bf16.msra.mxu0 %v4343
        %4527 = vmatpush.bf16.msra.mxu0 %v4341
        %4528 = vmatmul.bf16.gmra.mxu0 %v2914
        %v4529 = vpop.f32.mrf.mxu0
        %v4530 = vadd.f32 %v4145, %v4529
        %v4531 = vpop.f32.mrf.mxu0
        %4532 = vdwg.mxu0
        %4533 = vmatpush.bf16.msra.mxu0 %v4371
        %4534 = vmatpush.bf16.msra.mxu0 %v4369
        %4535 = vmatpush.bf16.msra.mxu0 %v4367
        %4536 = vmatpush.bf16.msra.mxu0 %v4365
        %4537 = vmatpush.bf16.msra.mxu0 %v4363
        %4538 = vmatpush.bf16.msra.mxu0 %v4361
        %4539 = vmatpush.bf16.msra.mxu0 %v4359
        %4540 = vmatpush.bf16.msra.mxu0 %v4357
        %4541 = vmatmul.bf16.gmra.mxu0 %v2915
        %v4542 = vpop.f32.mrf.mxu0
        %v4543 = vadd.f32 %v4530, %v4542
        %v4544 = vpop.f32.mrf.mxu0
        %4545 = vdwg.mxu0
        %4546 = vmatpush.bf16.msra.mxu0 %v4387
        %4547 = vmatpush.bf16.msra.mxu0 %v4385
        %4548 = vmatpush.bf16.msra.mxu0 %v4383
        %4549 = vmatpush.bf16.msra.mxu0 %v4381
        %4550 = vmatpush.bf16.msra.mxu0 %v4379
        %4551 = vmatpush.bf16.msra.mxu0 %v4377
        %4552 = vmatpush.bf16.msra.mxu0 %v4375
        %4553 = vmatpush.bf16.msra.mxu0 %v4373
        %4554 = vmatmul.bf16.gmra.mxu0 %v2916
        %v4555 = vpop.f32.mrf.mxu0
        %v4556 = vadd.f32 %v4543, %v4555
        %v4557 = vpop.f32.mrf.mxu0
        %4558 = vdwg.mxu0
        %4559 = vmatpush.bf16.msra.mxu0 %v4403
        %4560 = vmatpush.bf16.msra.mxu0 %v4401
        %4561 = vmatpush.bf16.msra.mxu0 %v4399
        %4562 = vmatpush.bf16.msra.mxu0 %v4397
        %4563 = vmatpush.bf16.msra.mxu0 %v4395
        %4564 = vmatpush.bf16.msra.mxu0 %v4393
        %4565 = vmatpush.bf16.msra.mxu0 %v4391
        %4566 = vmatpush.bf16.msra.mxu0 %v4389
        %4567 = vmatmul.bf16.gmra.mxu0 %v2917
        %v4568 = vpop.f32.mrf.mxu0
        %v4569 = vadd.f32 %v4556, %v4568
        %v4570 = vpop.f32.mrf.mxu0
        %4571 = vdwg.mxu0
        %v4572 = vadd.f32 %v2195, %v4517
        %v4573 = vadd.f32 %v2196, %v4569
        %v4574 = vld [vmem:[%s17] sm:$0x3]
        %v4576 = vperm.slane %v4574, 0
        %v4577 = vperm.slane %v4574, 1
        %v4580 = vadd.f32 %v4572, %v4576
        %v4581 = vadd.f32 %v4573, %v4577
        %4582 = vst [vmem:[%s801] sm:$0xff] %v4580
        %4583 = vst [vmem:[%s801 + $0x8] sm:$0xff] %v4581
        %s4584 = sand.u32 %s439, 1
        %s4585 = scalar_lea.sflag [#allocation4], %s4584
        %s4586 = sand.u32 %s439, 1
        %s4587 = smul.addr %s4586, 16
        %s4588 = scalar_lea.vmem [#allocation23], %s4587
        // Predicated region
        $region145: #{tpu_custom_call.1} parent=91 // pred_check
          %p4589 = pneg %p449
        $region146: #{tpu_custom_call.1} parent=91 // pred_check_branch
          %4591 = sbr.rel (%p4589) target = $region148
        $region147: #{tpu_custom_call.1} parent=91 // pred_region
          %4593 = vsyncadd %s4585, 0
          %s4594 = smul.addr %s43, 2
          %s4595 = smul.addr %s4594, 8
          %s4596 = scalar_lea.hbm %s18, %s4595
          %s4598 = sshll.u32 %s4588, 4
          %s4599 = int_to_ptr.vmem [resolvable:$true] %s4598
          %s4600 = sshll.u32 %s4596, 4
          %s4601 = int_to_ptr.hbm [resolvable:$true] %s4600
          %4603 = dma.vmem_to_hbm [thread:$0]  %s4599, 256, %s4601, %s4585
        $region148: #{tpu_custom_call.1} parent=91 // pred_fallthru
          _
      $region92: #{tpu_custom_call.1} parent=5 // pred_fallthru
        _
      %p4604 = scmp.le.s32.totalorder 2, %s38
      // Predicated region
      $region149: #{tpu_custom_call.1} parent=5 // pred_check
        %p4605 = pneg %p4604
      $region150: #{tpu_custom_call.1} parent=5 // pred_check_branch
        %4607 = sbr.rel (%p4605) target = $region152
      $region151: #{tpu_custom_call.1} parent=5 // pred_region
        %s4608 = ssub.s32 %s38, 2
        // Predicated region
        $region153: #{tpu_custom_call.1} parent=151 // pred_check
          %p4609 = pneg %p455
        $region154: #{tpu_custom_call.1} parent=151 // pred_check_branch
          %4611 = sbr.rel (%p4609) target = $region156
        $region155: #{tpu_custom_call.1} parent=151 // pred_region
          %s4612 = sand.u32 %s440, 1
          %s4613 = scalar_lea.sflag [#allocation4], %s4612
          %s4614 = sand.u32 %s440, 1
          %s4615 = smul.addr %s4614, 16
          %s4616 = scalar_lea.vmem [#allocation23], %s4615
          %4618 = dma.done %s4613, 256
        $region156: #{tpu_custom_call.1} parent=151 // pred_fallthru
          _
      $region152: #{tpu_custom_call.1} parent=5 // pred_fallthru
        _
    $region6: #{tpu_custom_call.1} parent=1 // loop_footer
      %s42 = sadd.s32 1, %s38
    $region7: #{tpu_custom_call.1} parent=1 // loop_footer_branch
      %37 = sbr.rel target = $region3
    $region8: #{tpu_custom_call.1} parent=1 // loop_exit
      _
    %4619 = vsyncpa [#allocation3], 1
    %s4620 = scalar_lea.sflag [#allocation3], 1
    %4621 = vsyncpa %s4620, 1
    %4622 = vsyncpa [#allocation6], 1
    %s4623 = scalar_lea.sflag [#allocation6], 1
    %4624 = vsyncpa %s4623, 1
    %4625 = vsyncpa [#allocation9], 1
    %4626 = vsyncpa [#allocation12], 1
    %4627 = vsyncpa [#allocation15], 1
    %4628 = vsyncpa [#allocation18], 1
    %4629 = vsyncpa [#allocation21], 1
    %4630 = vsyncpa [#allocation4], 1
    %s4631 = scalar_lea.sflag [#allocation4], 1
    %4632 = vsyncpa %s4631, 1

</llo_original>
